<compile_context>
chip_gen: v7x
topology: tpu7x:2x2x1
jax: 0.10.0
libtpu: 0.0.40
codegen_flags: <defaults>
</compile_context>

<pallas_src>
import functools

import jax
import jax.numpy as jnp
from jax import lax
from jax.experimental import pallas as pl
from jax.experimental.pallas import tpu as pltpu


def _kv_kernel(x_ref, wkv_ref, bkv_ref, kv_ref, ksum_ref, *,
               num_heads, head_dim, seq_len, needs_mask):
    """Accumulate per-head state kv = sum_s phi(k)^T v and k_sum = sum_s phi(k)."""
    si = pl.program_id(1)
    H, D = num_heads, head_dim
    E = H * D

    x = x_ref[...]                                                      # (ts, E) bf16
    ts = x.shape[0]

    # Fused K|V projection: one (ts, E) x (E, 2E) MXU matmul, f32 accumulation.
    kvp = jnp.dot(x, wkv_ref[...], preferred_element_type=jnp.float32) + bkv_ref[...]
    k = kvp[:, :E].reshape(ts, H, D)
    v = kvp[:, E:].reshape(ts, H, D)

    # kernel_type == 'exp': exp(z - max(z, axis=-1, keepdims=True))
    k_kern = jnp.exp(k - jnp.max(k, axis=-1, keepdims=True))

    if needs_mask:
        # Zero contributions of padded sequence rows (cheap VPU select).
        row = si * ts + lax.broadcasted_iota(jnp.int32, (ts, 1, 1), 0)
        k_kern = jnp.where(row < seq_len, k_kern, 0.0)

    # Head-batched state update.
    kv_blk = jnp.einsum('shd,she->hde', k_kern, v,
                        preferred_element_type=jnp.float32)             # (H, D, D)
    ksum_blk = jnp.sum(k_kern, axis=0)                                  # (H, D)

    @pl.when(si == 0)
    def _():
        kv_ref[...] = kv_blk
        ksum_ref[...] = ksum_blk

    @pl.when(si > 0)
    def _():
        kv_ref[...] += kv_blk
        ksum_ref[...] += ksum_blk


def _attn_out_kernel(x_ref, wq_ref, bq_ref, kv_ref, ksum_ref, wo_ref, bo_ref, o_ref, *,
                     num_heads, head_dim):
    """Q projection + head-batched linear attention + fused out-projection."""
    H, D = num_heads, head_dim

    x = x_ref[...]                                                      # (ts, E) bf16
    ts = x.shape[0]

    q = jnp.dot(x, wq_ref[...], preferred_element_type=jnp.float32) + bq_ref[...]
    q = q.reshape(ts, H, D)
    q_kern = jnp.exp(q - jnp.max(q, axis=-1, keepdims=True))            # (ts, H, D) f32

    kv = kv_ref[...]                                                    # (H, D, D) f32
    k_sum = ksum_ref[...]                                               # (H, D)    f32

    # Numerator: head-batched matmul against the accumulated state.
    num = jnp.einsum('shd,hde->she', q_kern, kv,
                     preferred_element_type=jnp.float32)                # (ts, H, D)
    # Denominator: VPU multiply + lane reduce (no padded MXU column).
    den = jnp.sum(q_kern * k_sum[None, :, :], axis=-1, keepdims=True) + 1e-6
    y = (num * pl.reciprocal(den, approx=True)).reshape(ts, H * D)      # (ts, E)

    # Fused out-projection -> lane-dense (ts, E) store.
    o_ref[...] = (jnp.dot(y.astype(jnp.bfloat16), wo_ref[...],
                          preferred_element_type=jnp.float32)
                  + bo_ref[...]).astype(o_ref.dtype)


def _round_up(x, m):
    return ((x + m - 1) // m) * m


def _vmem_budget_bytes():
    """Generation-aware scoped-VMEM limit with headroom for Mosaic internal scratch."""
    try:
        cap = pltpu.get_tpu_info().vmem_capacity_bytes
    except Exception:
        cap = 64 * 1024 * 1024           # conservative fallback: v7x per-TC physical VMEM
    return min(int(cap * 0.75), cap - 8 * 1024 * 1024)


def _choose_s_tile(S, E, vmem_limit, requested):
    """Largest multiple-of-16 S tile fitting the budget (weights stay VMEM-resident)."""
    weight_bytes = 2 * (4 * E * E) + 16 * E       # double-buffered bf16 weights + biases
    # Per sequence row: x bf16 (x2 buffers) + out f32 (x2 buffers) + ~8 f32 temporaries.
    per_row = 2 * (2 * E) + 2 * (4 * E) + 8 * (4 * E)
    avail = max(vmem_limit // 2 - weight_bytes, 16 * per_row)
    ts = min(requested, avail // per_row)
    ts = max(16, (ts // 16) * 16)
    if S <= ts:
        return _round_up(S, 16)
    return ts


def linear_attention(x, params, num_heads, s_tile=512):
    B, S, E = x.shape
    H = num_heads
    assert E % H == 0, "embed_dim must be divisible by num_heads"
    D = E // H

    vmem_limit = _vmem_budget_bytes()
    ts = _choose_s_tile(S, E, vmem_limit, s_tile)
    S_pad = _round_up(S, ts)
    n_s = S_pad // ts
    needs_mask = (S_pad != S)

    # bf16 activations read by both passes; f32 accumulation/state inside the kernels.
    xb = x.astype(jnp.bfloat16)
    if needs_mask:
        xb = jnp.pad(xb, ((0, 0), (0, S_pad - S), (0, 0)))

    # PyTorch Linear: y = x @ W.T + b.  Pre-transpose once; fuse K|V into one weight.
    wq = params["wq"].T.astype(jnp.bfloat16)
    wkv = jnp.concatenate([params["wk"].T, params["wv"].T], axis=1).astype(jnp.bfloat16)
    wo = params["wo"].T.astype(jnp.bfloat16)
    bq = params["bq"].reshape(1, E).astype(jnp.float32)
    bkv = jnp.concatenate([params["bk"], params["bv"]]).reshape(1, 2 * E).astype(jnp.float32)
    bo = params["bo"].reshape(1, E).astype(jnp.float32)

    x_spec = pl.BlockSpec((None, ts, E), lambda b, s: (b, s, 0))

    def _resident_spec(shape):
        imap = lambda b, s, _n=len(shape): (0,) * _n
        # Constant index map => block stays VMEM-resident across the whole grid.
        # For very large E, single-buffer it so two full ExE weights fit v7x's 64 MiB.
        if E >= 1024:
            try:
                return pl.BlockSpec(shape, imap, pipeline_mode=pl.Buffered(1))
            except TypeError:   # older jax without pipeline_mode on BlockSpec
                pass
        return pl.BlockSpec(shape, imap)

    kv_spec = pl.BlockSpec((None, H, D, D), lambda b, s: (b, 0, 0, 0))
    ksum_spec = pl.BlockSpec((None, H, D), lambda b, s: (b, 0, 0))

    # TODO(synk): when B == 1 on v7x (2 TensorCores/chip), split the S reduction into two
    # partial kv accumulators on a leading parallel grid axis so both cores stay busy.

    kv_cost = pl.CostEstimate(
        flops=4 * B * S_pad * E * E + 2 * B * S_pad * E * D,
        transcendentals=B * S_pad * E,
        bytes_accessed=2 * B * S_pad * E + 4 * E * E + 4 * B * (H * D * D + E))

    kv_state, k_sum = pl.pallas_call(
        functools.partial(_kv_kernel, num_heads=H, head_dim=D,
                          seq_len=S, needs_mask=needs_mask),
        out_shape=(jax.ShapeDtypeStruct((B, H, D, D), jnp.float32),
                   jax.ShapeDtypeStruct((B, H, D), jnp.float32)),
        grid=(B, n_s),
        in_specs=[x_spec, _resident_spec((E, 2 * E)), _resident_spec((1, 2 * E))],
        out_specs=(kv_spec, ksum_spec),
        compiler_params=pltpu.CompilerParams(
            dimension_semantics=("parallel", "arbitrary"),
            vmem_limit_bytes=vmem_limit),
        cost_estimate=kv_cost,
    )(xb, wkv, bkv)

    attn_cost = pl.CostEstimate(
        flops=4 * B * S_pad * E * E + 2 * B * S_pad * E * D,
        transcendentals=B * S_pad * (E + H),
        bytes_accessed=6 * B * S_pad * E + 4 * E * E + 4 * B * (H * D * D + E))

    out = pl.pallas_call(
        functools.partial(_attn_out_kernel, num_heads=H, head_dim=D),
        out_shape=jax.ShapeDtypeStruct((B, S_pad, E), jnp.float32),
        grid=(B, n_s),
        in_specs=[x_spec, _resident_spec((E, E)), _resident_spec((1, E)),
                  kv_spec, ksum_spec, _resident_spec((E, E)), _resident_spec((1, E))],
        out_specs=pl.BlockSpec((None, ts, E), lambda b, s: (b, s, 0)),
        compiler_params=pltpu.CompilerParams(
            dimension_semantics=("parallel", "parallel"),
            vmem_limit_bytes=vmem_limit),
        cost_estimate=attn_cost,
    )(xb, wq, bq, kv_state, k_sum, wo, bo)

    if needs_mask:
        out = out[:, :S, :]
    return out


def reference(x, params, num_heads):
    """Pure-JAX (f32) re-implementation of the PyTorch forward (for verification)."""
    B, S, E = x.shape
    H = num_heads
    D = E // H
    q = x @ params["wq"].T + params["bq"]
    k = x @ params["wk"].T + params["bk"]
    v = x @ params["wv"].T + params["bv"]

    def split(t):
        return jnp.transpose(t.reshape(B, S, H, D), (0, 2, 1, 3))

    q, k, v = split(q), split(k), split(v)
    q_kern = jnp.exp(q - jnp.max(q, axis=-1, keepdims=True))
    k_kern = jnp.exp(k - jnp.max(k, axis=-1, keepdims=True))
    kv = jnp.einsum("bhsd,bhse->bhde", k_kern, v)
    denom = jnp.einsum("bhqd,bhsd->bhq", q_kern, k_kern) + 1e-6
    y = jnp.einsum("bhqd,bhde->bhqe", q_kern, kv) / denom[..., None]
    y = jnp.transpose(y, (0, 2, 1, 3)).reshape(B, S, E)
    return y @ params["wo"].T + params["bo"]


if __name__ == "__main__":
    B, S, E, H = 2, 64, 32, 4

    key = jax.random.PRNGKey(0)
    ks = jax.random.split(key, 9)
    scale = 1.0 / jnp.sqrt(jnp.float32(E))
    x = jax.random.normal(ks[0], (B, S, E), jnp.float32)
    params = {
        "wq": jax.random.normal(ks[1], (E, E), jnp.float32) * scale,
        "bq": jax.random.normal(ks[2], (E,), jnp.float32) * scale,
        "wk": jax.random.normal(ks[3], (E, E), jnp.float32) * scale,
        "bk": jax.random.normal(ks[4], (E,), jnp.float32) * scale,
        "wv": jax.random.normal(ks[5], (E, E), jnp.float32) * scale,
        "bv": jax.random.normal(ks[6], (E,), jnp.float32) * scale,
        "wo": jax.random.normal(ks[7], (E, E), jnp.float32) * scale,
        "bo": jax.random.normal(ks[8], (E,), jnp.float32) * scale,
    }

    ref = reference(x, params, H)

    # Multi-S-block path (exercises kv accumulation across S tiles).
    out = jax.block_until_ready(linear_attention(x, params, H, s_tile=32))
    assert out.shape == (B, S, E)
    err = float(jnp.max(jnp.abs(out - ref)))
    assert jnp.allclose(out, ref, atol=3e-2, rtol=3e-2), f"mismatch vs reference (max abs err {err})"

    # Ragged-S path (S not a multiple of the tile -> padded + masked kv accumulation).
    S2 = 56
    x2 = x[:, :S2, :]
    ref2 = reference(x2, params, H)
    out2 = jax.block_until_ready(linear_attention(x2, params, H, s_tile=32))
    assert out2.shape == (B, S2, E)
    err2 = float(jnp.max(jnp.abs(out2 - ref2)))
    assert jnp.allclose(out2, ref2, atol=3e-2, rtol=3e-2), f"mismatch vs reference (max abs err {err2})"

    print("KERNEL_OK")
</pallas_src>

<mosaic_0001>
module attributes {stable_mosaic.version = 11 : i64} {
  func.func @_kv_kernel(%arg0: i32, %arg1: i32, %arg2: memref<1x32x32xbf16, #tpu.memory_space<vmem>>, %arg3: memref<32x64xbf16, #tpu.memory_space<vmem>>, %arg4: memref<1x64xf32, #tpu.memory_space<vmem>>, %arg5: memref<1x4x8x8xf32, #tpu.memory_space<vmem>>, %arg6: memref<1x4x8xf32, #tpu.memory_space<vmem>>) attributes {dimension_semantics = [#tpu.dimension_semantics<parallel>, #tpu.dimension_semantics<arbitrary>], iteration_bounds = array<i64: 2, 2>, scalar_prefetch = 0 : i64, scratch_operands = 0 : i64, tpu.core_type = #tpu.core_type<tc>, window_params = [{transform_indices = @transform_0, window_bounds = array<i64: 1, 32, 32>}, {pipeline_mode = #tpu.pipeline_mode<synchronous>, transform_indices = @transform_1, window_bounds = array<i64: 32, 64>}, {pipeline_mode = #tpu.pipeline_mode<synchronous>, transform_indices = @transform_2, window_bounds = array<i64: 1, 64>}, {transform_indices = @transform_3, window_bounds = array<i64: 1, 4, 8, 8>}, {transform_indices = @transform_4, window_bounds = array<i64: 1, 4, 8>}]} {
    %c0 = arith.constant 0 : index
    %c0_0 = arith.constant 0 : index
    %c0_1 = arith.constant 0 : index
    %0 = vector.load %arg2[%c0, %c0_0, %c0_1] : memref<1x32x32xbf16, #tpu.memory_space<vmem>>, vector<1x32x32xbf16>
    %1 = vector.shape_cast %0 : vector<1x32x32xbf16> to vector<32x32xbf16>
    %c0_2 = arith.constant 0 : index
    %c0_3 = arith.constant 0 : index
    %2 = vector.load %arg3[%c0_2, %c0_3] : memref<32x64xbf16, #tpu.memory_space<vmem>>, vector<32x64xbf16>
    %cst = arith.constant dense<0.000000e+00> : vector<32x64xf32>
    %3 = tpu.matmul %1, %2, %cst {dimension_numbers = #tpu.dot_dimension_numbers<[1], [0], [0], [1], [0, 0, 1, 1], [], []>} : vector<32x32xbf16>, vector<32x64xbf16>, vector<32x64xf32> -> vector<32x64xf32>
    %c0_4 = arith.constant 0 : index
    %c0_5 = arith.constant 0 : index
    %4 = vector.load %arg4[%c0_4, %c0_5] : memref<1x64xf32, #tpu.memory_space<vmem>>, vector<1x64xf32>
    %5 = vector.broadcast %4 : vector<1x64xf32> to vector<32x64xf32>
    %6 = arith.addf %3, %5 : vector<32x64xf32>
    %7 = vector.extract_strided_slice %6 {offsets = [0, 0], sizes = [32, 32], strides = [1, 1]} : vector<32x64xf32> to vector<32x32xf32>
    %8 = vector.shape_cast %7 : vector<32x32xf32> to vector<32x4x8xf32>
    %9 = vector.extract_strided_slice %6 {offsets = [0, 32], sizes = [32, 32], strides = [1, 1]} : vector<32x64xf32> to vector<32x32xf32>
    %10 = vector.shape_cast %9 : vector<32x32xf32> to vector<32x4x8xf32>
    %cst_6 = arith.constant dense<0xFF800000> : vector<32x4xf32>
    %11 = vector.multi_reduction <maximumf>, %8, %cst_6 [2] : vector<32x4x8xf32> to vector<32x4xf32>
    %12 = vector.shape_cast %11 : vector<32x4xf32> to vector<32x4x1xf32>
    %13 = vector.broadcast %12 : vector<32x4x1xf32> to vector<32x4x8xf32>
    %14 = arith.subf %8, %13 : vector<32x4x8xf32>
    %15 = math.exp %14 : vector<32x4x8xf32>
    "tpu.trace_start"() <{level = 10 : i32, message = "shd,she->hde"}> : () -> ()
    %cst_7 = arith.constant dense<0.000000e+00> : vector<4x8x8xf32>
    %16 = tpu.matmul %15, %10, %cst_7 {dimension_numbers = #tpu.dot_dimension_numbers<[0], [0], [2], [2], [0, 1, 0, 2, 1, 2], [1], [1]>} : vector<32x4x8xf32>, vector<32x4x8xf32>, vector<4x8x8xf32> -> vector<4x8x8xf32>
    "tpu.trace_stop"() : () -> ()
    %cst_8 = arith.constant dense<0.000000e+00> : vector<4x8xf32>
    %17 = vector.multi_reduction <add>, %15, %cst_8 [0] : vector<32x4x8xf32> to vector<4x8xf32>
    %c0_i32 = arith.constant 0 : i32
    %18 = arith.cmpi eq, %arg1, %c0_i32 : i32
    %19 = arith.extui %18 : i1 to i32
    %c0_i32_9 = arith.constant 0 : i32
    %20 = arith.cmpi ne, %19, %c0_i32_9 : i32
    scf.if %20 {
      %c0_12 = arith.constant 0 : index
      %c0_13 = arith.constant 0 : index
      %c0_14 = arith.constant 0 : index
      %c0_15 = arith.constant 0 : index
      %24 = vector.load %arg5[%c0_12, %c0_13, %c0_14, %c0_15] : memref<1x4x8x8xf32, #tpu.memory_space<vmem>>, vector<1x4x8x8xf32>
      %25 = vector.shape_cast %24 : vector<1x4x8x8xf32> to vector<4x8x8xf32>
      %26 = vector.shape_cast %16 : vector<4x8x8xf32> to vector<1x4x8x8xf32>
      tpu.vector_store %arg5[%c0_12, %c0_13, %c0_14, %c0_15], %26 {strides = array<i32>} : memref<1x4x8x8xf32, #tpu.memory_space<vmem>>, vector<1x4x8x8xf32>,
      %c0_16 = arith.constant 0 : index
      %c0_17 = arith.constant 0 : index
      %c0_18 = arith.constant 0 : index
      %27 = vector.load %arg6[%c0_16, %c0_17, %c0_18] : memref<1x4x8xf32, #tpu.memory_space<vmem>>, vector<1x4x8xf32>
      %28 = vector.shape_cast %27 : vector<1x4x8xf32> to vector<4x8xf32>
      %29 = vector.shape_cast %17 : vector<4x8xf32> to vector<1x4x8xf32>
      tpu.vector_store %arg6[%c0_16, %c0_17, %c0_18], %29 {strides = array<i32>} : memref<1x4x8xf32, #tpu.memory_space<vmem>>, vector<1x4x8xf32>,
    } else {
    }
    %c0_i32_10 = arith.constant 0 : i32
    %21 = arith.cmpi sgt, %arg1, %c0_i32_10 : i32
    %22 = arith.extui %21 : i1 to i32
    %c0_i32_11 = arith.constant 0 : i32
    %23 = arith.cmpi ne, %22, %c0_i32_11 : i32
    scf.if %23 {
      %c0_12 = arith.constant 0 : index
      %c0_13 = arith.constant 0 : index
      %c0_14 = arith.constant 0 : index
      %c0_15 = arith.constant 0 : index
      %24 = vector.load %arg5[%c0_12, %c0_13, %c0_14, %c0_15] : memref<1x4x8x8xf32, #tpu.memory_space<vmem>>, vector<1x4x8x8xf32>
      %25 = vector.shape_cast %24 : vector<1x4x8x8xf32> to vector<4x8x8xf32>
      %26 = arith.addf %25, %16 : vector<4x8x8xf32>
      %c0_16 = arith.constant 0 : index
      %c0_17 = arith.constant 0 : index
      %c0_18 = arith.constant 0 : index
      %c0_19 = arith.constant 0 : index
      %27 = vector.load %arg5[%c0_16, %c0_17, %c0_18, %c0_19] : memref<1x4x8x8xf32, #tpu.memory_space<vmem>>, vector<1x4x8x8xf32>
      %28 = vector.shape_cast %27 : vector<1x4x8x8xf32> to vector<4x8x8xf32>
      %29 = vector.shape_cast %26 : vector<4x8x8xf32> to vector<1x4x8x8xf32>
      tpu.vector_store %arg5[%c0_16, %c0_17, %c0_18, %c0_19], %29 {strides = array<i32>} : memref<1x4x8x8xf32, #tpu.memory_space<vmem>>, vector<1x4x8x8xf32>,
      %c0_20 = arith.constant 0 : index
      %c0_21 = arith.constant 0 : index
      %c0_22 = arith.constant 0 : index
      %30 = vector.load %arg6[%c0_20, %c0_21, %c0_22] : memref<1x4x8xf32, #tpu.memory_space<vmem>>, vector<1x4x8xf32>
      %31 = vector.shape_cast %30 : vector<1x4x8xf32> to vector<4x8xf32>
      %32 = arith.addf %31, %17 : vector<4x8xf32>
      %c0_23 = arith.constant 0 : index
      %c0_24 = arith.constant 0 : index
      %c0_25 = arith.constant 0 : index
      %33 = vector.load %arg6[%c0_23, %c0_24, %c0_25] : memref<1x4x8xf32, #tpu.memory_space<vmem>>, vector<1x4x8xf32>
      %34 = vector.shape_cast %33 : vector<1x4x8xf32> to vector<4x8xf32>
      %35 = vector.shape_cast %32 : vector<4x8xf32> to vector<1x4x8xf32>
      tpu.vector_store %arg6[%c0_23, %c0_24, %c0_25], %35 {strides = array<i32>} : memref<1x4x8xf32, #tpu.memory_space<vmem>>, vector<1x4x8xf32>,
    } else {
    }
    return
  }
  func.func @transform_0(%arg0: i32, %arg1: i32) -> (i32, i32, i32) {
    %c0_i32 = arith.constant 0 : i32
    %c0_i32_0 = arith.constant 0 : i32
    return %arg0, %arg1, %c0_i32 : i32, i32, i32
  }
  func.func @transform_1(%arg0: i32, %arg1: i32) -> (i32, i32) {
    %c0_i32 = arith.constant 0 : i32
    %c0_i32_0 = arith.constant 0 : i32
    %c0_i32_1 = arith.constant 0 : i32
    return %c0_i32, %c0_i32_0 : i32, i32
  }
  func.func @transform_2(%arg0: i32, %arg1: i32) -> (i32, i32) {
    %c0_i32 = arith.constant 0 : i32
    %c0_i32_0 = arith.constant 0 : i32
    %c0_i32_1 = arith.constant 0 : i32
    return %c0_i32, %c0_i32_0 : i32, i32
  }
  func.func @transform_3(%arg0: i32, %arg1: i32) -> (i32, i32, i32, i32) {
    %c0_i32 = arith.constant 0 : i32
    %c0_i32_0 = arith.constant 0 : i32
    %c0_i32_1 = arith.constant 0 : i32
    %c0_i32_2 = arith.constant 0 : i32
    return %arg0, %c0_i32, %c0_i32_0, %c0_i32_1 : i32, i32, i32, i32
  }
  func.func @transform_4(%arg0: i32, %arg1: i32) -> (i32, i32, i32) {
    %c0_i32 = arith.constant 0 : i32
    %c0_i32_0 = arith.constant 0 : i32
    %c0_i32_1 = arith.constant 0 : i32
    return %arg0, %c0_i32, %c0_i32_0 : i32, i32, i32
  }
}

</mosaic_0001>

<llo_original>
// kernel: tpu_custom_call.1
$region0: #{tpu_custom_call.1}
  #allocation0 [shape = 'u32[]', space=smem, size = 0x4, offset = 0x4, fixed_abs, tag = 'smem constant byte address 0x4 - core index']
  #allocation1 [shape = 'u32[144,128]{1,0:T(1,128)}', space=vmem, size = 0x12000, scoped, tag = 'internal scratch']
  %s0 = inlined_call_operand.vmem [shape: bf16[2,64,32], index: 0, kind: input, shape index: {}]
  %s1 = inlined_call_operand.vmem [shape: bf16[32,64], index: 1, kind: input, shape index: {}]
  %s2 = inlined_call_operand.vmem [shape: f32[1,64], index: 2, kind: input, shape index: {}]
  %s3 = inlined_call_operand.hbm [shape: f32[2,4,8,8], index: 3, kind: output, shape index: {0}]
  %s4 = inlined_call_operand.hbm [shape: f32[2,4,8], index: 4, kind: output, shape index: {1}]
  %5 = xla_tuple %s3, %s4
  %s6 = sld [smem:[#allocation0]]
  $region61: #{tpu_custom_call.1} parent=0
    _
  %s8 = ssub.s32 1, %s6
  %s9 = scalar_select 0, %s8, %s6
  $region1: #{tpu_custom_call.1} parent=0
    #allocation2 [shape = 'u8[32768]{0}', space=vmem, size = 0x8000, scoped, tag = 'output window, operand 0']
    #allocation3 [shape = 's32[2]{0}', space=sflag, size = 0x8, scoped, tag = 'scoped memory for tpu_custom_call.1']
    #allocation4 [shape = 'u8[4096]{0}', space=vmem, size = 0x1000, scoped, tag = 'output window, operand 1']
    #allocation5 [shape = 's32[2]{0}', space=sflag, size = 0x8, scoped, tag = 'scoped memory for tpu_custom_call.1']
    %10 = vsyncpa [#allocation3], 0
    %s11 = scalar_lea.sflag [#allocation3], 1
    %12 = vsyncpa %s11, 0
    %13 = vsyncpa [#allocation5], 0
    %s14 = scalar_lea.sflag [#allocation5], 1
    %15 = vsyncpa %s14, 0
    loop: start=0, step=1, limit=6
    $region2: #{tpu_custom_call.1} parent=1 // loop_pre_header
      _
    $region3: #{tpu_custom_call.1} parent=1 // loop_header
      %s17 = sphi 0, %s21
      %p18 = scmp.ge.s32.totalorder %s17, 6
      %s24 = sphi 0, %s36
      %s25 = sphi 0, %s32
      %s26 = sphi 0, %s24
      %s27 = sphi 0, %s25
      %s28 = sphi 0, %s26
      %s29 = sphi 0, %s27
      %s41 = sphi 0, %s43
      %s44 = sphi 0, %s41
      %s45 = sphi 0, %s44
      %s61 = sphi 0, %s45
      %s65 = sphi 0, %s65
      %s67 = sphi 0, %s65
      %s68 = sphi 0, %s67
      %s82 = sphi 0, %s68
      %s86 = sphi 0, %s86
      %s88 = sphi 0, %s86
      %s89 = sphi 0, %s88
      %s103 = sphi 0, %s89
      %s109 = sphi 0, %s111
      %s112 = sphi 0, %s109
      %s113 = sphi 0, %s112
      %s129 = sphi 0, %s113
      %s135 = sphi 0, %s137
      %s138 = sphi 0, %s135
      %s139 = sphi 0, %s138
      %s155 = sphi 0, %s139
    $region4: #{tpu_custom_call.1} parent=1 // loop_header_branch
      %20 = sbr.rel (%p18) target = $region8
    $region5: #{tpu_custom_call.1} parent=1 // loop_body
      %s22 = ssub.s32 %s17, 1
      %s23 = ssub.s32 %s17, 2
      %s30 = sadd.s32 1, %s25
      %p31 = scmp.ge.s32.totalorder %s30, 2
      %s32 = scalar_select %p31, 0, %s30
      %s33 = sadd.s32 1, %s24
      %s34 = scalar_select %p31, %s33, %s24
      %p35 = scmp.ge.s32.totalorder %s34, 2
      %s36 = scalar_select %p35, 0, %s34
      %s37 = ssub.s32 %s24, %s36
      %s38 = ssub.s32 %s25, %s32
      %s39 = sor.u32 %s37, %s38
      %p40 = scmp.eq.s32.totalorder %s39, 0
      %s42 = sadd.s32 %s41, 1
      %s43 = scalar_select %p40, %s41, %s42
      %p46 = pneg %p40
      %p47 = scmp.eq.s32.totalorder %s17, 3
      %p48 = por %p46, %p47
      %p49 = scmp.ne.s32.totalorder %s41, %s44
      %p50 = scmp.eq.s32.totalorder %s17, 0
      %p51 = por %p49, %p50
      %p52 = scmp.ne.s32.totalorder %s41, %s44
      %p53 = scmp.eq.s32.totalorder %s22, 3
      %p54 = por %p52, %p53
      %p55 = scmp.ne.s32.totalorder %s44, %s45
      %p56 = scmp.eq.s32.totalorder %s22, 0
      %p57 = por %p55, %p56
      %p58 = scmp.ne.s32.totalorder %s44, %s45
      %p59 = scmp.eq.s32.totalorder %s23, 3
      %p60 = por %p58, %p59
      %p62 = scmp.ne.s32.totalorder %s45, %s61
      %p63 = scmp.eq.s32.totalorder %s23, 0
      %p64 = por %p62, %p63
      %s66 = sadd.s32 %s65, 1
      %p69 = scmp.eq.s32.totalorder %s17, 3
      %p70 = scmp.ne.s32.totalorder %s65, %s67
      %p71 = scmp.eq.s32.totalorder %s17, 0
      %p72 = por %p70, %p71
      %p73 = scmp.ne.s32.totalorder %s65, %s67
      %p74 = scmp.eq.s32.totalorder %s22, 3
      %p75 = por %p73, %p74
      %p76 = scmp.ne.s32.totalorder %s67, %s68
      %p77 = scmp.eq.s32.totalorder %s22, 0
      %p78 = por %p76, %p77
      %p79 = scmp.ne.s32.totalorder %s67, %s68
      %p80 = scmp.eq.s32.totalorder %s23, 3
      %p81 = por %p79, %p80
      %p83 = scmp.ne.s32.totalorder %s68, %s82
      %p84 = scmp.eq.s32.totalorder %s23, 0
      %p85 = por %p83, %p84
      %s87 = sadd.s32 %s86, 1
      %p90 = scmp.eq.s32.totalorder %s17, 3
      %p91 = scmp.ne.s32.totalorder %s86, %s88
      %p92 = scmp.eq.s32.totalorder %s17, 0
      %p93 = por %p91, %p92
      %p94 = scmp.ne.s32.totalorder %s86, %s88
      %p95 = scmp.eq.s32.totalorder %s22, 3
      %p96 = por %p94, %p95
      %p97 = scmp.ne.s32.totalorder %s88, %s89
      %p98 = scmp.eq.s32.totalorder %s22, 0
      %p99 = por %p97, %p98
      %p100 = scmp.ne.s32.totalorder %s88, %s89
      %p101 = scmp.eq.s32.totalorder %s23, 3
      %p102 = por %p100, %p101
      %p104 = scmp.ne.s32.totalorder %s89, %s103
      %p105 = scmp.eq.s32.totalorder %s23, 0
      %p106 = por %p104, %p105
      %s107 = ssub.s32 %s24, %s36
      %p108 = scmp.eq.s32.totalorder %s107, 0
      %s110 = sadd.s32 %s109, 1
      %s111 = scalar_select %p108, %s109, %s110
      %p114 = pneg %p108
      %p115 = scmp.eq.s32.totalorder %s17, 3
      %p116 = por %p114, %p115
      %p117 = scmp.ne.s32.totalorder %s109, %s112
      %p118 = scmp.eq.s32.totalorder %s17, 0
      %p119 = por %p117, %p118
      %p120 = scmp.ne.s32.totalorder %s109, %s112
      %p121 = scmp.eq.s32.totalorder %s22, 3
      %p122 = por %p120, %p121
      %p123 = scmp.ne.s32.totalorder %s112, %s113
      %p124 = scmp.eq.s32.totalorder %s22, 0
      %p125 = por %p123, %p124
      %p126 = scmp.ne.s32.totalorder %s112, %s113
      %p127 = scmp.eq.s32.totalorder %s23, 3
      %p128 = por %p126, %p127
      %p130 = scmp.ne.s32.totalorder %s113, %s129
      %p131 = scmp.eq.s32.totalorder %s23, 0
      %p132 = por %p130, %p131
      %s133 = ssub.s32 %s24, %s36
      %p134 = scmp.eq.s32.totalorder %s133, 0
      %s136 = sadd.s32 %s135, 1
      %s137 = scalar_select %p134, %s135, %s136
      %p140 = pneg %p134
      %p141 = scmp.eq.s32.totalorder %s17, 3
      %p142 = por %p140, %p141
      %p143 = scmp.ne.s32.totalorder %s135, %s138
      %p144 = scmp.eq.s32.totalorder %s17, 0
      %p145 = por %p143, %p144
      %p146 = scmp.ne.s32.totalorder %s135, %s138
      %p147 = scmp.eq.s32.totalorder %s22, 3
      %p148 = por %p146, %p147
      %p149 = scmp.ne.s32.totalorder %s138, %s139
      %p150 = scmp.eq.s32.totalorder %s22, 0
      %p151 = por %p149, %p150
      %p152 = scmp.ne.s32.totalorder %s138, %s139
      %p153 = scmp.eq.s32.totalorder %s23, 3
      %p154 = por %p152, %p153
      %p156 = scmp.ne.s32.totalorder %s139, %s155
      %p157 = scmp.eq.s32.totalorder %s23, 0
      %p158 = por %p156, %p157
      %p159 = scmp.le.s32.totalorder 1, %s17
      %p160 = scmp.lt.s32.totalorder %s17, 5
      %p161 = pnand %p159, %p160
      %p162 = pneg %p161
      // Predicated region
      $region9: #{tpu_custom_call.1} parent=5 // pred_check
        _
      $region10: #{tpu_custom_call.1} parent=5 // pred_check_branch
        %164 = sbr.rel (%p161) target = $region12
      $region11: #{tpu_custom_call.1} parent=5 // pred_region
        %s165 = ssub.s32 %s17, 1
        // Predicated region
        $region13: #{tpu_custom_call.1} parent=11 // pred_check
          %p166 = pneg %p78
        $region14: #{tpu_custom_call.1} parent=11 // pred_check_branch
          %168 = sbr.rel (%p166) target = $region16
        $region15: #{tpu_custom_call.1} parent=11 // pred_region
          _
        $region16: #{tpu_custom_call.1} parent=11 // pred_fallthru
          _
        // Predicated region
        $region17: #{tpu_custom_call.1} parent=11 // pred_check
          %p169 = pneg %p99
        $region18: #{tpu_custom_call.1} parent=11 // pred_check_branch
          %171 = sbr.rel (%p169) target = $region20
        $region19: #{tpu_custom_call.1} parent=11 // pred_region
          _
        $region20: #{tpu_custom_call.1} parent=11 // pred_fallthru
          _
      $region12: #{tpu_custom_call.1} parent=5 // pred_fallthru
        _
      %p172 = scmp.lt.s32.totalorder %s17, 4
      // Predicated region
      $region21: #{tpu_custom_call.1} parent=5 // pred_check
        %p173 = pneg %p172
      $region22: #{tpu_custom_call.1} parent=5 // pred_check_branch
        %175 = sbr.rel (%p173) target = $region24
      $region23: #{tpu_custom_call.1} parent=5 // pred_region
        // Predicated region
        $region25: #{tpu_custom_call.1} parent=23 // pred_check
          %p176 = pneg %p51
        $region26: #{tpu_custom_call.1} parent=23 // pred_check_branch
          %178 = sbr.rel (%p176) target = $region28
        $region27: #{tpu_custom_call.1} parent=23 // pred_region
          %s179 = smul.u32 4, %s25
          %p180 = scmp.lt.s32.totalorder %s24, 1
          %s181 = scalar_select %p180, %s24, 1
          %p182 = scmp.lt.s32.totalorder %s179, 7
          %s183 = scalar_select %p182, %s179, 7
          %s184 = smul.addr %s181, 8
          %s185 = sadd.s32 %s183, %s184
          %s186 = smul.addr %s185, 4
          %s187 = scalar_lea.vmem %s0, %s186
          %s188 = smul.u32 4, %s25
        $region28: #{tpu_custom_call.1} parent=23 // pred_fallthru
          _
      $region24: #{tpu_custom_call.1} parent=5 // pred_fallthru
        _
      %p189 = scmp.le.s32.totalorder 1, %s17
      %p190 = scmp.lt.s32.totalorder %s17, 5
      %p191 = pnand %p189, %p190
      %p192 = pneg %p191
      // Predicated region
      $region29: #{tpu_custom_call.1} parent=5 // pred_check
        _
      $region30: #{tpu_custom_call.1} parent=5 // pred_check_branch
        %194 = sbr.rel (%p191) target = $region32
      $region31: #{tpu_custom_call.1} parent=5 // pred_region
        %s195 = ssub.s32 %s17, 1
        %s196 = smul.u32 4, %s27
        %p197 = scmp.lt.s32.totalorder %s26, 1
        %s198 = scalar_select %p197, %s26, 1
        %p199 = scmp.lt.s32.totalorder %s196, 7
        %s200 = scalar_select %p199, %s196, 7
        %s201 = smul.addr %s198, 8
        %s202 = sadd.s32 %s200, %s201
        %s203 = smul.addr %s202, 4
        %s204 = scalar_lea.vmem %s0, %s203
        %p205 = pneg %p57
        %p206 = pneg %p54
        %p207 = pneg %p78
        %p208 = pneg %p75
        %p209 = pneg %p99
        %p210 = pneg %p96
        %p211 = pneg %p125
        %p212 = pneg %p122
        %s213 = sand.u32 %s112, 1
        %s214 = scalar_lea.sflag [#allocation3], %s213
        %s215 = sand.u32 %s112, 1
        %s216 = smul.addr %s215, 32
        %s217 = scalar_lea.vmem [#allocation2], %s216
        %p218 = pneg %p151
        %p219 = pneg %p148
        %s220 = sand.u32 %s138, 1
        %s221 = scalar_lea.sflag [#allocation5], %s220
        %s222 = sand.u32 %s138, 1
        %s223 = smul.addr %s222, 4
        %s224 = scalar_lea.vmem [#allocation4], %s223
        %s225 = smul.u32 4, %s27
        %p226 = scmp.lt.s32.totalorder %s26, 1
        %s227 = scalar_select %p226, %s26, 1
        %p228 = scmp.lt.s32.totalorder %s225, 7
        %s229 = scalar_select %p228, %s225, 7
        %s230 = smul.addr %s227, 8
        %s231 = sadd.s32 %s229, %s230
        %s232 = smul.addr %s231, 4
        %s233 = scalar_lea.vmem %s0, %s232
        %s234 = smul.u32 4, %s27
        %v236 = vld [vmem:[%s233] sm:$0xf]
        %v237 = vld [vmem:[%s233 + $0x4] sm:$0xf]
        %v238 = vld [vmem:[%s233 + $0x8] sm:$0xf]
        %v239 = vld [vmem:[%s233 + $0xc] sm:$0xf]
        %v240 = vld [vmem:[%s1] sm:$0xf]
        %v241 = vld [vmem:[%s1 + $0x4] sm:$0xf]
        %v242 = vld [vmem:[%s1 + $0x8] sm:$0xf]
        %v243 = vld [vmem:[%s1 + $0xc] sm:$0xf]
        %v244 = vld [vmem:[%s2] sm:$0x1]
        %v246 = vlaneseq
        %v247 = vshrl.u32 %v246, 7
        %v248 = vsub.s32 0, %v247
        %v249 = vrot.slane %v244, %v248
        %v255 = vunpack.c.l.b16 %v236
        %v256 = vunpack.c.l.b16 %v237
        %v257 = vunpack.c.l.b16 %v238
        %v258 = vunpack.c.l.b16 %v239
        %v259 = vpack.c.b16 %v256, %v255
        %v260 = vpack.c.b16 %v258, %v257
        %v265 = vunpack.c.l.b16 %v240
        %v266 = vunpack.c.l.b16 %v241
        %v267 = vunpack.c.l.b16 %v242
        %v268 = vunpack.c.l.b16 %v243
        %v269 = vpack.c.b16 %v266, %v265
        %v270 = vpack.c.b16 %v268, %v267
        %vm273 = vcmask 261120
        %v275 = vsel %vm273, %v259, 0
        %v278 = vsel %vm273, %v260, 0
        %280 = vmatprep.subr.bf16.mxu0 0
        %281 = vmatpush1.bf16.msra.mxu0 %v269
        %282 = vmatprep.subr.bf16.mxu0 0
        %283 = vmatpush1.bf16.msra.mxu0 %v270
        %284 = vmatprep.subr.bf16.mxu0 0
        %285 = vmatpush1.bf16.msra.mxu0 0
        %286 = vmatprep.subr.bf16.mxu0 0
        %287 = vmatpush1.bf16.msra.mxu0 0
        %288 = vmatprep.subr.bf16.mxu0 0
        %289 = vmatpush1.bf16.msra.mxu0 0
        %290 = vmatprep.subr.bf16.mxu0 0
        %291 = vmatpush1.bf16.msra.mxu0 0
        %292 = vmatprep.subr.bf16.mxu0 0
        %293 = vmatpush1.bf16.msra.mxu0 0
        %294 = vmatprep.subr.bf16.mxu0 0
        %295 = vmatpush1.bf16.msra.mxu0 0
        %296 = vmatprep.subr.bf16.mxu0 0
        %297 = vmatpush1.bf16.msra.mxu0 0
        %298 = vmatprep.subr.bf16.mxu0 0
        %299 = vmatpush1.bf16.msra.mxu0 0
        %300 = vmatprep.subr.bf16.mxu0 0
        %301 = vmatpush1.bf16.msra.mxu0 0
        %302 = vmatprep.subr.bf16.mxu0 0
        %303 = vmatpush1.bf16.msra.mxu0 0
        %304 = vmatprep.subr.bf16.mxu0 0
        %305 = vmatpush1.bf16.msra.mxu0 0
        %306 = vmatprep.subr.bf16.mxu0 0
        %307 = vmatpush1.bf16.msra.mxu0 0
        %308 = vmatprep.subr.bf16.mxu0 0
        %309 = vmatpush1.bf16.msra.mxu0 0
        %310 = vmatprep.subr.bf16.mxu0 0
        %311 = vmatpush1.bf16.msra.mxu0 0
        %312 = vmatprep.mubr.bf16.mxu0 0
        %313 = vmatmul.mubr.bf16.gmra.mrb[0].mxu0 %v275
        %v314 = vpop.f32.mrb[0].mxu0
        %v315 = vadd.f32 %v249, %v314
        %v316 = vpop.f32.mrb[0].mxu0
        %v317 = vpop.f32.mrb[0].mxu0
        %v318 = vadd.f32 %v249, %v317
        %v319 = vpop.f32.mrb[0].mxu0
        %320 = vmatprep.mubr.bf16.mxu0 0
        %321 = vmatmul.mubr.bf16.gmra.mrb[0].mxu0 %v278
        %v322 = vpop.f32.mrb[0].mxu0
        %v323 = vadd.f32 %v249, %v322
        %v324 = vpop.f32.mrb[0].mxu0
        %v325 = vpop.f32.mrb[0].mxu0
        %v326 = vadd.f32 %v249, %v325
        %v327 = vpop.f32.mrb[0].mxu0
        %328 = vdwg.mxu0
        %333 = vrot.lane.b32.xlu0 %v315, 120
        %v334 = vpop.permute.xlu0 %333
        %335 = vrot.lane.b32.xlu0 %v318, 120
        %v336 = vpop.permute.xlu0 %335
        %337 = vrot.lane.b32.xlu0 %v323, 120
        %v338 = vpop.permute.xlu0 %337
        %339 = vrot.lane.b32.xlu0 %v326, 120
        %v340 = vpop.permute.xlu0 %339
        %345 = vrot.lane.b32.xlu0 %v315, 112
        %v346 = vpop.permute.xlu0 %345
        %347 = vrot.lane.b32.xlu0 %v318, 112
        %v348 = vpop.permute.xlu0 %347
        %349 = vrot.lane.b32.xlu0 %v323, 112
        %v350 = vpop.permute.xlu0 %349
        %351 = vrot.lane.b32.xlu0 %v326, 112
        %v352 = vpop.permute.xlu0 %351
        %357 = vrot.lane.b32.xlu0 %v315, 104
        %v358 = vpop.permute.xlu0 %357
        %359 = vrot.lane.b32.xlu0 %v318, 104
        %v360 = vpop.permute.xlu0 %359
        %361 = vrot.lane.b32.xlu0 %v323, 104
        %v362 = vpop.permute.xlu0 %361
        %363 = vrot.lane.b32.xlu0 %v326, 104
        %v364 = vpop.permute.xlu0 %363
        %v369 = vcombine.low %v315, %v346
        %v370 = vcombine.high %v315, %v346
        %v372 = vunpack.c.l.s4 1983009808
        %v373 = vunpack.c.0.s8 %v372
        %v374 = vlaneseq
        %v375 = vshrl.u32 %v374, 7
        %v376 = vsub.s32 %v373, %v375
        %v377 = vrot.slane %v369, %v376
        %v379 = vunpack.c.l.s4 1983009808
        %v380 = vunpack.c.0.s8 %v379
        %v381 = vlaneseq
        %v382 = vshrl.u32 %v381, 7
        %v383 = vsub.s32 %v380, %v382
        %v384 = vrot.slane %v370, %v383
        %v385 = vcombine.low %v334, %v358
        %v386 = vcombine.high %v334, %v358
        %v388 = vunpack.c.l.s4 1983009808
        %v389 = vunpack.c.0.s8 %v388
        %v390 = vlaneseq
        %v391 = vshrl.u32 %v390, 7
        %v392 = vsub.s32 %v389, %v391
        %v393 = vrot.slane %v385, %v392
        %v395 = vunpack.c.l.s4 1983009808
        %v396 = vunpack.c.0.s8 %v395
        %v397 = vlaneseq
        %v398 = vshrl.u32 %v397, 7
        %v399 = vsub.s32 %v396, %v398
        %v400 = vrot.slane %v386, %v399
        %v401 = vcombine.low %v377, %v393
        %v402 = vcombine.high %v377, %v393
        %v404 = vunpack.c.l.s4 1934713408
        %v405 = vunpack.c.0.s8 %v404
        %v406 = vlaneseq
        %v407 = vshrl.u32 %v406, 7
        %v408 = vsub.s32 %v405, %v407
        %v409 = vrot.slane %v401, %v408
        %v411 = vunpack.c.l.s4 1934713408
        %v412 = vunpack.c.0.s8 %v411
        %v413 = vlaneseq
        %v414 = vshrl.u32 %v413, 7
        %v415 = vsub.s32 %v412, %v414
        %v416 = vrot.slane %v402, %v415
        %v417 = vcombine.low %v384, %v400
        %v418 = vcombine.high %v384, %v400
        %v420 = vunpack.c.l.s4 1934713408
        %v421 = vunpack.c.0.s8 %v420
        %v422 = vlaneseq
        %v423 = vshrl.u32 %v422, 7
        %v424 = vsub.s32 %v421, %v423
        %v425 = vrot.slane %v417, %v424
        %v427 = vunpack.c.l.s4 1934713408
        %v428 = vunpack.c.0.s8 %v427
        %v429 = vlaneseq
        %v430 = vshrl.u32 %v429, 7
        %v431 = vsub.s32 %v428, %v430
        %v432 = vrot.slane %v418, %v431
        %v433 = vcombine.high %v409, 0.0
        %v434 = vcombine.high %v416, 0.0
        %v435 = vcombine.high %v425, 0.0
        %v436 = vcombine.high %v432, 0.0
        %v437 = vcombine.low %v318, %v348
        %v438 = vcombine.high %v318, %v348
        %v440 = vunpack.c.l.s4 1983009808
        %v441 = vunpack.c.0.s8 %v440
        %v442 = vlaneseq
        %v443 = vshrl.u32 %v442, 7
        %v444 = vsub.s32 %v441, %v443
        %v445 = vrot.slane %v437, %v444
        %v447 = vunpack.c.l.s4 1983009808
        %v448 = vunpack.c.0.s8 %v447
        %v449 = vlaneseq
        %v450 = vshrl.u32 %v449, 7
        %v451 = vsub.s32 %v448, %v450
        %v452 = vrot.slane %v438, %v451
        %v453 = vcombine.low %v336, %v360
        %v454 = vcombine.high %v336, %v360
        %v456 = vunpack.c.l.s4 1983009808
        %v457 = vunpack.c.0.s8 %v456
        %v458 = vlaneseq
        %v459 = vshrl.u32 %v458, 7
        %v460 = vsub.s32 %v457, %v459
        %v461 = vrot.slane %v453, %v460
        %v463 = vunpack.c.l.s4 1983009808
        %v464 = vunpack.c.0.s8 %v463
        %v465 = vlaneseq
        %v466 = vshrl.u32 %v465, 7
        %v467 = vsub.s32 %v464, %v466
        %v468 = vrot.slane %v454, %v467
        %v469 = vcombine.low %v445, %v461
        %v470 = vcombine.high %v445, %v461
        %v472 = vunpack.c.l.s4 1934713408
        %v473 = vunpack.c.0.s8 %v472
        %v474 = vlaneseq
        %v475 = vshrl.u32 %v474, 7
        %v476 = vsub.s32 %v473, %v475
        %v477 = vrot.slane %v469, %v476
        %v479 = vunpack.c.l.s4 1934713408
        %v480 = vunpack.c.0.s8 %v479
        %v481 = vlaneseq
        %v482 = vshrl.u32 %v481, 7
        %v483 = vsub.s32 %v480, %v482
        %v484 = vrot.slane %v470, %v483
        %v485 = vcombine.low %v452, %v468
        %v486 = vcombine.high %v452, %v468
        %v488 = vunpack.c.l.s4 1934713408
        %v489 = vunpack.c.0.s8 %v488
        %v490 = vlaneseq
        %v491 = vshrl.u32 %v490, 7
        %v492 = vsub.s32 %v489, %v491
        %v493 = vrot.slane %v485, %v492
        %v495 = vunpack.c.l.s4 1934713408
        %v496 = vunpack.c.0.s8 %v495
        %v497 = vlaneseq
        %v498 = vshrl.u32 %v497, 7
        %v499 = vsub.s32 %v496, %v498
        %v500 = vrot.slane %v486, %v499
        %v501 = vcombine.high %v477, 0.0
        %v502 = vcombine.high %v484, 0.0
        %v503 = vcombine.high %v493, 0.0
        %v504 = vcombine.high %v500, 0.0
        %v505 = vcombine.low %v323, %v350
        %v506 = vcombine.high %v323, %v350
        %v508 = vunpack.c.l.s4 1983009808
        %v509 = vunpack.c.0.s8 %v508
        %v510 = vlaneseq
        %v511 = vshrl.u32 %v510, 7
        %v512 = vsub.s32 %v509, %v511
        %v513 = vrot.slane %v505, %v512
        %v515 = vunpack.c.l.s4 1983009808
        %v516 = vunpack.c.0.s8 %v515
        %v517 = vlaneseq
        %v518 = vshrl.u32 %v517, 7
        %v519 = vsub.s32 %v516, %v518
        %v520 = vrot.slane %v506, %v519
        %v521 = vcombine.low %v338, %v362
        %v522 = vcombine.high %v338, %v362
        %v524 = vunpack.c.l.s4 1983009808
        %v525 = vunpack.c.0.s8 %v524
        %v526 = vlaneseq
        %v527 = vshrl.u32 %v526, 7
        %v528 = vsub.s32 %v525, %v527
        %v529 = vrot.slane %v521, %v528
        %v531 = vunpack.c.l.s4 1983009808
        %v532 = vunpack.c.0.s8 %v531
        %v533 = vlaneseq
        %v534 = vshrl.u32 %v533, 7
        %v535 = vsub.s32 %v532, %v534
        %v536 = vrot.slane %v522, %v535
        %v537 = vcombine.low %v513, %v529
        %v538 = vcombine.high %v513, %v529
        %v540 = vunpack.c.l.s4 1934713408
        %v541 = vunpack.c.0.s8 %v540
        %v542 = vlaneseq
        %v543 = vshrl.u32 %v542, 7
        %v544 = vsub.s32 %v541, %v543
        %v545 = vrot.slane %v537, %v544
        %v547 = vunpack.c.l.s4 1934713408
        %v548 = vunpack.c.0.s8 %v547
        %v549 = vlaneseq
        %v550 = vshrl.u32 %v549, 7
        %v551 = vsub.s32 %v548, %v550
        %v552 = vrot.slane %v538, %v551
        %v553 = vcombine.low %v520, %v536
        %v554 = vcombine.high %v520, %v536
        %v556 = vunpack.c.l.s4 1934713408
        %v557 = vunpack.c.0.s8 %v556
        %v558 = vlaneseq
        %v559 = vshrl.u32 %v558, 7
        %v560 = vsub.s32 %v557, %v559
        %v561 = vrot.slane %v553, %v560
        %v563 = vunpack.c.l.s4 1934713408
        %v564 = vunpack.c.0.s8 %v563
        %v565 = vlaneseq
        %v566 = vshrl.u32 %v565, 7
        %v567 = vsub.s32 %v564, %v566
        %v568 = vrot.slane %v554, %v567
        %v569 = vcombine.high %v545, 0.0
        %v570 = vcombine.high %v552, 0.0
        %v571 = vcombine.high %v561, 0.0
        %v572 = vcombine.high %v568, 0.0
        %v573 = vcombine.low %v326, %v352
        %v574 = vcombine.high %v326, %v352
        %v576 = vunpack.c.l.s4 1983009808
        %v577 = vunpack.c.0.s8 %v576
        %v578 = vlaneseq
        %v579 = vshrl.u32 %v578, 7
        %v580 = vsub.s32 %v577, %v579
        %v581 = vrot.slane %v573, %v580
        %v583 = vunpack.c.l.s4 1983009808
        %v584 = vunpack.c.0.s8 %v583
        %v585 = vlaneseq
        %v586 = vshrl.u32 %v585, 7
        %v587 = vsub.s32 %v584, %v586
        %v588 = vrot.slane %v574, %v587
        %v589 = vcombine.low %v340, %v364
        %v590 = vcombine.high %v340, %v364
        %v592 = vunpack.c.l.s4 1983009808
        %v593 = vunpack.c.0.s8 %v592
        %v594 = vlaneseq
        %v595 = vshrl.u32 %v594, 7
        %v596 = vsub.s32 %v593, %v595
        %v597 = vrot.slane %v589, %v596
        %v599 = vunpack.c.l.s4 1983009808
        %v600 = vunpack.c.0.s8 %v599
        %v601 = vlaneseq
        %v602 = vshrl.u32 %v601, 7
        %v603 = vsub.s32 %v600, %v602
        %v604 = vrot.slane %v590, %v603
        %v605 = vcombine.low %v581, %v597
        %v606 = vcombine.high %v581, %v597
        %v608 = vunpack.c.l.s4 1934713408
        %v609 = vunpack.c.0.s8 %v608
        %v610 = vlaneseq
        %v611 = vshrl.u32 %v610, 7
        %v612 = vsub.s32 %v609, %v611
        %v613 = vrot.slane %v605, %v612
        %v615 = vunpack.c.l.s4 1934713408
        %v616 = vunpack.c.0.s8 %v615
        %v617 = vlaneseq
        %v618 = vshrl.u32 %v617, 7
        %v619 = vsub.s32 %v616, %v618
        %v620 = vrot.slane %v606, %v619
        %v621 = vcombine.low %v588, %v604
        %v622 = vcombine.high %v588, %v604
        %v624 = vunpack.c.l.s4 1934713408
        %v625 = vunpack.c.0.s8 %v624
        %v626 = vlaneseq
        %v627 = vshrl.u32 %v626, 7
        %v628 = vsub.s32 %v625, %v627
        %v629 = vrot.slane %v621, %v628
        %v631 = vunpack.c.l.s4 1934713408
        %v632 = vunpack.c.0.s8 %v631
        %v633 = vlaneseq
        %v634 = vshrl.u32 %v633, 7
        %v635 = vsub.s32 %v632, %v634
        %v636 = vrot.slane %v622, %v635
        %v637 = vcombine.high %v613, 0.0
        %v638 = vcombine.high %v620, 0.0
        %v639 = vcombine.high %v629, 0.0
        %v640 = vcombine.high %v636, 0.0
        %vm641 = vcmask 60416
        %v642 = vsel %vm641, %v409, -inf
        %643 = vmax.xlane.f32.xlu0 %v642
        %v644 = vpop.xlane.xlu0 %643
        %v645 = vsel %vm641, %v433, -inf
        %646 = vmax.xlane.f32.xlu0 %v645
        %v647 = vpop.xlane.xlu0 %646
        %v648 = vsel %vm641, %v416, -inf
        %649 = vmax.xlane.f32.xlu0 %v648
        %v650 = vpop.xlane.xlu0 %649
        %v651 = vsel %vm641, %v434, -inf
        %652 = vmax.xlane.f32.xlu0 %v651
        %v653 = vpop.xlane.xlu0 %652
        %v654 = vsel %vm641, %v425, -inf
        %655 = vmax.xlane.f32.xlu0 %v654
        %v656 = vpop.xlane.xlu0 %655
        %v657 = vsel %vm641, %v435, -inf
        %658 = vmax.xlane.f32.xlu0 %v657
        %v659 = vpop.xlane.xlu0 %658
        %v660 = vsel %vm641, %v432, -inf
        %661 = vmax.xlane.f32.xlu0 %v660
        %v662 = vpop.xlane.xlu0 %661
        %v663 = vsel %vm641, %v436, -inf
        %664 = vmax.xlane.f32.xlu0 %v663
        %v665 = vpop.xlane.xlu0 %664
        %v666 = vsel %vm641, %v477, -inf
        %667 = vmax.xlane.f32.xlu0 %v666
        %v668 = vpop.xlane.xlu0 %667
        %v669 = vsel %vm641, %v501, -inf
        %670 = vmax.xlane.f32.xlu0 %v669
        %v671 = vpop.xlane.xlu0 %670
        %v672 = vsel %vm641, %v484, -inf
        %673 = vmax.xlane.f32.xlu0 %v672
        %v674 = vpop.xlane.xlu0 %673
        %v675 = vsel %vm641, %v502, -inf
        %676 = vmax.xlane.f32.xlu0 %v675
        %v677 = vpop.xlane.xlu0 %676
        %v678 = vsel %vm641, %v493, -inf
        %679 = vmax.xlane.f32.xlu0 %v678
        %v680 = vpop.xlane.xlu0 %679
        %v681 = vsel %vm641, %v503, -inf
        %682 = vmax.xlane.f32.xlu0 %v681
        %v683 = vpop.xlane.xlu0 %682
        %v684 = vsel %vm641, %v500, -inf
        %685 = vmax.xlane.f32.xlu0 %v684
        %v686 = vpop.xlane.xlu0 %685
        %v687 = vsel %vm641, %v504, -inf
        %688 = vmax.xlane.f32.xlu0 %v687
        %v689 = vpop.xlane.xlu0 %688
        %v690 = vsel %vm641, %v545, -inf
        %691 = vmax.xlane.f32.xlu0 %v690
        %v692 = vpop.xlane.xlu0 %691
        %v693 = vsel %vm641, %v569, -inf
        %694 = vmax.xlane.f32.xlu0 %v693
        %v695 = vpop.xlane.xlu0 %694
        %v696 = vsel %vm641, %v552, -inf
        %697 = vmax.xlane.f32.xlu0 %v696
        %v698 = vpop.xlane.xlu0 %697
        %v699 = vsel %vm641, %v570, -inf
        %700 = vmax.xlane.f32.xlu0 %v699
        %v701 = vpop.xlane.xlu0 %700
        %v702 = vsel %vm641, %v561, -inf
        %703 = vmax.xlane.f32.xlu0 %v702
        %v704 = vpop.xlane.xlu0 %703
        %v705 = vsel %vm641, %v571, -inf
        %706 = vmax.xlane.f32.xlu0 %v705
        %v707 = vpop.xlane.xlu0 %706
        %v708 = vsel %vm641, %v568, -inf
        %709 = vmax.xlane.f32.xlu0 %v708
        %v710 = vpop.xlane.xlu0 %709
        %v711 = vsel %vm641, %v572, -inf
        %712 = vmax.xlane.f32.xlu0 %v711
        %v713 = vpop.xlane.xlu0 %712
        %v714 = vsel %vm641, %v613, -inf
        %715 = vmax.xlane.f32.xlu0 %v714
        %v716 = vpop.xlane.xlu0 %715
        %v717 = vsel %vm641, %v637, -inf
        %718 = vmax.xlane.f32.xlu0 %v717
        %v719 = vpop.xlane.xlu0 %718
        %v720 = vsel %vm641, %v620, -inf
        %721 = vmax.xlane.f32.xlu0 %v720
        %v722 = vpop.xlane.xlu0 %721
        %v723 = vsel %vm641, %v638, -inf
        %724 = vmax.xlane.f32.xlu0 %v723
        %v725 = vpop.xlane.xlu0 %724
        %v726 = vsel %vm641, %v629, -inf
        %727 = vmax.xlane.f32.xlu0 %v726
        %v728 = vpop.xlane.xlu0 %727
        %v729 = vsel %vm641, %v639, -inf
        %730 = vmax.xlane.f32.xlu0 %v729
        %v731 = vpop.xlane.xlu0 %730
        %v732 = vsel %vm641, %v636, -inf
        %733 = vmax.xlane.f32.xlu0 %v732
        %v734 = vpop.xlane.xlu0 %733
        %v735 = vsel %vm641, %v640, -inf
        %736 = vmax.xlane.f32.xlu0 %v735
        %v737 = vpop.xlane.xlu0 %736
        %v738 = vsub.f32 %v409, %v644
        %v739 = vsub.f32 %v433, %v647
        %v740 = vsub.f32 %v416, %v650
        %v741 = vsub.f32 %v434, %v653
        %v742 = vsub.f32 %v425, %v656
        %v743 = vsub.f32 %v435, %v659
        %v744 = vsub.f32 %v432, %v662
        %v745 = vsub.f32 %v436, %v665
        %v746 = vsub.f32 %v477, %v668
        %v747 = vsub.f32 %v501, %v671
        %v748 = vsub.f32 %v484, %v674
        %v749 = vsub.f32 %v502, %v677
        %v750 = vsub.f32 %v493, %v680
        %v751 = vsub.f32 %v503, %v683
        %v752 = vsub.f32 %v500, %v686
        %v753 = vsub.f32 %v504, %v689
        %v754 = vsub.f32 %v545, %v692
        %v755 = vsub.f32 %v569, %v695
        %v756 = vsub.f32 %v552, %v698
        %v757 = vsub.f32 %v570, %v701
        %v758 = vsub.f32 %v561, %v704
        %v759 = vsub.f32 %v571, %v707
        %v760 = vsub.f32 %v568, %v710
        %v761 = vsub.f32 %v572, %v713
        %v762 = vsub.f32 %v613, %v716
        %v763 = vsub.f32 %v637, %v719
        %v764 = vsub.f32 %v620, %v722
        %v765 = vsub.f32 %v638, %v725
        %v766 = vsub.f32 %v629, %v728
        %v767 = vsub.f32 %v639, %v731
        %v768 = vsub.f32 %v636, %v734
        %v769 = vsub.f32 %v640, %v737
        %v770 = vmul.f32 %v738, 1.442695
        %v771 = vpow.pop %v770
        %v772 = vmul.f32 %v739, 1.442695
        %v773 = vpow.pop %v772
        %v774 = vmul.f32 %v740, 1.442695
        %v775 = vpow.pop %v774
        %v776 = vmul.f32 %v741, 1.442695
        %v777 = vpow.pop %v776
        %v778 = vmul.f32 %v742, 1.442695
        %v779 = vpow.pop %v778
        %v780 = vmul.f32 %v743, 1.442695
        %v781 = vpow.pop %v780
        %v782 = vmul.f32 %v744, 1.442695
        %v783 = vpow.pop %v782
        %v784 = vmul.f32 %v745, 1.442695
        %v785 = vpow.pop %v784
        %v786 = vmul.f32 %v746, 1.442695
        %v787 = vpow.pop %v786
        %v788 = vmul.f32 %v747, 1.442695
        %v789 = vpow.pop %v788
        %v790 = vmul.f32 %v748, 1.442695
        %v791 = vpow.pop %v790
        %v792 = vmul.f32 %v749, 1.442695
        %v793 = vpow.pop %v792
        %v794 = vmul.f32 %v750, 1.442695
        %v795 = vpow.pop %v794
        %v796 = vmul.f32 %v751, 1.442695
        %v797 = vpow.pop %v796
        %v798 = vmul.f32 %v752, 1.442695
        %v799 = vpow.pop %v798
        %v800 = vmul.f32 %v753, 1.442695
        %v801 = vpow.pop %v800
        %v802 = vmul.f32 %v754, 1.442695
        %v803 = vpow.pop %v802
        %v804 = vmul.f32 %v755, 1.442695
        %v805 = vpow.pop %v804
        %v806 = vmul.f32 %v756, 1.442695
        %v807 = vpow.pop %v806
        %v808 = vmul.f32 %v757, 1.442695
        %v809 = vpow.pop %v808
        %v810 = vmul.f32 %v758, 1.442695
        %v811 = vpow.pop %v810
        %v812 = vmul.f32 %v759, 1.442695
        %v813 = vpow.pop %v812
        %v814 = vmul.f32 %v760, 1.442695
        %v815 = vpow.pop %v814
        %v816 = vmul.f32 %v761, 1.442695
        %v817 = vpow.pop %v816
        %v818 = vmul.f32 %v762, 1.442695
        %v819 = vpow.pop %v818
        %v820 = vmul.f32 %v763, 1.442695
        %v821 = vpow.pop %v820
        %v822 = vmul.f32 %v764, 1.442695
        %v823 = vpow.pop %v822
        %v824 = vmul.f32 %v765, 1.442695
        %v825 = vpow.pop %v824
        %v826 = vmul.f32 %v766, 1.442695
        %v827 = vpow.pop %v826
        %v828 = vmul.f32 %v767, 1.442695
        %v829 = vpow.pop %v828
        %v830 = vmul.f32 %v768, 1.442695
        %v831 = vpow.pop %v830
        %v832 = vmul.f32 %v769, 1.442695
        %v833 = vpow.pop %v832
        %834 = vxpose.xlu0.b32.start [1/16] %v771, 128
        %835 = vxpose.xlu0.b32.cont [2/16] 0.0, 128
        %836 = vxpose.xlu0.b32.cont [3/16] 0.0, 128
        %837 = vxpose.xlu0.b32.cont [4/16] 0.0, 128
        %838 = vxpose.xlu0.b32.cont [5/16] 0.0, 128
        %839 = vxpose.xlu0.b32.cont [6/16] 0.0, 128
        %840 = vxpose.xlu0.b32.cont [7/16] 0.0, 128
        %841 = vxpose.xlu0.b32.cont [8/16] 0.0, 128
        %842 = vxpose.xlu0.b32.cont [9/16] 0.0, 128
        %843 = vxpose.xlu0.b32.cont [10/16] 0.0, 128
        %844 = vxpose.xlu0.b32.cont [11/16] 0.0, 128
        %845 = vxpose.xlu0.b32.cont [12/16] 0.0, 128
        %846 = vxpose.xlu0.b32.cont [13/16] 0.0, 128
        %847 = vxpose.xlu0.b32.cont [14/16] 0.0, 128
        %848 = vxpose.xlu0.b32.cont [15/16] 0.0, 128
        %849 = vxpose.xlu0.b32.end [16/16] 0.0, 128
        %v850 = vpop.trf.xlu0
        %v851 = vpop.trf.xlu0
        %v852 = vpop.trf.xlu0
        %v853 = vpop.trf.xlu0
        %v854 = vpop.trf.xlu0
        %v855 = vpop.trf.xlu0
        %v856 = vpop.trf.xlu0
        %v857 = vpop.trf.xlu0
        %v858 = vpop.trf.xlu0
        %v859 = vpop.trf.xlu0
        %v860 = vpop.trf.xlu0
        %v861 = vpop.trf.xlu0
        %v862 = vpop.trf.xlu0
        %v863 = vpop.trf.xlu0
        %v864 = vpop.trf.xlu0
        %v865 = vpop.trf.xlu0
        %866 = vxpose.xlu0.b32.start [1/16] %v773, 128
        %867 = vxpose.xlu0.b32.cont [2/16] 0.0, 128
        %868 = vxpose.xlu0.b32.cont [3/16] 0.0, 128
        %869 = vxpose.xlu0.b32.cont [4/16] 0.0, 128
        %870 = vxpose.xlu0.b32.cont [5/16] 0.0, 128
        %871 = vxpose.xlu0.b32.cont [6/16] 0.0, 128
        %872 = vxpose.xlu0.b32.cont [7/16] 0.0, 128
        %873 = vxpose.xlu0.b32.cont [8/16] 0.0, 128
        %874 = vxpose.xlu0.b32.cont [9/16] 0.0, 128
        %875 = vxpose.xlu0.b32.cont [10/16] 0.0, 128
        %876 = vxpose.xlu0.b32.cont [11/16] 0.0, 128
        %877 = vxpose.xlu0.b32.cont [12/16] 0.0, 128
        %878 = vxpose.xlu0.b32.cont [13/16] 0.0, 128
        %879 = vxpose.xlu0.b32.cont [14/16] 0.0, 128
        %880 = vxpose.xlu0.b32.cont [15/16] 0.0, 128
        %881 = vxpose.xlu0.b32.end [16/16] 0.0, 128
        %v882 = vpop.trf.xlu0
        %v883 = vpop.trf.xlu0
        %v884 = vpop.trf.xlu0
        %v885 = vpop.trf.xlu0
        %v886 = vpop.trf.xlu0
        %v887 = vpop.trf.xlu0
        %v888 = vpop.trf.xlu0
        %v889 = vpop.trf.xlu0
        %v890 = vpop.trf.xlu0
        %v891 = vpop.trf.xlu0
        %v892 = vpop.trf.xlu0
        %v893 = vpop.trf.xlu0
        %v894 = vpop.trf.xlu0
        %v895 = vpop.trf.xlu0
        %v896 = vpop.trf.xlu0
        %v897 = vpop.trf.xlu0
        %898 = vxpose.xlu0.b32.start [1/16] %v775, 128
        %899 = vxpose.xlu0.b32.cont [2/16] 0.0, 128
        %900 = vxpose.xlu0.b32.cont [3/16] 0.0, 128
        %901 = vxpose.xlu0.b32.cont [4/16] 0.0, 128
        %902 = vxpose.xlu0.b32.cont [5/16] 0.0, 128
        %903 = vxpose.xlu0.b32.cont [6/16] 0.0, 128
        %904 = vxpose.xlu0.b32.cont [7/16] 0.0, 128
        %905 = vxpose.xlu0.b32.cont [8/16] 0.0, 128
        %906 = vxpose.xlu0.b32.cont [9/16] 0.0, 128
        %907 = vxpose.xlu0.b32.cont [10/16] 0.0, 128
        %908 = vxpose.xlu0.b32.cont [11/16] 0.0, 128
        %909 = vxpose.xlu0.b32.cont [12/16] 0.0, 128
        %910 = vxpose.xlu0.b32.cont [13/16] 0.0, 128
        %911 = vxpose.xlu0.b32.cont [14/16] 0.0, 128
        %912 = vxpose.xlu0.b32.cont [15/16] 0.0, 128
        %913 = vxpose.xlu0.b32.end [16/16] 0.0, 128
        %v914 = vpop.trf.xlu0
        %v915 = vpop.trf.xlu0
        %v916 = vpop.trf.xlu0
        %v917 = vpop.trf.xlu0
        %v918 = vpop.trf.xlu0
        %v919 = vpop.trf.xlu0
        %v920 = vpop.trf.xlu0
        %v921 = vpop.trf.xlu0
        %v922 = vpop.trf.xlu0
        %v923 = vpop.trf.xlu0
        %v924 = vpop.trf.xlu0
        %v925 = vpop.trf.xlu0
        %v926 = vpop.trf.xlu0
        %v927 = vpop.trf.xlu0
        %v928 = vpop.trf.xlu0
        %v929 = vpop.trf.xlu0
        %930 = vxpose.xlu0.b32.start [1/16] %v777, 128
        %931 = vxpose.xlu0.b32.cont [2/16] 0.0, 128
        %932 = vxpose.xlu0.b32.cont [3/16] 0.0, 128
        %933 = vxpose.xlu0.b32.cont [4/16] 0.0, 128
        %934 = vxpose.xlu0.b32.cont [5/16] 0.0, 128
        %935 = vxpose.xlu0.b32.cont [6/16] 0.0, 128
        %936 = vxpose.xlu0.b32.cont [7/16] 0.0, 128
        %937 = vxpose.xlu0.b32.cont [8/16] 0.0, 128
        %938 = vxpose.xlu0.b32.cont [9/16] 0.0, 128
        %939 = vxpose.xlu0.b32.cont [10/16] 0.0, 128
        %940 = vxpose.xlu0.b32.cont [11/16] 0.0, 128
        %941 = vxpose.xlu0.b32.cont [12/16] 0.0, 128
        %942 = vxpose.xlu0.b32.cont [13/16] 0.0, 128
        %943 = vxpose.xlu0.b32.cont [14/16] 0.0, 128
        %944 = vxpose.xlu0.b32.cont [15/16] 0.0, 128
        %945 = vxpose.xlu0.b32.end [16/16] 0.0, 128
        %v946 = vpop.trf.xlu0
        %v947 = vpop.trf.xlu0
        %v948 = vpop.trf.xlu0
        %v949 = vpop.trf.xlu0
        %v950 = vpop.trf.xlu0
        %v951 = vpop.trf.xlu0
        %v952 = vpop.trf.xlu0
        %v953 = vpop.trf.xlu0
        %v954 = vpop.trf.xlu0
        %v955 = vpop.trf.xlu0
        %v956 = vpop.trf.xlu0
        %v957 = vpop.trf.xlu0
        %v958 = vpop.trf.xlu0
        %v959 = vpop.trf.xlu0
        %v960 = vpop.trf.xlu0
        %v961 = vpop.trf.xlu0
        %962 = vxpose.xlu0.b32.start [1/16] %v779, 128
        %963 = vxpose.xlu0.b32.cont [2/16] 0.0, 128
        %964 = vxpose.xlu0.b32.cont [3/16] 0.0, 128
        %965 = vxpose.xlu0.b32.cont [4/16] 0.0, 128
        %966 = vxpose.xlu0.b32.cont [5/16] 0.0, 128
        %967 = vxpose.xlu0.b32.cont [6/16] 0.0, 128
        %968 = vxpose.xlu0.b32.cont [7/16] 0.0, 128
        %969 = vxpose.xlu0.b32.cont [8/16] 0.0, 128
        %970 = vxpose.xlu0.b32.cont [9/16] 0.0, 128
        %971 = vxpose.xlu0.b32.cont [10/16] 0.0, 128
        %972 = vxpose.xlu0.b32.cont [11/16] 0.0, 128
        %973 = vxpose.xlu0.b32.cont [12/16] 0.0, 128
        %974 = vxpose.xlu0.b32.cont [13/16] 0.0, 128
        %975 = vxpose.xlu0.b32.cont [14/16] 0.0, 128
        %976 = vxpose.xlu0.b32.cont [15/16] 0.0, 128
        %977 = vxpose.xlu0.b32.end [16/16] 0.0, 128
        %v978 = vpop.trf.xlu0
        %v979 = vpop.trf.xlu0
        %v980 = vpop.trf.xlu0
        %v981 = vpop.trf.xlu0
        %v982 = vpop.trf.xlu0
        %v983 = vpop.trf.xlu0
        %v984 = vpop.trf.xlu0
        %v985 = vpop.trf.xlu0
        %v986 = vpop.trf.xlu0
        %v987 = vpop.trf.xlu0
        %v988 = vpop.trf.xlu0
        %v989 = vpop.trf.xlu0
        %v990 = vpop.trf.xlu0
        %v991 = vpop.trf.xlu0
        %v992 = vpop.trf.xlu0
        %v993 = vpop.trf.xlu0
        %994 = vxpose.xlu0.b32.start [1/16] %v781, 128
        %995 = vxpose.xlu0.b32.cont [2/16] 0.0, 128
        %996 = vxpose.xlu0.b32.cont [3/16] 0.0, 128
        %997 = vxpose.xlu0.b32.cont [4/16] 0.0, 128
        %998 = vxpose.xlu0.b32.cont [5/16] 0.0, 128
        %999 = vxpose.xlu0.b32.cont [6/16] 0.0, 128
        %1000 = vxpose.xlu0.b32.cont [7/16] 0.0, 128
        %1001 = vxpose.xlu0.b32.cont [8/16] 0.0, 128
        %1002 = vxpose.xlu0.b32.cont [9/16] 0.0, 128
        %1003 = vxpose.xlu0.b32.cont [10/16] 0.0, 128
        %1004 = vxpose.xlu0.b32.cont [11/16] 0.0, 128
        %1005 = vxpose.xlu0.b32.cont [12/16] 0.0, 128
        %1006 = vxpose.xlu0.b32.cont [13/16] 0.0, 128
        %1007 = vxpose.xlu0.b32.cont [14/16] 0.0, 128
        %1008 = vxpose.xlu0.b32.cont [15/16] 0.0, 128
        %1009 = vxpose.xlu0.b32.end [16/16] 0.0, 128
        %v1010 = vpop.trf.xlu0
        %v1011 = vpop.trf.xlu0
        %v1012 = vpop.trf.xlu0
        %v1013 = vpop.trf.xlu0
        %v1014 = vpop.trf.xlu0
        %v1015 = vpop.trf.xlu0
        %v1016 = vpop.trf.xlu0
        %v1017 = vpop.trf.xlu0
        %v1018 = vpop.trf.xlu0
        %v1019 = vpop.trf.xlu0
        %v1020 = vpop.trf.xlu0
        %v1021 = vpop.trf.xlu0
        %v1022 = vpop.trf.xlu0
        %v1023 = vpop.trf.xlu0
        %v1024 = vpop.trf.xlu0
        %v1025 = vpop.trf.xlu0
        %1026 = vxpose.xlu0.b32.start [1/16] %v783, 128
        %1027 = vxpose.xlu0.b32.cont [2/16] 0.0, 128
        %1028 = vxpose.xlu0.b32.cont [3/16] 0.0, 128
        %1029 = vxpose.xlu0.b32.cont [4/16] 0.0, 128
        %1030 = vxpose.xlu0.b32.cont [5/16] 0.0, 128
        %1031 = vxpose.xlu0.b32.cont [6/16] 0.0, 128
        %1032 = vxpose.xlu0.b32.cont [7/16] 0.0, 128
        %1033 = vxpose.xlu0.b32.cont [8/16] 0.0, 128
        %1034 = vxpose.xlu0.b32.cont [9/16] 0.0, 128
        %1035 = vxpose.xlu0.b32.cont [10/16] 0.0, 128
        %1036 = vxpose.xlu0.b32.cont [11/16] 0.0, 128
        %1037 = vxpose.xlu0.b32.cont [12/16] 0.0, 128
        %1038 = vxpose.xlu0.b32.cont [13/16] 0.0, 128
        %1039 = vxpose.xlu0.b32.cont [14/16] 0.0, 128
        %1040 = vxpose.xlu0.b32.cont [15/16] 0.0, 128
        %1041 = vxpose.xlu0.b32.end [16/16] 0.0, 128
        %v1042 = vpop.trf.xlu0
        %v1043 = vpop.trf.xlu0
        %v1044 = vpop.trf.xlu0
        %v1045 = vpop.trf.xlu0
        %v1046 = vpop.trf.xlu0
        %v1047 = vpop.trf.xlu0
        %v1048 = vpop.trf.xlu0
        %v1049 = vpop.trf.xlu0
        %v1050 = vpop.trf.xlu0
        %v1051 = vpop.trf.xlu0
        %v1052 = vpop.trf.xlu0
        %v1053 = vpop.trf.xlu0
        %v1054 = vpop.trf.xlu0
        %v1055 = vpop.trf.xlu0
        %v1056 = vpop.trf.xlu0
        %v1057 = vpop.trf.xlu0
        %1058 = vxpose.xlu0.b32.start [1/16] %v785, 128
        %1059 = vxpose.xlu0.b32.cont [2/16] 0.0, 128
        %1060 = vxpose.xlu0.b32.cont [3/16] 0.0, 128
        %1061 = vxpose.xlu0.b32.cont [4/16] 0.0, 128
        %1062 = vxpose.xlu0.b32.cont [5/16] 0.0, 128
        %1063 = vxpose.xlu0.b32.cont [6/16] 0.0, 128
        %1064 = vxpose.xlu0.b32.cont [7/16] 0.0, 128
        %1065 = vxpose.xlu0.b32.cont [8/16] 0.0, 128
        %1066 = vxpose.xlu0.b32.cont [9/16] 0.0, 128
        %1067 = vxpose.xlu0.b32.cont [10/16] 0.0, 128
        %1068 = vxpose.xlu0.b32.cont [11/16] 0.0, 128
        %1069 = vxpose.xlu0.b32.cont [12/16] 0.0, 128
        %1070 = vxpose.xlu0.b32.cont [13/16] 0.0, 128
        %1071 = vxpose.xlu0.b32.cont [14/16] 0.0, 128
        %1072 = vxpose.xlu0.b32.cont [15/16] 0.0, 128
        %1073 = vxpose.xlu0.b32.end [16/16] 0.0, 128
        %v1074 = vpop.trf.xlu0
        %v1075 = vpop.trf.xlu0
        %v1076 = vpop.trf.xlu0
        %v1077 = vpop.trf.xlu0
        %v1078 = vpop.trf.xlu0
        %v1079 = vpop.trf.xlu0
        %v1080 = vpop.trf.xlu0
        %v1081 = vpop.trf.xlu0
        %v1082 = vpop.trf.xlu0
        %v1083 = vpop.trf.xlu0
        %v1084 = vpop.trf.xlu0
        %v1085 = vpop.trf.xlu0
        %v1086 = vpop.trf.xlu0
        %v1087 = vpop.trf.xlu0
        %v1088 = vpop.trf.xlu0
        %v1089 = vpop.trf.xlu0
        %1090 = vxpose.xlu0.b32.start [1/16] %v787, 128
        %1091 = vxpose.xlu0.b32.cont [2/16] 0.0, 128
        %1092 = vxpose.xlu0.b32.cont [3/16] 0.0, 128
        %1093 = vxpose.xlu0.b32.cont [4/16] 0.0, 128
        %1094 = vxpose.xlu0.b32.cont [5/16] 0.0, 128
        %1095 = vxpose.xlu0.b32.cont [6/16] 0.0, 128
        %1096 = vxpose.xlu0.b32.cont [7/16] 0.0, 128
        %1097 = vxpose.xlu0.b32.cont [8/16] 0.0, 128
        %1098 = vxpose.xlu0.b32.cont [9/16] 0.0, 128
        %1099 = vxpose.xlu0.b32.cont [10/16] 0.0, 128
        %1100 = vxpose.xlu0.b32.cont [11/16] 0.0, 128
        %1101 = vxpose.xlu0.b32.cont [12/16] 0.0, 128
        %1102 = vxpose.xlu0.b32.cont [13/16] 0.0, 128
        %1103 = vxpose.xlu0.b32.cont [14/16] 0.0, 128
        %1104 = vxpose.xlu0.b32.cont [15/16] 0.0, 128
        %1105 = vxpose.xlu0.b32.end [16/16] 0.0, 128
        %v1106 = vpop.trf.xlu0
        %v1107 = vpop.trf.xlu0
        %v1108 = vpop.trf.xlu0
        %v1109 = vpop.trf.xlu0
        %v1110 = vpop.trf.xlu0
        %v1111 = vpop.trf.xlu0
        %v1112 = vpop.trf.xlu0
        %v1113 = vpop.trf.xlu0
        %v1114 = vpop.trf.xlu0
        %v1115 = vpop.trf.xlu0
        %v1116 = vpop.trf.xlu0
        %v1117 = vpop.trf.xlu0
        %v1118 = vpop.trf.xlu0
        %v1119 = vpop.trf.xlu0
        %v1120 = vpop.trf.xlu0
        %v1121 = vpop.trf.xlu0
        %1122 = vxpose.xlu0.b32.start [1/16] %v789, 128
        %1123 = vxpose.xlu0.b32.cont [2/16] 0.0, 128
        %1124 = vxpose.xlu0.b32.cont [3/16] 0.0, 128
        %1125 = vxpose.xlu0.b32.cont [4/16] 0.0, 128
        %1126 = vxpose.xlu0.b32.cont [5/16] 0.0, 128
        %1127 = vxpose.xlu0.b32.cont [6/16] 0.0, 128
        %1128 = vxpose.xlu0.b32.cont [7/16] 0.0, 128
        %1129 = vxpose.xlu0.b32.cont [8/16] 0.0, 128
        %1130 = vxpose.xlu0.b32.cont [9/16] 0.0, 128
        %1131 = vxpose.xlu0.b32.cont [10/16] 0.0, 128
        %1132 = vxpose.xlu0.b32.cont [11/16] 0.0, 128
        %1133 = vxpose.xlu0.b32.cont [12/16] 0.0, 128
        %1134 = vxpose.xlu0.b32.cont [13/16] 0.0, 128
        %1135 = vxpose.xlu0.b32.cont [14/16] 0.0, 128
        %1136 = vxpose.xlu0.b32.cont [15/16] 0.0, 128
        %1137 = vxpose.xlu0.b32.end [16/16] 0.0, 128
        %v1138 = vpop.trf.xlu0
        %v1139 = vpop.trf.xlu0
        %v1140 = vpop.trf.xlu0
        %v1141 = vpop.trf.xlu0
        %v1142 = vpop.trf.xlu0
        %v1143 = vpop.trf.xlu0
        %v1144 = vpop.trf.xlu0
        %v1145 = vpop.trf.xlu0
        %v1146 = vpop.trf.xlu0
        %v1147 = vpop.trf.xlu0
        %v1148 = vpop.trf.xlu0
        %v1149 = vpop.trf.xlu0
        %v1150 = vpop.trf.xlu0
        %v1151 = vpop.trf.xlu0
        %v1152 = vpop.trf.xlu0
        %v1153 = vpop.trf.xlu0
        %1154 = vxpose.xlu0.b32.start [1/16] %v791, 128
        %1155 = vxpose.xlu0.b32.cont [2/16] 0.0, 128
        %1156 = vxpose.xlu0.b32.cont [3/16] 0.0, 128
        %1157 = vxpose.xlu0.b32.cont [4/16] 0.0, 128
        %1158 = vxpose.xlu0.b32.cont [5/16] 0.0, 128
        %1159 = vxpose.xlu0.b32.cont [6/16] 0.0, 128
        %1160 = vxpose.xlu0.b32.cont [7/16] 0.0, 128
        %1161 = vxpose.xlu0.b32.cont [8/16] 0.0, 128
        %1162 = vxpose.xlu0.b32.cont [9/16] 0.0, 128
        %1163 = vxpose.xlu0.b32.cont [10/16] 0.0, 128
        %1164 = vxpose.xlu0.b32.cont [11/16] 0.0, 128
        %1165 = vxpose.xlu0.b32.cont [12/16] 0.0, 128
        %1166 = vxpose.xlu0.b32.cont [13/16] 0.0, 128
        %1167 = vxpose.xlu0.b32.cont [14/16] 0.0, 128
        %1168 = vxpose.xlu0.b32.cont [15/16] 0.0, 128
        %1169 = vxpose.xlu0.b32.end [16/16] 0.0, 128
        %v1170 = vpop.trf.xlu0
        %v1171 = vpop.trf.xlu0
        %v1172 = vpop.trf.xlu0
        %v1173 = vpop.trf.xlu0
        %v1174 = vpop.trf.xlu0
        %v1175 = vpop.trf.xlu0
        %v1176 = vpop.trf.xlu0
        %v1177 = vpop.trf.xlu0
        %v1178 = vpop.trf.xlu0
        %v1179 = vpop.trf.xlu0
        %v1180 = vpop.trf.xlu0
        %v1181 = vpop.trf.xlu0
        %v1182 = vpop.trf.xlu0
        %v1183 = vpop.trf.xlu0
        %v1184 = vpop.trf.xlu0
        %v1185 = vpop.trf.xlu0
        %1186 = vxpose.xlu0.b32.start [1/16] %v793, 128
        %1187 = vxpose.xlu0.b32.cont [2/16] 0.0, 128
        %1188 = vxpose.xlu0.b32.cont [3/16] 0.0, 128
        %1189 = vxpose.xlu0.b32.cont [4/16] 0.0, 128
        %1190 = vxpose.xlu0.b32.cont [5/16] 0.0, 128
        %1191 = vxpose.xlu0.b32.cont [6/16] 0.0, 128
        %1192 = vxpose.xlu0.b32.cont [7/16] 0.0, 128
        %1193 = vxpose.xlu0.b32.cont [8/16] 0.0, 128
        %1194 = vxpose.xlu0.b32.cont [9/16] 0.0, 128
        %1195 = vxpose.xlu0.b32.cont [10/16] 0.0, 128
        %1196 = vxpose.xlu0.b32.cont [11/16] 0.0, 128
        %1197 = vxpose.xlu0.b32.cont [12/16] 0.0, 128
        %1198 = vxpose.xlu0.b32.cont [13/16] 0.0, 128
        %1199 = vxpose.xlu0.b32.cont [14/16] 0.0, 128
        %1200 = vxpose.xlu0.b32.cont [15/16] 0.0, 128
        %1201 = vxpose.xlu0.b32.end [16/16] 0.0, 128
        %v1202 = vpop.trf.xlu0
        %v1203 = vpop.trf.xlu0
        %v1204 = vpop.trf.xlu0
        %v1205 = vpop.trf.xlu0
        %v1206 = vpop.trf.xlu0
        %v1207 = vpop.trf.xlu0
        %v1208 = vpop.trf.xlu0
        %v1209 = vpop.trf.xlu0
        %v1210 = vpop.trf.xlu0
        %v1211 = vpop.trf.xlu0
        %v1212 = vpop.trf.xlu0
        %v1213 = vpop.trf.xlu0
        %v1214 = vpop.trf.xlu0
        %v1215 = vpop.trf.xlu0
        %v1216 = vpop.trf.xlu0
        %v1217 = vpop.trf.xlu0
        %1218 = vxpose.xlu0.b32.start [1/16] %v795, 128
        %1219 = vxpose.xlu0.b32.cont [2/16] 0.0, 128
        %1220 = vxpose.xlu0.b32.cont [3/16] 0.0, 128
        %1221 = vxpose.xlu0.b32.cont [4/16] 0.0, 128
        %1222 = vxpose.xlu0.b32.cont [5/16] 0.0, 128
        %1223 = vxpose.xlu0.b32.cont [6/16] 0.0, 128
        %1224 = vxpose.xlu0.b32.cont [7/16] 0.0, 128
        %1225 = vxpose.xlu0.b32.cont [8/16] 0.0, 128
        %1226 = vxpose.xlu0.b32.cont [9/16] 0.0, 128
        %1227 = vxpose.xlu0.b32.cont [10/16] 0.0, 128
        %1228 = vxpose.xlu0.b32.cont [11/16] 0.0, 128
        %1229 = vxpose.xlu0.b32.cont [12/16] 0.0, 128
        %1230 = vxpose.xlu0.b32.cont [13/16] 0.0, 128
        %1231 = vxpose.xlu0.b32.cont [14/16] 0.0, 128
        %1232 = vxpose.xlu0.b32.cont [15/16] 0.0, 128
        %1233 = vxpose.xlu0.b32.end [16/16] 0.0, 128
        %v1234 = vpop.trf.xlu0
        %v1235 = vpop.trf.xlu0
        %v1236 = vpop.trf.xlu0
        %v1237 = vpop.trf.xlu0
        %v1238 = vpop.trf.xlu0
        %v1239 = vpop.trf.xlu0
        %v1240 = vpop.trf.xlu0
        %v1241 = vpop.trf.xlu0
        %v1242 = vpop.trf.xlu0
        %v1243 = vpop.trf.xlu0
        %v1244 = vpop.trf.xlu0
        %v1245 = vpop.trf.xlu0
        %v1246 = vpop.trf.xlu0
        %v1247 = vpop.trf.xlu0
        %v1248 = vpop.trf.xlu0
        %v1249 = vpop.trf.xlu0
        %1250 = vxpose.xlu0.b32.start [1/16] %v797, 128
        %1251 = vxpose.xlu0.b32.cont [2/16] 0.0, 128
        %1252 = vxpose.xlu0.b32.cont [3/16] 0.0, 128
        %1253 = vxpose.xlu0.b32.cont [4/16] 0.0, 128
        %1254 = vxpose.xlu0.b32.cont [5/16] 0.0, 128
        %1255 = vxpose.xlu0.b32.cont [6/16] 0.0, 128
        %1256 = vxpose.xlu0.b32.cont [7/16] 0.0, 128
        %1257 = vxpose.xlu0.b32.cont [8/16] 0.0, 128
        %1258 = vxpose.xlu0.b32.cont [9/16] 0.0, 128
        %1259 = vxpose.xlu0.b32.cont [10/16] 0.0, 128
        %1260 = vxpose.xlu0.b32.cont [11/16] 0.0, 128
        %1261 = vxpose.xlu0.b32.cont [12/16] 0.0, 128
        %1262 = vxpose.xlu0.b32.cont [13/16] 0.0, 128
        %1263 = vxpose.xlu0.b32.cont [14/16] 0.0, 128
        %1264 = vxpose.xlu0.b32.cont [15/16] 0.0, 128
        %1265 = vxpose.xlu0.b32.end [16/16] 0.0, 128
        %v1266 = vpop.trf.xlu0
        %v1267 = vpop.trf.xlu0
        %v1268 = vpop.trf.xlu0
        %v1269 = vpop.trf.xlu0
        %v1270 = vpop.trf.xlu0
        %v1271 = vpop.trf.xlu0
        %v1272 = vpop.trf.xlu0
        %v1273 = vpop.trf.xlu0
        %v1274 = vpop.trf.xlu0
        %v1275 = vpop.trf.xlu0
        %v1276 = vpop.trf.xlu0
        %v1277 = vpop.trf.xlu0
        %v1278 = vpop.trf.xlu0
        %v1279 = vpop.trf.xlu0
        %v1280 = vpop.trf.xlu0
        %v1281 = vpop.trf.xlu0
        %1282 = vxpose.xlu0.b32.start [1/16] %v799, 128
        %1283 = vxpose.xlu0.b32.cont [2/16] 0.0, 128
        %1284 = vxpose.xlu0.b32.cont [3/16] 0.0, 128
        %1285 = vxpose.xlu0.b32.cont [4/16] 0.0, 128
        %1286 = vxpose.xlu0.b32.cont [5/16] 0.0, 128
        %1287 = vxpose.xlu0.b32.cont [6/16] 0.0, 128
        %1288 = vxpose.xlu0.b32.cont [7/16] 0.0, 128
        %1289 = vxpose.xlu0.b32.cont [8/16] 0.0, 128
        %1290 = vxpose.xlu0.b32.cont [9/16] 0.0, 128
        %1291 = vxpose.xlu0.b32.cont [10/16] 0.0, 128
        %1292 = vxpose.xlu0.b32.cont [11/16] 0.0, 128
        %1293 = vxpose.xlu0.b32.cont [12/16] 0.0, 128
        %1294 = vxpose.xlu0.b32.cont [13/16] 0.0, 128
        %1295 = vxpose.xlu0.b32.cont [14/16] 0.0, 128
        %1296 = vxpose.xlu0.b32.cont [15/16] 0.0, 128
        %1297 = vxpose.xlu0.b32.end [16/16] 0.0, 128
        %v1298 = vpop.trf.xlu0
        %v1299 = vpop.trf.xlu0
        %v1300 = vpop.trf.xlu0
        %v1301 = vpop.trf.xlu0
        %v1302 = vpop.trf.xlu0
        %v1303 = vpop.trf.xlu0
        %v1304 = vpop.trf.xlu0
        %v1305 = vpop.trf.xlu0
        %v1306 = vpop.trf.xlu0
        %v1307 = vpop.trf.xlu0
        %v1308 = vpop.trf.xlu0
        %v1309 = vpop.trf.xlu0
        %v1310 = vpop.trf.xlu0
        %v1311 = vpop.trf.xlu0
        %v1312 = vpop.trf.xlu0
        %v1313 = vpop.trf.xlu0
        %1314 = vxpose.xlu0.b32.start [1/16] %v801, 128
        %1315 = vxpose.xlu0.b32.cont [2/16] 0.0, 128
        %1316 = vxpose.xlu0.b32.cont [3/16] 0.0, 128
        %1317 = vxpose.xlu0.b32.cont [4/16] 0.0, 128
        %1318 = vxpose.xlu0.b32.cont [5/16] 0.0, 128
        %1319 = vxpose.xlu0.b32.cont [6/16] 0.0, 128
        %1320 = vxpose.xlu0.b32.cont [7/16] 0.0, 128
        %1321 = vxpose.xlu0.b32.cont [8/16] 0.0, 128
        %1322 = vxpose.xlu0.b32.cont [9/16] 0.0, 128
        %1323 = vxpose.xlu0.b32.cont [10/16] 0.0, 128
        %1324 = vxpose.xlu0.b32.cont [11/16] 0.0, 128
        %1325 = vxpose.xlu0.b32.cont [12/16] 0.0, 128
        %1326 = vxpose.xlu0.b32.cont [13/16] 0.0, 128
        %1327 = vxpose.xlu0.b32.cont [14/16] 0.0, 128
        %1328 = vxpose.xlu0.b32.cont [15/16] 0.0, 128
        %1329 = vxpose.xlu0.b32.end [16/16] 0.0, 128
        %v1330 = vpop.trf.xlu0
        %v1331 = vpop.trf.xlu0
        %v1332 = vpop.trf.xlu0
        %v1333 = vpop.trf.xlu0
        %v1334 = vpop.trf.xlu0
        %v1335 = vpop.trf.xlu0
        %v1336 = vpop.trf.xlu0
        %v1337 = vpop.trf.xlu0
        %v1338 = vpop.trf.xlu0
        %v1339 = vpop.trf.xlu0
        %v1340 = vpop.trf.xlu0
        %v1341 = vpop.trf.xlu0
        %v1342 = vpop.trf.xlu0
        %v1343 = vpop.trf.xlu0
        %v1344 = vpop.trf.xlu0
        %v1345 = vpop.trf.xlu0
        %1346 = vxpose.xlu0.b32.start [1/16] %v803, 128
        %1347 = vxpose.xlu0.b32.cont [2/16] 0.0, 128
        %1348 = vxpose.xlu0.b32.cont [3/16] 0.0, 128
        %1349 = vxpose.xlu0.b32.cont [4/16] 0.0, 128
        %1350 = vxpose.xlu0.b32.cont [5/16] 0.0, 128
        %1351 = vxpose.xlu0.b32.cont [6/16] 0.0, 128
        %1352 = vxpose.xlu0.b32.cont [7/16] 0.0, 128
        %1353 = vxpose.xlu0.b32.cont [8/16] 0.0, 128
        %1354 = vxpose.xlu0.b32.cont [9/16] 0.0, 128
        %1355 = vxpose.xlu0.b32.cont [10/16] 0.0, 128
        %1356 = vxpose.xlu0.b32.cont [11/16] 0.0, 128
        %1357 = vxpose.xlu0.b32.cont [12/16] 0.0, 128
        %1358 = vxpose.xlu0.b32.cont [13/16] 0.0, 128
        %1359 = vxpose.xlu0.b32.cont [14/16] 0.0, 128
        %1360 = vxpose.xlu0.b32.cont [15/16] 0.0, 128
        %1361 = vxpose.xlu0.b32.end [16/16] 0.0, 128
        %v1362 = vpop.trf.xlu0
        %v1363 = vpop.trf.xlu0
        %v1364 = vpop.trf.xlu0
        %v1365 = vpop.trf.xlu0
        %v1366 = vpop.trf.xlu0
        %v1367 = vpop.trf.xlu0
        %v1368 = vpop.trf.xlu0
        %v1369 = vpop.trf.xlu0
        %v1370 = vpop.trf.xlu0
        %v1371 = vpop.trf.xlu0
        %v1372 = vpop.trf.xlu0
        %v1373 = vpop.trf.xlu0
        %v1374 = vpop.trf.xlu0
        %v1375 = vpop.trf.xlu0
        %v1376 = vpop.trf.xlu0
        %v1377 = vpop.trf.xlu0
        %1378 = vxpose.xlu0.b32.start [1/16] %v805, 128
        %1379 = vxpose.xlu0.b32.cont [2/16] 0.0, 128
        %1380 = vxpose.xlu0.b32.cont [3/16] 0.0, 128
        %1381 = vxpose.xlu0.b32.cont [4/16] 0.0, 128
        %1382 = vxpose.xlu0.b32.cont [5/16] 0.0, 128
        %1383 = vxpose.xlu0.b32.cont [6/16] 0.0, 128
        %1384 = vxpose.xlu0.b32.cont [7/16] 0.0, 128
        %1385 = vxpose.xlu0.b32.cont [8/16] 0.0, 128
        %1386 = vxpose.xlu0.b32.cont [9/16] 0.0, 128
        %1387 = vxpose.xlu0.b32.cont [10/16] 0.0, 128
        %1388 = vxpose.xlu0.b32.cont [11/16] 0.0, 128
        %1389 = vxpose.xlu0.b32.cont [12/16] 0.0, 128
        %1390 = vxpose.xlu0.b32.cont [13/16] 0.0, 128
        %1391 = vxpose.xlu0.b32.cont [14/16] 0.0, 128
        %1392 = vxpose.xlu0.b32.cont [15/16] 0.0, 128
        %1393 = vxpose.xlu0.b32.end [16/16] 0.0, 128
        %v1394 = vpop.trf.xlu0
        %v1395 = vpop.trf.xlu0
        %v1396 = vpop.trf.xlu0
        %v1397 = vpop.trf.xlu0
        %v1398 = vpop.trf.xlu0
        %v1399 = vpop.trf.xlu0
        %v1400 = vpop.trf.xlu0
        %v1401 = vpop.trf.xlu0
        %v1402 = vpop.trf.xlu0
        %v1403 = vpop.trf.xlu0
        %v1404 = vpop.trf.xlu0
        %v1405 = vpop.trf.xlu0
        %v1406 = vpop.trf.xlu0
        %v1407 = vpop.trf.xlu0
        %v1408 = vpop.trf.xlu0
        %v1409 = vpop.trf.xlu0
        %1410 = vxpose.xlu0.b32.start [1/16] %v807, 128
        %1411 = vxpose.xlu0.b32.cont [2/16] 0.0, 128
        %1412 = vxpose.xlu0.b32.cont [3/16] 0.0, 128
        %1413 = vxpose.xlu0.b32.cont [4/16] 0.0, 128
        %1414 = vxpose.xlu0.b32.cont [5/16] 0.0, 128
        %1415 = vxpose.xlu0.b32.cont [6/16] 0.0, 128
        %1416 = vxpose.xlu0.b32.cont [7/16] 0.0, 128
        %1417 = vxpose.xlu0.b32.cont [8/16] 0.0, 128
        %1418 = vxpose.xlu0.b32.cont [9/16] 0.0, 128
        %1419 = vxpose.xlu0.b32.cont [10/16] 0.0, 128
        %1420 = vxpose.xlu0.b32.cont [11/16] 0.0, 128
        %1421 = vxpose.xlu0.b32.cont [12/16] 0.0, 128
        %1422 = vxpose.xlu0.b32.cont [13/16] 0.0, 128
        %1423 = vxpose.xlu0.b32.cont [14/16] 0.0, 128
        %1424 = vxpose.xlu0.b32.cont [15/16] 0.0, 128
        %1425 = vxpose.xlu0.b32.end [16/16] 0.0, 128
        %v1426 = vpop.trf.xlu0
        %v1427 = vpop.trf.xlu0
        %v1428 = vpop.trf.xlu0
        %v1429 = vpop.trf.xlu0
        %v1430 = vpop.trf.xlu0
        %v1431 = vpop.trf.xlu0
        %v1432 = vpop.trf.xlu0
        %v1433 = vpop.trf.xlu0
        %v1434 = vpop.trf.xlu0
        %v1435 = vpop.trf.xlu0
        %v1436 = vpop.trf.xlu0
        %v1437 = vpop.trf.xlu0
        %v1438 = vpop.trf.xlu0
        %v1439 = vpop.trf.xlu0
        %v1440 = vpop.trf.xlu0
        %v1441 = vpop.trf.xlu0
        %1442 = vxpose.xlu0.b32.start [1/16] %v809, 128
        %1443 = vxpose.xlu0.b32.cont [2/16] 0.0, 128
        %1444 = vxpose.xlu0.b32.cont [3/16] 0.0, 128
        %1445 = vxpose.xlu0.b32.cont [4/16] 0.0, 128
        %1446 = vxpose.xlu0.b32.cont [5/16] 0.0, 128
        %1447 = vxpose.xlu0.b32.cont [6/16] 0.0, 128
        %1448 = vxpose.xlu0.b32.cont [7/16] 0.0, 128
        %1449 = vxpose.xlu0.b32.cont [8/16] 0.0, 128
        %1450 = vxpose.xlu0.b32.cont [9/16] 0.0, 128
        %1451 = vxpose.xlu0.b32.cont [10/16] 0.0, 128
        %1452 = vxpose.xlu0.b32.cont [11/16] 0.0, 128
        %1453 = vxpose.xlu0.b32.cont [12/16] 0.0, 128
        %1454 = vxpose.xlu0.b32.cont [13/16] 0.0, 128
        %1455 = vxpose.xlu0.b32.cont [14/16] 0.0, 128
        %1456 = vxpose.xlu0.b32.cont [15/16] 0.0, 128
        %1457 = vxpose.xlu0.b32.end [16/16] 0.0, 128
        %v1458 = vpop.trf.xlu0
        %v1459 = vpop.trf.xlu0
        %v1460 = vpop.trf.xlu0
        %v1461 = vpop.trf.xlu0
        %v1462 = vpop.trf.xlu0
        %v1463 = vpop.trf.xlu0
        %v1464 = vpop.trf.xlu0
        %v1465 = vpop.trf.xlu0
        %v1466 = vpop.trf.xlu0
        %v1467 = vpop.trf.xlu0
        %v1468 = vpop.trf.xlu0
        %v1469 = vpop.trf.xlu0
        %v1470 = vpop.trf.xlu0
        %v1471 = vpop.trf.xlu0
        %v1472 = vpop.trf.xlu0
        %v1473 = vpop.trf.xlu0
        %1474 = vxpose.xlu0.b32.start [1/16] %v811, 128
        %1475 = vxpose.xlu0.b32.cont [2/16] 0.0, 128
        %1476 = vxpose.xlu0.b32.cont [3/16] 0.0, 128
        %1477 = vxpose.xlu0.b32.cont [4/16] 0.0, 128
        %1478 = vxpose.xlu0.b32.cont [5/16] 0.0, 128
        %1479 = vxpose.xlu0.b32.cont [6/16] 0.0, 128
        %1480 = vxpose.xlu0.b32.cont [7/16] 0.0, 128
        %1481 = vxpose.xlu0.b32.cont [8/16] 0.0, 128
        %1482 = vxpose.xlu0.b32.cont [9/16] 0.0, 128
        %1483 = vxpose.xlu0.b32.cont [10/16] 0.0, 128
        %1484 = vxpose.xlu0.b32.cont [11/16] 0.0, 128
        %1485 = vxpose.xlu0.b32.cont [12/16] 0.0, 128
        %1486 = vxpose.xlu0.b32.cont [13/16] 0.0, 128
        %1487 = vxpose.xlu0.b32.cont [14/16] 0.0, 128
        %1488 = vxpose.xlu0.b32.cont [15/16] 0.0, 128
        %1489 = vxpose.xlu0.b32.end [16/16] 0.0, 128
        %v1490 = vpop.trf.xlu0
        %v1491 = vpop.trf.xlu0
        %v1492 = vpop.trf.xlu0
        %v1493 = vpop.trf.xlu0
        %v1494 = vpop.trf.xlu0
        %v1495 = vpop.trf.xlu0
        %v1496 = vpop.trf.xlu0
        %v1497 = vpop.trf.xlu0
        %v1498 = vpop.trf.xlu0
        %v1499 = vpop.trf.xlu0
        %v1500 = vpop.trf.xlu0
        %v1501 = vpop.trf.xlu0
        %v1502 = vpop.trf.xlu0
        %v1503 = vpop.trf.xlu0
        %v1504 = vpop.trf.xlu0
        %v1505 = vpop.trf.xlu0
        %1506 = vxpose.xlu0.b32.start [1/16] %v813, 128
        %1507 = vxpose.xlu0.b32.cont [2/16] 0.0, 128
        %1508 = vxpose.xlu0.b32.cont [3/16] 0.0, 128
        %1509 = vxpose.xlu0.b32.cont [4/16] 0.0, 128
        %1510 = vxpose.xlu0.b32.cont [5/16] 0.0, 128
        %1511 = vxpose.xlu0.b32.cont [6/16] 0.0, 128
        %1512 = vxpose.xlu0.b32.cont [7/16] 0.0, 128
        %1513 = vxpose.xlu0.b32.cont [8/16] 0.0, 128
        %1514 = vxpose.xlu0.b32.cont [9/16] 0.0, 128
        %1515 = vxpose.xlu0.b32.cont [10/16] 0.0, 128
        %1516 = vxpose.xlu0.b32.cont [11/16] 0.0, 128
        %1517 = vxpose.xlu0.b32.cont [12/16] 0.0, 128
        %1518 = vxpose.xlu0.b32.cont [13/16] 0.0, 128
        %1519 = vxpose.xlu0.b32.cont [14/16] 0.0, 128
        %1520 = vxpose.xlu0.b32.cont [15/16] 0.0, 128
        %1521 = vxpose.xlu0.b32.end [16/16] 0.0, 128
        %v1522 = vpop.trf.xlu0
        %v1523 = vpop.trf.xlu0
        %v1524 = vpop.trf.xlu0
        %v1525 = vpop.trf.xlu0
        %v1526 = vpop.trf.xlu0
        %v1527 = vpop.trf.xlu0
        %v1528 = vpop.trf.xlu0
        %v1529 = vpop.trf.xlu0
        %v1530 = vpop.trf.xlu0
        %v1531 = vpop.trf.xlu0
        %v1532 = vpop.trf.xlu0
        %v1533 = vpop.trf.xlu0
        %v1534 = vpop.trf.xlu0
        %v1535 = vpop.trf.xlu0
        %v1536 = vpop.trf.xlu0
        %v1537 = vpop.trf.xlu0
        %1538 = vxpose.xlu0.b32.start [1/16] %v815, 128
        %1539 = vxpose.xlu0.b32.cont [2/16] 0.0, 128
        %1540 = vxpose.xlu0.b32.cont [3/16] 0.0, 128
        %1541 = vxpose.xlu0.b32.cont [4/16] 0.0, 128
        %1542 = vxpose.xlu0.b32.cont [5/16] 0.0, 128
        %1543 = vxpose.xlu0.b32.cont [6/16] 0.0, 128
        %1544 = vxpose.xlu0.b32.cont [7/16] 0.0, 128
        %1545 = vxpose.xlu0.b32.cont [8/16] 0.0, 128
        %1546 = vxpose.xlu0.b32.cont [9/16] 0.0, 128
        %1547 = vxpose.xlu0.b32.cont [10/16] 0.0, 128
        %1548 = vxpose.xlu0.b32.cont [11/16] 0.0, 128
        %1549 = vxpose.xlu0.b32.cont [12/16] 0.0, 128
        %1550 = vxpose.xlu0.b32.cont [13/16] 0.0, 128
        %1551 = vxpose.xlu0.b32.cont [14/16] 0.0, 128
        %1552 = vxpose.xlu0.b32.cont [15/16] 0.0, 128
        %1553 = vxpose.xlu0.b32.end [16/16] 0.0, 128
        %v1554 = vpop.trf.xlu0
        %v1555 = vpop.trf.xlu0
        %v1556 = vpop.trf.xlu0
        %v1557 = vpop.trf.xlu0
        %v1558 = vpop.trf.xlu0
        %v1559 = vpop.trf.xlu0
        %v1560 = vpop.trf.xlu0
        %v1561 = vpop.trf.xlu0
        %v1562 = vpop.trf.xlu0
        %v1563 = vpop.trf.xlu0
        %v1564 = vpop.trf.xlu0
        %v1565 = vpop.trf.xlu0
        %v1566 = vpop.trf.xlu0
        %v1567 = vpop.trf.xlu0
        %v1568 = vpop.trf.xlu0
        %v1569 = vpop.trf.xlu0
        %1570 = vxpose.xlu0.b32.start [1/16] %v817, 128
        %1571 = vxpose.xlu0.b32.cont [2/16] 0.0, 128
        %1572 = vxpose.xlu0.b32.cont [3/16] 0.0, 128
        %1573 = vxpose.xlu0.b32.cont [4/16] 0.0, 128
        %1574 = vxpose.xlu0.b32.cont [5/16] 0.0, 128
        %1575 = vxpose.xlu0.b32.cont [6/16] 0.0, 128
        %1576 = vxpose.xlu0.b32.cont [7/16] 0.0, 128
        %1577 = vxpose.xlu0.b32.cont [8/16] 0.0, 128
        %1578 = vxpose.xlu0.b32.cont [9/16] 0.0, 128
        %1579 = vxpose.xlu0.b32.cont [10/16] 0.0, 128
        %1580 = vxpose.xlu0.b32.cont [11/16] 0.0, 128
        %1581 = vxpose.xlu0.b32.cont [12/16] 0.0, 128
        %1582 = vxpose.xlu0.b32.cont [13/16] 0.0, 128
        %1583 = vxpose.xlu0.b32.cont [14/16] 0.0, 128
        %1584 = vxpose.xlu0.b32.cont [15/16] 0.0, 128
        %1585 = vxpose.xlu0.b32.end [16/16] 0.0, 128
        %v1586 = vpop.trf.xlu0
        %v1587 = vpop.trf.xlu0
        %v1588 = vpop.trf.xlu0
        %v1589 = vpop.trf.xlu0
        %v1590 = vpop.trf.xlu0
        %v1591 = vpop.trf.xlu0
        %v1592 = vpop.trf.xlu0
        %v1593 = vpop.trf.xlu0
        %v1594 = vpop.trf.xlu0
        %v1595 = vpop.trf.xlu0
        %v1596 = vpop.trf.xlu0
        %v1597 = vpop.trf.xlu0
        %v1598 = vpop.trf.xlu0
        %v1599 = vpop.trf.xlu0
        %v1600 = vpop.trf.xlu0
        %v1601 = vpop.trf.xlu0
        %1602 = vxpose.xlu0.b32.start [1/16] %v819, 128
        %1603 = vxpose.xlu0.b32.cont [2/16] 0.0, 128
        %1604 = vxpose.xlu0.b32.cont [3/16] 0.0, 128
        %1605 = vxpose.xlu0.b32.cont [4/16] 0.0, 128
        %1606 = vxpose.xlu0.b32.cont [5/16] 0.0, 128
        %1607 = vxpose.xlu0.b32.cont [6/16] 0.0, 128
        %1608 = vxpose.xlu0.b32.cont [7/16] 0.0, 128
        %1609 = vxpose.xlu0.b32.cont [8/16] 0.0, 128
        %1610 = vxpose.xlu0.b32.cont [9/16] 0.0, 128
        %1611 = vxpose.xlu0.b32.cont [10/16] 0.0, 128
        %1612 = vxpose.xlu0.b32.cont [11/16] 0.0, 128
        %1613 = vxpose.xlu0.b32.cont [12/16] 0.0, 128
        %1614 = vxpose.xlu0.b32.cont [13/16] 0.0, 128
        %1615 = vxpose.xlu0.b32.cont [14/16] 0.0, 128
        %1616 = vxpose.xlu0.b32.cont [15/16] 0.0, 128
        %1617 = vxpose.xlu0.b32.end [16/16] 0.0, 128
        %v1618 = vpop.trf.xlu0
        %v1619 = vpop.trf.xlu0
        %v1620 = vpop.trf.xlu0
        %v1621 = vpop.trf.xlu0
        %v1622 = vpop.trf.xlu0
        %v1623 = vpop.trf.xlu0
        %v1624 = vpop.trf.xlu0
        %v1625 = vpop.trf.xlu0
        %v1626 = vpop.trf.xlu0
        %v1627 = vpop.trf.xlu0
        %v1628 = vpop.trf.xlu0
        %v1629 = vpop.trf.xlu0
        %v1630 = vpop.trf.xlu0
        %v1631 = vpop.trf.xlu0
        %v1632 = vpop.trf.xlu0
        %v1633 = vpop.trf.xlu0
        %1634 = vxpose.xlu0.b32.start [1/16] %v821, 128
        %1635 = vxpose.xlu0.b32.cont [2/16] 0.0, 128
        %1636 = vxpose.xlu0.b32.cont [3/16] 0.0, 128
        %1637 = vxpose.xlu0.b32.cont [4/16] 0.0, 128
        %1638 = vxpose.xlu0.b32.cont [5/16] 0.0, 128
        %1639 = vxpose.xlu0.b32.cont [6/16] 0.0, 128
        %1640 = vxpose.xlu0.b32.cont [7/16] 0.0, 128
        %1641 = vxpose.xlu0.b32.cont [8/16] 0.0, 128
        %1642 = vxpose.xlu0.b32.cont [9/16] 0.0, 128
        %1643 = vxpose.xlu0.b32.cont [10/16] 0.0, 128
        %1644 = vxpose.xlu0.b32.cont [11/16] 0.0, 128
        %1645 = vxpose.xlu0.b32.cont [12/16] 0.0, 128
        %1646 = vxpose.xlu0.b32.cont [13/16] 0.0, 128
        %1647 = vxpose.xlu0.b32.cont [14/16] 0.0, 128
        %1648 = vxpose.xlu0.b32.cont [15/16] 0.0, 128
        %1649 = vxpose.xlu0.b32.end [16/16] 0.0, 128
        %v1650 = vpop.trf.xlu0
        %v1651 = vpop.trf.xlu0
        %v1652 = vpop.trf.xlu0
        %v1653 = vpop.trf.xlu0
        %v1654 = vpop.trf.xlu0
        %v1655 = vpop.trf.xlu0
        %v1656 = vpop.trf.xlu0
        %v1657 = vpop.trf.xlu0
        %v1658 = vpop.trf.xlu0
        %v1659 = vpop.trf.xlu0
        %v1660 = vpop.trf.xlu0
        %v1661 = vpop.trf.xlu0
        %v1662 = vpop.trf.xlu0
        %v1663 = vpop.trf.xlu0
        %v1664 = vpop.trf.xlu0
        %v1665 = vpop.trf.xlu0
        %1666 = vxpose.xlu0.b32.start [1/16] %v823, 128
        %1667 = vxpose.xlu0.b32.cont [2/16] 0.0, 128
        %1668 = vxpose.xlu0.b32.cont [3/16] 0.0, 128
        %1669 = vxpose.xlu0.b32.cont [4/16] 0.0, 128
        %1670 = vxpose.xlu0.b32.cont [5/16] 0.0, 128
        %1671 = vxpose.xlu0.b32.cont [6/16] 0.0, 128
        %1672 = vxpose.xlu0.b32.cont [7/16] 0.0, 128
        %1673 = vxpose.xlu0.b32.cont [8/16] 0.0, 128
        %1674 = vxpose.xlu0.b32.cont [9/16] 0.0, 128
        %1675 = vxpose.xlu0.b32.cont [10/16] 0.0, 128
        %1676 = vxpose.xlu0.b32.cont [11/16] 0.0, 128
        %1677 = vxpose.xlu0.b32.cont [12/16] 0.0, 128
        %1678 = vxpose.xlu0.b32.cont [13/16] 0.0, 128
        %1679 = vxpose.xlu0.b32.cont [14/16] 0.0, 128
        %1680 = vxpose.xlu0.b32.cont [15/16] 0.0, 128
        %1681 = vxpose.xlu0.b32.end [16/16] 0.0, 128
        %v1682 = vpop.trf.xlu0
        %v1683 = vpop.trf.xlu0
        %v1684 = vpop.trf.xlu0
        %v1685 = vpop.trf.xlu0
        %v1686 = vpop.trf.xlu0
        %v1687 = vpop.trf.xlu0
        %v1688 = vpop.trf.xlu0
        %v1689 = vpop.trf.xlu0
        %v1690 = vpop.trf.xlu0
        %v1691 = vpop.trf.xlu0
        %v1692 = vpop.trf.xlu0
        %v1693 = vpop.trf.xlu0
        %v1694 = vpop.trf.xlu0
        %v1695 = vpop.trf.xlu0
        %v1696 = vpop.trf.xlu0
        %v1697 = vpop.trf.xlu0
        %1698 = vxpose.xlu0.b32.start [1/16] %v825, 128
        %1699 = vxpose.xlu0.b32.cont [2/16] 0.0, 128
        %1700 = vxpose.xlu0.b32.cont [3/16] 0.0, 128
        %1701 = vxpose.xlu0.b32.cont [4/16] 0.0, 128
        %1702 = vxpose.xlu0.b32.cont [5/16] 0.0, 128
        %1703 = vxpose.xlu0.b32.cont [6/16] 0.0, 128
        %1704 = vxpose.xlu0.b32.cont [7/16] 0.0, 128
        %1705 = vxpose.xlu0.b32.cont [8/16] 0.0, 128
        %1706 = vxpose.xlu0.b32.cont [9/16] 0.0, 128
        %1707 = vxpose.xlu0.b32.cont [10/16] 0.0, 128
        %1708 = vxpose.xlu0.b32.cont [11/16] 0.0, 128
        %1709 = vxpose.xlu0.b32.cont [12/16] 0.0, 128
        %1710 = vxpose.xlu0.b32.cont [13/16] 0.0, 128
        %1711 = vxpose.xlu0.b32.cont [14/16] 0.0, 128
        %1712 = vxpose.xlu0.b32.cont [15/16] 0.0, 128
        %1713 = vxpose.xlu0.b32.end [16/16] 0.0, 128
        %v1714 = vpop.trf.xlu0
        %v1715 = vpop.trf.xlu0
        %v1716 = vpop.trf.xlu0
        %v1717 = vpop.trf.xlu0
        %v1718 = vpop.trf.xlu0
        %v1719 = vpop.trf.xlu0
        %v1720 = vpop.trf.xlu0
        %v1721 = vpop.trf.xlu0
        %v1722 = vpop.trf.xlu0
        %v1723 = vpop.trf.xlu0
        %v1724 = vpop.trf.xlu0
        %v1725 = vpop.trf.xlu0
        %v1726 = vpop.trf.xlu0
        %v1727 = vpop.trf.xlu0
        %v1728 = vpop.trf.xlu0
        %v1729 = vpop.trf.xlu0
        %1730 = vxpose.xlu0.b32.start [1/16] %v827, 128
        %1731 = vxpose.xlu0.b32.cont [2/16] 0.0, 128
        %1732 = vxpose.xlu0.b32.cont [3/16] 0.0, 128
        %1733 = vxpose.xlu0.b32.cont [4/16] 0.0, 128
        %1734 = vxpose.xlu0.b32.cont [5/16] 0.0, 128
        %1735 = vxpose.xlu0.b32.cont [6/16] 0.0, 128
        %1736 = vxpose.xlu0.b32.cont [7/16] 0.0, 128
        %1737 = vxpose.xlu0.b32.cont [8/16] 0.0, 128
        %1738 = vxpose.xlu0.b32.cont [9/16] 0.0, 128
        %1739 = vxpose.xlu0.b32.cont [10/16] 0.0, 128
        %1740 = vxpose.xlu0.b32.cont [11/16] 0.0, 128
        %1741 = vxpose.xlu0.b32.cont [12/16] 0.0, 128
        %1742 = vxpose.xlu0.b32.cont [13/16] 0.0, 128
        %1743 = vxpose.xlu0.b32.cont [14/16] 0.0, 128
        %1744 = vxpose.xlu0.b32.cont [15/16] 0.0, 128
        %1745 = vxpose.xlu0.b32.end [16/16] 0.0, 128
        %v1746 = vpop.trf.xlu0
        %v1747 = vpop.trf.xlu0
        %v1748 = vpop.trf.xlu0
        %v1749 = vpop.trf.xlu0
        %v1750 = vpop.trf.xlu0
        %v1751 = vpop.trf.xlu0
        %v1752 = vpop.trf.xlu0
        %v1753 = vpop.trf.xlu0
        %v1754 = vpop.trf.xlu0
        %v1755 = vpop.trf.xlu0
        %v1756 = vpop.trf.xlu0
        %v1757 = vpop.trf.xlu0
        %v1758 = vpop.trf.xlu0
        %v1759 = vpop.trf.xlu0
        %v1760 = vpop.trf.xlu0
        %v1761 = vpop.trf.xlu0
        %1762 = vxpose.xlu0.b32.start [1/16] %v829, 128
        %1763 = vxpose.xlu0.b32.cont [2/16] 0.0, 128
        %1764 = vxpose.xlu0.b32.cont [3/16] 0.0, 128
        %1765 = vxpose.xlu0.b32.cont [4/16] 0.0, 128
        %1766 = vxpose.xlu0.b32.cont [5/16] 0.0, 128
        %1767 = vxpose.xlu0.b32.cont [6/16] 0.0, 128
        %1768 = vxpose.xlu0.b32.cont [7/16] 0.0, 128
        %1769 = vxpose.xlu0.b32.cont [8/16] 0.0, 128
        %1770 = vxpose.xlu0.b32.cont [9/16] 0.0, 128
        %1771 = vxpose.xlu0.b32.cont [10/16] 0.0, 128
        %1772 = vxpose.xlu0.b32.cont [11/16] 0.0, 128
        %1773 = vxpose.xlu0.b32.cont [12/16] 0.0, 128
        %1774 = vxpose.xlu0.b32.cont [13/16] 0.0, 128
        %1775 = vxpose.xlu0.b32.cont [14/16] 0.0, 128
        %1776 = vxpose.xlu0.b32.cont [15/16] 0.0, 128
        %1777 = vxpose.xlu0.b32.end [16/16] 0.0, 128
        %v1778 = vpop.trf.xlu0
        %v1779 = vpop.trf.xlu0
        %v1780 = vpop.trf.xlu0
        %v1781 = vpop.trf.xlu0
        %v1782 = vpop.trf.xlu0
        %v1783 = vpop.trf.xlu0
        %v1784 = vpop.trf.xlu0
        %v1785 = vpop.trf.xlu0
        %v1786 = vpop.trf.xlu0
        %v1787 = vpop.trf.xlu0
        %v1788 = vpop.trf.xlu0
        %v1789 = vpop.trf.xlu0
        %v1790 = vpop.trf.xlu0
        %v1791 = vpop.trf.xlu0
        %v1792 = vpop.trf.xlu0
        %v1793 = vpop.trf.xlu0
        %1794 = vxpose.xlu0.b32.start [1/16] %v831, 128
        %1795 = vxpose.xlu0.b32.cont [2/16] 0.0, 128
        %1796 = vxpose.xlu0.b32.cont [3/16] 0.0, 128
        %1797 = vxpose.xlu0.b32.cont [4/16] 0.0, 128
        %1798 = vxpose.xlu0.b32.cont [5/16] 0.0, 128
        %1799 = vxpose.xlu0.b32.cont [6/16] 0.0, 128
        %1800 = vxpose.xlu0.b32.cont [7/16] 0.0, 128
        %1801 = vxpose.xlu0.b32.cont [8/16] 0.0, 128
        %1802 = vxpose.xlu0.b32.cont [9/16] 0.0, 128
        %1803 = vxpose.xlu0.b32.cont [10/16] 0.0, 128
        %1804 = vxpose.xlu0.b32.cont [11/16] 0.0, 128
        %1805 = vxpose.xlu0.b32.cont [12/16] 0.0, 128
        %1806 = vxpose.xlu0.b32.cont [13/16] 0.0, 128
        %1807 = vxpose.xlu0.b32.cont [14/16] 0.0, 128
        %1808 = vxpose.xlu0.b32.cont [15/16] 0.0, 128
        %1809 = vxpose.xlu0.b32.end [16/16] 0.0, 128
        %v1810 = vpop.trf.xlu0
        %v1811 = vpop.trf.xlu0
        %v1812 = vpop.trf.xlu0
        %v1813 = vpop.trf.xlu0
        %v1814 = vpop.trf.xlu0
        %v1815 = vpop.trf.xlu0
        %v1816 = vpop.trf.xlu0
        %v1817 = vpop.trf.xlu0
        %v1818 = vpop.trf.xlu0
        %v1819 = vpop.trf.xlu0
        %v1820 = vpop.trf.xlu0
        %v1821 = vpop.trf.xlu0
        %v1822 = vpop.trf.xlu0
        %v1823 = vpop.trf.xlu0
        %v1824 = vpop.trf.xlu0
        %v1825 = vpop.trf.xlu0
        %1826 = vxpose.xlu0.b32.start [1/16] %v833, 128
        %1827 = vxpose.xlu0.b32.cont [2/16] 0.0, 128
        %1828 = vxpose.xlu0.b32.cont [3/16] 0.0, 128
        %1829 = vxpose.xlu0.b32.cont [4/16] 0.0, 128
        %1830 = vxpose.xlu0.b32.cont [5/16] 0.0, 128
        %1831 = vxpose.xlu0.b32.cont [6/16] 0.0, 128
        %1832 = vxpose.xlu0.b32.cont [7/16] 0.0, 128
        %1833 = vxpose.xlu0.b32.cont [8/16] 0.0, 128
        %1834 = vxpose.xlu0.b32.cont [9/16] 0.0, 128
        %1835 = vxpose.xlu0.b32.cont [10/16] 0.0, 128
        %1836 = vxpose.xlu0.b32.cont [11/16] 0.0, 128
        %1837 = vxpose.xlu0.b32.cont [12/16] 0.0, 128
        %1838 = vxpose.xlu0.b32.cont [13/16] 0.0, 128
        %1839 = vxpose.xlu0.b32.cont [14/16] 0.0, 128
        %1840 = vxpose.xlu0.b32.cont [15/16] 0.0, 128
        %1841 = vxpose.xlu0.b32.end [16/16] 0.0, 128
        %v1842 = vpop.trf.xlu0
        %v1843 = vpop.trf.xlu0
        %v1844 = vpop.trf.xlu0
        %v1845 = vpop.trf.xlu0
        %v1846 = vpop.trf.xlu0
        %v1847 = vpop.trf.xlu0
        %v1848 = vpop.trf.xlu0
        %v1849 = vpop.trf.xlu0
        %v1850 = vpop.trf.xlu0
        %v1851 = vpop.trf.xlu0
        %v1852 = vpop.trf.xlu0
        %v1853 = vpop.trf.xlu0
        %v1854 = vpop.trf.xlu0
        %v1855 = vpop.trf.xlu0
        %v1856 = vpop.trf.xlu0
        %v1857 = vpop.trf.xlu0
        %v1858 = vcombine.low %v850, %v914
        %v1859 = vcombine.high %v850, %v914
        %v1861 = vunpack.c.l.s4 1983009808
        %v1862 = vunpack.c.0.s8 %v1861
        %v1863 = vlaneseq
        %v1864 = vshrl.u32 %v1863, 7
        %v1865 = vsub.s32 %v1862, %v1864
        %v1866 = vrot.slane %v1858, %v1865
        %v1868 = vunpack.c.l.s4 1983009808
        %v1869 = vunpack.c.0.s8 %v1868
        %v1870 = vlaneseq
        %v1871 = vshrl.u32 %v1870, 7
        %v1872 = vsub.s32 %v1869, %v1871
        %v1873 = vrot.slane %v1859, %v1872
        %v1874 = vcombine.low %v882, %v946
        %v1875 = vcombine.high %v882, %v946
        %v1877 = vunpack.c.l.s4 1983009808
        %v1878 = vunpack.c.0.s8 %v1877
        %v1879 = vlaneseq
        %v1880 = vshrl.u32 %v1879, 7
        %v1881 = vsub.s32 %v1878, %v1880
        %v1882 = vrot.slane %v1874, %v1881
        %v1884 = vunpack.c.l.s4 1983009808
        %v1885 = vunpack.c.0.s8 %v1884
        %v1886 = vlaneseq
        %v1887 = vshrl.u32 %v1886, 7
        %v1888 = vsub.s32 %v1885, %v1887
        %v1889 = vrot.slane %v1875, %v1888
        %v1890 = vcombine.low %v978, %v1042
        %v1891 = vcombine.high %v978, %v1042
        %v1893 = vunpack.c.l.s4 1983009808
        %v1894 = vunpack.c.0.s8 %v1893
        %v1895 = vlaneseq
        %v1896 = vshrl.u32 %v1895, 7
        %v1897 = vsub.s32 %v1894, %v1896
        %v1898 = vrot.slane %v1890, %v1897
        %v1900 = vunpack.c.l.s4 1983009808
        %v1901 = vunpack.c.0.s8 %v1900
        %v1902 = vlaneseq
        %v1903 = vshrl.u32 %v1902, 7
        %v1904 = vsub.s32 %v1901, %v1903
        %v1905 = vrot.slane %v1891, %v1904
        %v1906 = vcombine.low %v1010, %v1074
        %v1907 = vcombine.high %v1010, %v1074
        %v1909 = vunpack.c.l.s4 1983009808
        %v1910 = vunpack.c.0.s8 %v1909
        %v1911 = vlaneseq
        %v1912 = vshrl.u32 %v1911, 7
        %v1913 = vsub.s32 %v1910, %v1912
        %v1914 = vrot.slane %v1906, %v1913
        %v1916 = vunpack.c.l.s4 1983009808
        %v1917 = vunpack.c.0.s8 %v1916
        %v1918 = vlaneseq
        %v1919 = vshrl.u32 %v1918, 7
        %v1920 = vsub.s32 %v1917, %v1919
        %v1921 = vrot.slane %v1907, %v1920
        %v1922 = vcombine.low %v1866, %v1882
        %v1923 = vcombine.high %v1866, %v1882
        %v1925 = vunpack.c.l.s4 1934713408
        %v1926 = vunpack.c.0.s8 %v1925
        %v1927 = vlaneseq
        %v1928 = vshrl.u32 %v1927, 7
        %v1929 = vsub.s32 %v1926, %v1928
        %v1930 = vrot.slane %v1922, %v1929
        %v1932 = vunpack.c.l.s4 1934713408
        %v1933 = vunpack.c.0.s8 %v1932
        %v1934 = vlaneseq
        %v1935 = vshrl.u32 %v1934, 7
        %v1936 = vsub.s32 %v1933, %v1935
        %v1937 = vrot.slane %v1923, %v1936
        %v1938 = vcombine.low %v1873, %v1889
        %v1939 = vcombine.high %v1873, %v1889
        %v1941 = vunpack.c.l.s4 1934713408
        %v1942 = vunpack.c.0.s8 %v1941
        %v1943 = vlaneseq
        %v1944 = vshrl.u32 %v1943, 7
        %v1945 = vsub.s32 %v1942, %v1944
        %v1946 = vrot.slane %v1938, %v1945
        %v1948 = vunpack.c.l.s4 1934713408
        %v1949 = vunpack.c.0.s8 %v1948
        %v1950 = vlaneseq
        %v1951 = vshrl.u32 %v1950, 7
        %v1952 = vsub.s32 %v1949, %v1951
        %v1953 = vrot.slane %v1939, %v1952
        %v1954 = vcombine.low %v1898, %v1914
        %v1955 = vcombine.high %v1898, %v1914
        %v1957 = vunpack.c.l.s4 1934713408
        %v1958 = vunpack.c.0.s8 %v1957
        %v1959 = vlaneseq
        %v1960 = vshrl.u32 %v1959, 7
        %v1961 = vsub.s32 %v1958, %v1960
        %v1962 = vrot.slane %v1954, %v1961
        %v1964 = vunpack.c.l.s4 1934713408
        %v1965 = vunpack.c.0.s8 %v1964
        %v1966 = vlaneseq
        %v1967 = vshrl.u32 %v1966, 7
        %v1968 = vsub.s32 %v1965, %v1967
        %v1969 = vrot.slane %v1955, %v1968
        %v1970 = vcombine.low %v1905, %v1921
        %v1971 = vcombine.high %v1905, %v1921
        %v1973 = vunpack.c.l.s4 1934713408
        %v1974 = vunpack.c.0.s8 %v1973
        %v1975 = vlaneseq
        %v1976 = vshrl.u32 %v1975, 7
        %v1977 = vsub.s32 %v1974, %v1976
        %v1978 = vrot.slane %v1970, %v1977
        %v1980 = vunpack.c.l.s4 1934713408
        %v1981 = vunpack.c.0.s8 %v1980
        %v1982 = vlaneseq
        %v1983 = vshrl.u32 %v1982, 7
        %v1984 = vsub.s32 %v1981, %v1983
        %v1985 = vrot.slane %v1971, %v1984
        %v1986 = vcombine.low %v1930, %v1962
        %v1987 = vcombine.high %v1930, %v1962
        %v1988 = vcombine.low %v1937, %v1969
        %v1989 = vcombine.high %v1937, %v1969
        %v1990 = vcombine.low %v1946, %v1978
        %v1991 = vcombine.high %v1946, %v1978
        %v1992 = vcombine.low %v1953, %v1985
        %v1993 = vcombine.high %v1953, %v1985
        %v1994 = vcombine.low %v1106, %v1170
        %v1995 = vcombine.high %v1106, %v1170
        %v1997 = vunpack.c.l.s4 1983009808
        %v1998 = vunpack.c.0.s8 %v1997
        %v1999 = vlaneseq
        %v2000 = vshrl.u32 %v1999, 7
        %v2001 = vsub.s32 %v1998, %v2000
        %v2002 = vrot.slane %v1994, %v2001
        %v2004 = vunpack.c.l.s4 1983009808
        %v2005 = vunpack.c.0.s8 %v2004
        %v2006 = vlaneseq
        %v2007 = vshrl.u32 %v2006, 7
        %v2008 = vsub.s32 %v2005, %v2007
        %v2009 = vrot.slane %v1995, %v2008
        %v2010 = vcombine.low %v1138, %v1202
        %v2011 = vcombine.high %v1138, %v1202
        %v2013 = vunpack.c.l.s4 1983009808
        %v2014 = vunpack.c.0.s8 %v2013
        %v2015 = vlaneseq
        %v2016 = vshrl.u32 %v2015, 7
        %v2017 = vsub.s32 %v2014, %v2016
        %v2018 = vrot.slane %v2010, %v2017
        %v2020 = vunpack.c.l.s4 1983009808
        %v2021 = vunpack.c.0.s8 %v2020
        %v2022 = vlaneseq
        %v2023 = vshrl.u32 %v2022, 7
        %v2024 = vsub.s32 %v2021, %v2023
        %v2025 = vrot.slane %v2011, %v2024
        %v2026 = vcombine.low %v1234, %v1298
        %v2027 = vcombine.high %v1234, %v1298
        %v2029 = vunpack.c.l.s4 1983009808
        %v2030 = vunpack.c.0.s8 %v2029
        %v2031 = vlaneseq
        %v2032 = vshrl.u32 %v2031, 7
        %v2033 = vsub.s32 %v2030, %v2032
        %v2034 = vrot.slane %v2026, %v2033
        %v2036 = vunpack.c.l.s4 1983009808
        %v2037 = vunpack.c.0.s8 %v2036
        %v2038 = vlaneseq
        %v2039 = vshrl.u32 %v2038, 7
        %v2040 = vsub.s32 %v2037, %v2039
        %v2041 = vrot.slane %v2027, %v2040
        %v2042 = vcombine.low %v1266, %v1330
        %v2043 = vcombine.high %v1266, %v1330
        %v2045 = vunpack.c.l.s4 1983009808
        %v2046 = vunpack.c.0.s8 %v2045
        %v2047 = vlaneseq
        %v2048 = vshrl.u32 %v2047, 7
        %v2049 = vsub.s32 %v2046, %v2048
        %v2050 = vrot.slane %v2042, %v2049
        %v2052 = vunpack.c.l.s4 1983009808
        %v2053 = vunpack.c.0.s8 %v2052
        %v2054 = vlaneseq
        %v2055 = vshrl.u32 %v2054, 7
        %v2056 = vsub.s32 %v2053, %v2055
        %v2057 = vrot.slane %v2043, %v2056
        %v2058 = vcombine.low %v2002, %v2018
        %v2059 = vcombine.high %v2002, %v2018
        %v2061 = vunpack.c.l.s4 1934713408
        %v2062 = vunpack.c.0.s8 %v2061
        %v2063 = vlaneseq
        %v2064 = vshrl.u32 %v2063, 7
        %v2065 = vsub.s32 %v2062, %v2064
        %v2066 = vrot.slane %v2058, %v2065
        %v2068 = vunpack.c.l.s4 1934713408
        %v2069 = vunpack.c.0.s8 %v2068
        %v2070 = vlaneseq
        %v2071 = vshrl.u32 %v2070, 7
        %v2072 = vsub.s32 %v2069, %v2071
        %v2073 = vrot.slane %v2059, %v2072
        %v2074 = vcombine.low %v2009, %v2025
        %v2075 = vcombine.high %v2009, %v2025
        %v2077 = vunpack.c.l.s4 1934713408
        %v2078 = vunpack.c.0.s8 %v2077
        %v2079 = vlaneseq
        %v2080 = vshrl.u32 %v2079, 7
        %v2081 = vsub.s32 %v2078, %v2080
        %v2082 = vrot.slane %v2074, %v2081
        %v2084 = vunpack.c.l.s4 1934713408
        %v2085 = vunpack.c.0.s8 %v2084
        %v2086 = vlaneseq
        %v2087 = vshrl.u32 %v2086, 7
        %v2088 = vsub.s32 %v2085, %v2087
        %v2089 = vrot.slane %v2075, %v2088
        %v2090 = vcombine.low %v2034, %v2050
        %v2091 = vcombine.high %v2034, %v2050
        %v2093 = vunpack.c.l.s4 1934713408
        %v2094 = vunpack.c.0.s8 %v2093
        %v2095 = vlaneseq
        %v2096 = vshrl.u32 %v2095, 7
        %v2097 = vsub.s32 %v2094, %v2096
        %v2098 = vrot.slane %v2090, %v2097
        %v2100 = vunpack.c.l.s4 1934713408
        %v2101 = vunpack.c.0.s8 %v2100
        %v2102 = vlaneseq
        %v2103 = vshrl.u32 %v2102, 7
        %v2104 = vsub.s32 %v2101, %v2103
        %v2105 = vrot.slane %v2091, %v2104
        %v2106 = vcombine.low %v2041, %v2057
        %v2107 = vcombine.high %v2041, %v2057
        %v2109 = vunpack.c.l.s4 1934713408
        %v2110 = vunpack.c.0.s8 %v2109
        %v2111 = vlaneseq
        %v2112 = vshrl.u32 %v2111, 7
        %v2113 = vsub.s32 %v2110, %v2112
        %v2114 = vrot.slane %v2106, %v2113
        %v2116 = vunpack.c.l.s4 1934713408
        %v2117 = vunpack.c.0.s8 %v2116
        %v2118 = vlaneseq
        %v2119 = vshrl.u32 %v2118, 7
        %v2120 = vsub.s32 %v2117, %v2119
        %v2121 = vrot.slane %v2107, %v2120
        %v2122 = vcombine.low %v2066, %v2098
        %v2123 = vcombine.high %v2066, %v2098
        %v2124 = vcombine.low %v2073, %v2105
        %v2125 = vcombine.high %v2073, %v2105
        %v2126 = vcombine.low %v2082, %v2114
        %v2127 = vcombine.high %v2082, %v2114
        %v2128 = vcombine.low %v2089, %v2121
        %v2129 = vcombine.high %v2089, %v2121
        %v2130 = vcombine.low %v1362, %v1426
        %v2131 = vcombine.high %v1362, %v1426
        %v2133 = vunpack.c.l.s4 1983009808
        %v2134 = vunpack.c.0.s8 %v2133
        %v2135 = vlaneseq
        %v2136 = vshrl.u32 %v2135, 7
        %v2137 = vsub.s32 %v2134, %v2136
        %v2138 = vrot.slane %v2130, %v2137
        %v2140 = vunpack.c.l.s4 1983009808
        %v2141 = vunpack.c.0.s8 %v2140
        %v2142 = vlaneseq
        %v2143 = vshrl.u32 %v2142, 7
        %v2144 = vsub.s32 %v2141, %v2143
        %v2145 = vrot.slane %v2131, %v2144
        %v2146 = vcombine.low %v1394, %v1458
        %v2147 = vcombine.high %v1394, %v1458
        %v2149 = vunpack.c.l.s4 1983009808
        %v2150 = vunpack.c.0.s8 %v2149
        %v2151 = vlaneseq
        %v2152 = vshrl.u32 %v2151, 7
        %v2153 = vsub.s32 %v2150, %v2152
        %v2154 = vrot.slane %v2146, %v2153
        %v2156 = vunpack.c.l.s4 1983009808
        %v2157 = vunpack.c.0.s8 %v2156
        %v2158 = vlaneseq
        %v2159 = vshrl.u32 %v2158, 7
        %v2160 = vsub.s32 %v2157, %v2159
        %v2161 = vrot.slane %v2147, %v2160
        %v2162 = vcombine.low %v1490, %v1554
        %v2163 = vcombine.high %v1490, %v1554
        %v2165 = vunpack.c.l.s4 1983009808
        %v2166 = vunpack.c.0.s8 %v2165
        %v2167 = vlaneseq
        %v2168 = vshrl.u32 %v2167, 7
        %v2169 = vsub.s32 %v2166, %v2168
        %v2170 = vrot.slane %v2162, %v2169
        %v2172 = vunpack.c.l.s4 1983009808
        %v2173 = vunpack.c.0.s8 %v2172
        %v2174 = vlaneseq
        %v2175 = vshrl.u32 %v2174, 7
        %v2176 = vsub.s32 %v2173, %v2175
        %v2177 = vrot.slane %v2163, %v2176
        %v2178 = vcombine.low %v1522, %v1586
        %v2179 = vcombine.high %v1522, %v1586
        %v2181 = vunpack.c.l.s4 1983009808
        %v2182 = vunpack.c.0.s8 %v2181
        %v2183 = vlaneseq
        %v2184 = vshrl.u32 %v2183, 7
        %v2185 = vsub.s32 %v2182, %v2184
        %v2186 = vrot.slane %v2178, %v2185
        %v2188 = vunpack.c.l.s4 1983009808
        %v2189 = vunpack.c.0.s8 %v2188
        %v2190 = vlaneseq
        %v2191 = vshrl.u32 %v2190, 7
        %v2192 = vsub.s32 %v2189, %v2191
        %v2193 = vrot.slane %v2179, %v2192
        %v2194 = vcombine.low %v2138, %v2154
        %v2195 = vcombine.high %v2138, %v2154
        %v2197 = vunpack.c.l.s4 1934713408
        %v2198 = vunpack.c.0.s8 %v2197
        %v2199 = vlaneseq
        %v2200 = vshrl.u32 %v2199, 7
        %v2201 = vsub.s32 %v2198, %v2200
        %v2202 = vrot.slane %v2194, %v2201
        %v2204 = vunpack.c.l.s4 1934713408
        %v2205 = vunpack.c.0.s8 %v2204
        %v2206 = vlaneseq
        %v2207 = vshrl.u32 %v2206, 7
        %v2208 = vsub.s32 %v2205, %v2207
        %v2209 = vrot.slane %v2195, %v2208
        %v2210 = vcombine.low %v2145, %v2161
        %v2211 = vcombine.high %v2145, %v2161
        %v2213 = vunpack.c.l.s4 1934713408
        %v2214 = vunpack.c.0.s8 %v2213
        %v2215 = vlaneseq
        %v2216 = vshrl.u32 %v2215, 7
        %v2217 = vsub.s32 %v2214, %v2216
        %v2218 = vrot.slane %v2210, %v2217
        %v2220 = vunpack.c.l.s4 1934713408
        %v2221 = vunpack.c.0.s8 %v2220
        %v2222 = vlaneseq
        %v2223 = vshrl.u32 %v2222, 7
        %v2224 = vsub.s32 %v2221, %v2223
        %v2225 = vrot.slane %v2211, %v2224
        %v2226 = vcombine.low %v2170, %v2186
        %v2227 = vcombine.high %v2170, %v2186
        %v2229 = vunpack.c.l.s4 1934713408
        %v2230 = vunpack.c.0.s8 %v2229
        %v2231 = vlaneseq
        %v2232 = vshrl.u32 %v2231, 7
        %v2233 = vsub.s32 %v2230, %v2232
        %v2234 = vrot.slane %v2226, %v2233
        %v2236 = vunpack.c.l.s4 1934713408
        %v2237 = vunpack.c.0.s8 %v2236
        %v2238 = vlaneseq
        %v2239 = vshrl.u32 %v2238, 7
        %v2240 = vsub.s32 %v2237, %v2239
        %v2241 = vrot.slane %v2227, %v2240
        %v2242 = vcombine.low %v2177, %v2193
        %v2243 = vcombine.high %v2177, %v2193
        %v2245 = vunpack.c.l.s4 1934713408
        %v2246 = vunpack.c.0.s8 %v2245
        %v2247 = vlaneseq
        %v2248 = vshrl.u32 %v2247, 7
        %v2249 = vsub.s32 %v2246, %v2248
        %v2250 = vrot.slane %v2242, %v2249
        %v2252 = vunpack.c.l.s4 1934713408
        %v2253 = vunpack.c.0.s8 %v2252
        %v2254 = vlaneseq
        %v2255 = vshrl.u32 %v2254, 7
        %v2256 = vsub.s32 %v2253, %v2255
        %v2257 = vrot.slane %v2243, %v2256
        %v2258 = vcombine.low %v2202, %v2234
        %v2259 = vcombine.high %v2202, %v2234
        %v2260 = vcombine.low %v2209, %v2241
        %v2261 = vcombine.high %v2209, %v2241
        %v2262 = vcombine.low %v2218, %v2250
        %v2263 = vcombine.high %v2218, %v2250
        %v2264 = vcombine.low %v2225, %v2257
        %v2265 = vcombine.high %v2225, %v2257
        %v2266 = vcombine.low %v1618, %v1682
        %v2267 = vcombine.high %v1618, %v1682
        %v2269 = vunpack.c.l.s4 1983009808
        %v2270 = vunpack.c.0.s8 %v2269
        %v2271 = vlaneseq
        %v2272 = vshrl.u32 %v2271, 7
        %v2273 = vsub.s32 %v2270, %v2272
        %v2274 = vrot.slane %v2266, %v2273
        %v2276 = vunpack.c.l.s4 1983009808
        %v2277 = vunpack.c.0.s8 %v2276
        %v2278 = vlaneseq
        %v2279 = vshrl.u32 %v2278, 7
        %v2280 = vsub.s32 %v2277, %v2279
        %v2281 = vrot.slane %v2267, %v2280
        %v2282 = vcombine.low %v1650, %v1714
        %v2283 = vcombine.high %v1650, %v1714
        %v2285 = vunpack.c.l.s4 1983009808
        %v2286 = vunpack.c.0.s8 %v2285
        %v2287 = vlaneseq
        %v2288 = vshrl.u32 %v2287, 7
        %v2289 = vsub.s32 %v2286, %v2288
        %v2290 = vrot.slane %v2282, %v2289
        %v2292 = vunpack.c.l.s4 1983009808
        %v2293 = vunpack.c.0.s8 %v2292
        %v2294 = vlaneseq
        %v2295 = vshrl.u32 %v2294, 7
        %v2296 = vsub.s32 %v2293, %v2295
        %v2297 = vrot.slane %v2283, %v2296
        %v2298 = vcombine.low %v1746, %v1810
        %v2299 = vcombine.high %v1746, %v1810
        %v2301 = vunpack.c.l.s4 1983009808
        %v2302 = vunpack.c.0.s8 %v2301
        %v2303 = vlaneseq
        %v2304 = vshrl.u32 %v2303, 7
        %v2305 = vsub.s32 %v2302, %v2304
        %v2306 = vrot.slane %v2298, %v2305
        %v2308 = vunpack.c.l.s4 1983009808
        %v2309 = vunpack.c.0.s8 %v2308
        %v2310 = vlaneseq
        %v2311 = vshrl.u32 %v2310, 7
        %v2312 = vsub.s32 %v2309, %v2311
        %v2313 = vrot.slane %v2299, %v2312
        %v2314 = vcombine.low %v1778, %v1842
        %v2315 = vcombine.high %v1778, %v1842
        %v2317 = vunpack.c.l.s4 1983009808
        %v2318 = vunpack.c.0.s8 %v2317
        %v2319 = vlaneseq
        %v2320 = vshrl.u32 %v2319, 7
        %v2321 = vsub.s32 %v2318, %v2320
        %v2322 = vrot.slane %v2314, %v2321
        %v2324 = vunpack.c.l.s4 1983009808
        %v2325 = vunpack.c.0.s8 %v2324
        %v2326 = vlaneseq
        %v2327 = vshrl.u32 %v2326, 7
        %v2328 = vsub.s32 %v2325, %v2327
        %v2329 = vrot.slane %v2315, %v2328
        %v2330 = vcombine.low %v2274, %v2290
        %v2331 = vcombine.high %v2274, %v2290
        %v2333 = vunpack.c.l.s4 1934713408
        %v2334 = vunpack.c.0.s8 %v2333
        %v2335 = vlaneseq
        %v2336 = vshrl.u32 %v2335, 7
        %v2337 = vsub.s32 %v2334, %v2336
        %v2338 = vrot.slane %v2330, %v2337
        %v2340 = vunpack.c.l.s4 1934713408
        %v2341 = vunpack.c.0.s8 %v2340
        %v2342 = vlaneseq
        %v2343 = vshrl.u32 %v2342, 7
        %v2344 = vsub.s32 %v2341, %v2343
        %v2345 = vrot.slane %v2331, %v2344
        %v2346 = vcombine.low %v2281, %v2297
        %v2347 = vcombine.high %v2281, %v2297
        %v2349 = vunpack.c.l.s4 1934713408
        %v2350 = vunpack.c.0.s8 %v2349
        %v2351 = vlaneseq
        %v2352 = vshrl.u32 %v2351, 7
        %v2353 = vsub.s32 %v2350, %v2352
        %v2354 = vrot.slane %v2346, %v2353
        %v2356 = vunpack.c.l.s4 1934713408
        %v2357 = vunpack.c.0.s8 %v2356
        %v2358 = vlaneseq
        %v2359 = vshrl.u32 %v2358, 7
        %v2360 = vsub.s32 %v2357, %v2359
        %v2361 = vrot.slane %v2347, %v2360
        %v2362 = vcombine.low %v2306, %v2322
        %v2363 = vcombine.high %v2306, %v2322
        %v2365 = vunpack.c.l.s4 1934713408
        %v2366 = vunpack.c.0.s8 %v2365
        %v2367 = vlaneseq
        %v2368 = vshrl.u32 %v2367, 7
        %v2369 = vsub.s32 %v2366, %v2368
        %v2370 = vrot.slane %v2362, %v2369
        %v2372 = vunpack.c.l.s4 1934713408
        %v2373 = vunpack.c.0.s8 %v2372
        %v2374 = vlaneseq
        %v2375 = vshrl.u32 %v2374, 7
        %v2376 = vsub.s32 %v2373, %v2375
        %v2377 = vrot.slane %v2363, %v2376
        %v2378 = vcombine.low %v2313, %v2329
        %v2379 = vcombine.high %v2313, %v2329
        %v2381 = vunpack.c.l.s4 1934713408
        %v2382 = vunpack.c.0.s8 %v2381
        %v2383 = vlaneseq
        %v2384 = vshrl.u32 %v2383, 7
        %v2385 = vsub.s32 %v2382, %v2384
        %v2386 = vrot.slane %v2378, %v2385
        %v2388 = vunpack.c.l.s4 1934713408
        %v2389 = vunpack.c.0.s8 %v2388
        %v2390 = vlaneseq
        %v2391 = vshrl.u32 %v2390, 7
        %v2392 = vsub.s32 %v2389, %v2391
        %v2393 = vrot.slane %v2379, %v2392
        %v2394 = vcombine.low %v2338, %v2370
        %v2395 = vcombine.high %v2338, %v2370
        %v2396 = vcombine.low %v2345, %v2377
        %v2397 = vcombine.high %v2345, %v2377
        %v2398 = vcombine.low %v2354, %v2386
        %v2399 = vcombine.high %v2354, %v2386
        %v2400 = vcombine.low %v2361, %v2393
        %v2401 = vcombine.high %v2361, %v2393
        %2402 = vxpose.xlu0.b32.start [1/16] %v1986, 128
        %2403 = vxpose.xlu0.b32.cont [2/16] %v2122, 128
        %2404 = vxpose.xlu0.b32.cont [3/16] %v2258, 128
        %2405 = vxpose.xlu0.b32.cont [4/16] %v2394, 128
        %2406 = vxpose.xlu0.b32.cont [5/16] 0.0, 128
        %2407 = vxpose.xlu0.b32.cont [6/16] 0.0, 128
        %2408 = vxpose.xlu0.b32.cont [7/16] 0.0, 128
        %2409 = vxpose.xlu0.b32.cont [8/16] 0.0, 128
        %2410 = vxpose.xlu0.b32.cont [9/16] 0.0, 128
        %2411 = vxpose.xlu0.b32.cont [10/16] 0.0, 128
        %2412 = vxpose.xlu0.b32.cont [11/16] 0.0, 128
        %2413 = vxpose.xlu0.b32.cont [12/16] 0.0, 128
        %2414 = vxpose.xlu0.b32.cont [13/16] 0.0, 128
        %2415 = vxpose.xlu0.b32.cont [14/16] 0.0, 128
        %2416 = vxpose.xlu0.b32.cont [15/16] 0.0, 128
        %2417 = vxpose.xlu0.b32.end [16/16] 0.0, 128
        %v2418 = vpop.trf.xlu0
        %v2419 = vpop.trf.xlu0
        %v2420 = vpop.trf.xlu0
        %v2421 = vpop.trf.xlu0
        %v2422 = vpop.trf.xlu0
        %v2423 = vpop.trf.xlu0
        %v2424 = vpop.trf.xlu0
        %v2425 = vpop.trf.xlu0
        %v2426 = vpop.trf.xlu0
        %v2427 = vpop.trf.xlu0
        %v2428 = vpop.trf.xlu0
        %v2429 = vpop.trf.xlu0
        %v2430 = vpop.trf.xlu0
        %v2431 = vpop.trf.xlu0
        %v2432 = vpop.trf.xlu0
        %v2433 = vpop.trf.xlu0
        %2434 = vxpose.xlu0.b32.start [1/16] %v1987, 128
        %2435 = vxpose.xlu0.b32.cont [2/16] %v2123, 128
        %2436 = vxpose.xlu0.b32.cont [3/16] %v2259, 128
        %2437 = vxpose.xlu0.b32.cont [4/16] %v2395, 128
        %2438 = vxpose.xlu0.b32.cont [5/16] 0.0, 128
        %2439 = vxpose.xlu0.b32.cont [6/16] 0.0, 128
        %2440 = vxpose.xlu0.b32.cont [7/16] 0.0, 128
        %2441 = vxpose.xlu0.b32.cont [8/16] 0.0, 128
        %2442 = vxpose.xlu0.b32.cont [9/16] 0.0, 128
        %2443 = vxpose.xlu0.b32.cont [10/16] 0.0, 128
        %2444 = vxpose.xlu0.b32.cont [11/16] 0.0, 128
        %2445 = vxpose.xlu0.b32.cont [12/16] 0.0, 128
        %2446 = vxpose.xlu0.b32.cont [13/16] 0.0, 128
        %2447 = vxpose.xlu0.b32.cont [14/16] 0.0, 128
        %2448 = vxpose.xlu0.b32.cont [15/16] 0.0, 128
        %2449 = vxpose.xlu0.b32.end [16/16] 0.0, 128
        %v2450 = vpop.trf.xlu0
        %v2451 = vpop.trf.xlu0
        %v2452 = vpop.trf.xlu0
        %v2453 = vpop.trf.xlu0
        %v2454 = vpop.trf.xlu0
        %v2455 = vpop.trf.xlu0
        %v2456 = vpop.trf.xlu0
        %v2457 = vpop.trf.xlu0
        %v2458 = vpop.trf.xlu0
        %v2459 = vpop.trf.xlu0
        %v2460 = vpop.trf.xlu0
        %v2461 = vpop.trf.xlu0
        %v2462 = vpop.trf.xlu0
        %v2463 = vpop.trf.xlu0
        %v2464 = vpop.trf.xlu0
        %v2465 = vpop.trf.xlu0
        %2466 = vxpose.xlu0.b32.start [1/16] %v1988, 128
        %2467 = vxpose.xlu0.b32.cont [2/16] %v2124, 128
        %2468 = vxpose.xlu0.b32.cont [3/16] %v2260, 128
        %2469 = vxpose.xlu0.b32.cont [4/16] %v2396, 128
        %2470 = vxpose.xlu0.b32.cont [5/16] 0.0, 128
        %2471 = vxpose.xlu0.b32.cont [6/16] 0.0, 128
        %2472 = vxpose.xlu0.b32.cont [7/16] 0.0, 128
        %2473 = vxpose.xlu0.b32.cont [8/16] 0.0, 128
        %2474 = vxpose.xlu0.b32.cont [9/16] 0.0, 128
        %2475 = vxpose.xlu0.b32.cont [10/16] 0.0, 128
        %2476 = vxpose.xlu0.b32.cont [11/16] 0.0, 128
        %2477 = vxpose.xlu0.b32.cont [12/16] 0.0, 128
        %2478 = vxpose.xlu0.b32.cont [13/16] 0.0, 128
        %2479 = vxpose.xlu0.b32.cont [14/16] 0.0, 128
        %2480 = vxpose.xlu0.b32.cont [15/16] 0.0, 128
        %2481 = vxpose.xlu0.b32.end [16/16] 0.0, 128
        %v2482 = vpop.trf.xlu0
        %v2483 = vpop.trf.xlu0
        %v2484 = vpop.trf.xlu0
        %v2485 = vpop.trf.xlu0
        %v2486 = vpop.trf.xlu0
        %v2487 = vpop.trf.xlu0
        %v2488 = vpop.trf.xlu0
        %v2489 = vpop.trf.xlu0
        %v2490 = vpop.trf.xlu0
        %v2491 = vpop.trf.xlu0
        %v2492 = vpop.trf.xlu0
        %v2493 = vpop.trf.xlu0
        %v2494 = vpop.trf.xlu0
        %v2495 = vpop.trf.xlu0
        %v2496 = vpop.trf.xlu0
        %v2497 = vpop.trf.xlu0
        %2498 = vxpose.xlu0.b32.start [1/16] %v1989, 128
        %2499 = vxpose.xlu0.b32.cont [2/16] %v2125, 128
        %2500 = vxpose.xlu0.b32.cont [3/16] %v2261, 128
        %2501 = vxpose.xlu0.b32.cont [4/16] %v2397, 128
        %2502 = vxpose.xlu0.b32.cont [5/16] 0.0, 128
        %2503 = vxpose.xlu0.b32.cont [6/16] 0.0, 128
        %2504 = vxpose.xlu0.b32.cont [7/16] 0.0, 128
        %2505 = vxpose.xlu0.b32.cont [8/16] 0.0, 128
        %2506 = vxpose.xlu0.b32.cont [9/16] 0.0, 128
        %2507 = vxpose.xlu0.b32.cont [10/16] 0.0, 128
        %2508 = vxpose.xlu0.b32.cont [11/16] 0.0, 128
        %2509 = vxpose.xlu0.b32.cont [12/16] 0.0, 128
        %2510 = vxpose.xlu0.b32.cont [13/16] 0.0, 128
        %2511 = vxpose.xlu0.b32.cont [14/16] 0.0, 128
        %2512 = vxpose.xlu0.b32.cont [15/16] 0.0, 128
        %2513 = vxpose.xlu0.b32.end [16/16] 0.0, 128
        %v2514 = vpop.trf.xlu0
        %v2515 = vpop.trf.xlu0
        %v2516 = vpop.trf.xlu0
        %v2517 = vpop.trf.xlu0
        %v2518 = vpop.trf.xlu0
        %v2519 = vpop.trf.xlu0
        %v2520 = vpop.trf.xlu0
        %v2521 = vpop.trf.xlu0
        %v2522 = vpop.trf.xlu0
        %v2523 = vpop.trf.xlu0
        %v2524 = vpop.trf.xlu0
        %v2525 = vpop.trf.xlu0
        %v2526 = vpop.trf.xlu0
        %v2527 = vpop.trf.xlu0
        %v2528 = vpop.trf.xlu0
        %v2529 = vpop.trf.xlu0
        %2530 = vxpose.xlu0.b32.start [1/16] %v1990, 128
        %2531 = vxpose.xlu0.b32.cont [2/16] %v2126, 128
        %2532 = vxpose.xlu0.b32.cont [3/16] %v2262, 128
        %2533 = vxpose.xlu0.b32.cont [4/16] %v2398, 128
        %2534 = vxpose.xlu0.b32.cont [5/16] 0.0, 128
        %2535 = vxpose.xlu0.b32.cont [6/16] 0.0, 128
        %2536 = vxpose.xlu0.b32.cont [7/16] 0.0, 128
        %2537 = vxpose.xlu0.b32.cont [8/16] 0.0, 128
        %2538 = vxpose.xlu0.b32.cont [9/16] 0.0, 128
        %2539 = vxpose.xlu0.b32.cont [10/16] 0.0, 128
        %2540 = vxpose.xlu0.b32.cont [11/16] 0.0, 128
        %2541 = vxpose.xlu0.b32.cont [12/16] 0.0, 128
        %2542 = vxpose.xlu0.b32.cont [13/16] 0.0, 128
        %2543 = vxpose.xlu0.b32.cont [14/16] 0.0, 128
        %2544 = vxpose.xlu0.b32.cont [15/16] 0.0, 128
        %2545 = vxpose.xlu0.b32.end [16/16] 0.0, 128
        %v2546 = vpop.trf.xlu0
        %v2547 = vpop.trf.xlu0
        %v2548 = vpop.trf.xlu0
        %v2549 = vpop.trf.xlu0
        %v2550 = vpop.trf.xlu0
        %v2551 = vpop.trf.xlu0
        %v2552 = vpop.trf.xlu0
        %v2553 = vpop.trf.xlu0
        %v2554 = vpop.trf.xlu0
        %v2555 = vpop.trf.xlu0
        %v2556 = vpop.trf.xlu0
        %v2557 = vpop.trf.xlu0
        %v2558 = vpop.trf.xlu0
        %v2559 = vpop.trf.xlu0
        %v2560 = vpop.trf.xlu0
        %v2561 = vpop.trf.xlu0
        %2562 = vxpose.xlu0.b32.start [1/16] %v1991, 128
        %2563 = vxpose.xlu0.b32.cont [2/16] %v2127, 128
        %2564 = vxpose.xlu0.b32.cont [3/16] %v2263, 128
        %2565 = vxpose.xlu0.b32.cont [4/16] %v2399, 128
        %2566 = vxpose.xlu0.b32.cont [5/16] 0.0, 128
        %2567 = vxpose.xlu0.b32.cont [6/16] 0.0, 128
        %2568 = vxpose.xlu0.b32.cont [7/16] 0.0, 128
        %2569 = vxpose.xlu0.b32.cont [8/16] 0.0, 128
        %2570 = vxpose.xlu0.b32.cont [9/16] 0.0, 128
        %2571 = vxpose.xlu0.b32.cont [10/16] 0.0, 128
        %2572 = vxpose.xlu0.b32.cont [11/16] 0.0, 128
        %2573 = vxpose.xlu0.b32.cont [12/16] 0.0, 128
        %2574 = vxpose.xlu0.b32.cont [13/16] 0.0, 128
        %2575 = vxpose.xlu0.b32.cont [14/16] 0.0, 128
        %2576 = vxpose.xlu0.b32.cont [15/16] 0.0, 128
        %2577 = vxpose.xlu0.b32.end [16/16] 0.0, 128
        %v2578 = vpop.trf.xlu0
        %v2579 = vpop.trf.xlu0
        %v2580 = vpop.trf.xlu0
        %v2581 = vpop.trf.xlu0
        %v2582 = vpop.trf.xlu0
        %v2583 = vpop.trf.xlu0
        %v2584 = vpop.trf.xlu0
        %v2585 = vpop.trf.xlu0
        %v2586 = vpop.trf.xlu0
        %v2587 = vpop.trf.xlu0
        %v2588 = vpop.trf.xlu0
        %v2589 = vpop.trf.xlu0
        %v2590 = vpop.trf.xlu0
        %v2591 = vpop.trf.xlu0
        %v2592 = vpop.trf.xlu0
        %v2593 = vpop.trf.xlu0
        %2594 = vxpose.xlu0.b32.start [1/16] %v1992, 128
        %2595 = vxpose.xlu0.b32.cont [2/16] %v2128, 128
        %2596 = vxpose.xlu0.b32.cont [3/16] %v2264, 128
        %2597 = vxpose.xlu0.b32.cont [4/16] %v2400, 128
        %2598 = vxpose.xlu0.b32.cont [5/16] 0.0, 128
        %2599 = vxpose.xlu0.b32.cont [6/16] 0.0, 128
        %2600 = vxpose.xlu0.b32.cont [7/16] 0.0, 128
        %2601 = vxpose.xlu0.b32.cont [8/16] 0.0, 128
        %2602 = vxpose.xlu0.b32.cont [9/16] 0.0, 128
        %2603 = vxpose.xlu0.b32.cont [10/16] 0.0, 128
        %2604 = vxpose.xlu0.b32.cont [11/16] 0.0, 128
        %2605 = vxpose.xlu0.b32.cont [12/16] 0.0, 128
        %2606 = vxpose.xlu0.b32.cont [13/16] 0.0, 128
        %2607 = vxpose.xlu0.b32.cont [14/16] 0.0, 128
        %2608 = vxpose.xlu0.b32.cont [15/16] 0.0, 128
        %2609 = vxpose.xlu0.b32.end [16/16] 0.0, 128
        %v2610 = vpop.trf.xlu0
        %v2611 = vpop.trf.xlu0
        %v2612 = vpop.trf.xlu0
        %v2613 = vpop.trf.xlu0
        %v2614 = vpop.trf.xlu0
        %v2615 = vpop.trf.xlu0
        %v2616 = vpop.trf.xlu0
        %v2617 = vpop.trf.xlu0
        %v2618 = vpop.trf.xlu0
        %v2619 = vpop.trf.xlu0
        %v2620 = vpop.trf.xlu0
        %v2621 = vpop.trf.xlu0
        %v2622 = vpop.trf.xlu0
        %v2623 = vpop.trf.xlu0
        %v2624 = vpop.trf.xlu0
        %v2625 = vpop.trf.xlu0
        %2626 = vxpose.xlu0.b32.start [1/16] %v1993, 128
        %2627 = vxpose.xlu0.b32.cont [2/16] %v2129, 128
        %2628 = vxpose.xlu0.b32.cont [3/16] %v2265, 128
        %2629 = vxpose.xlu0.b32.cont [4/16] %v2401, 128
        %2630 = vxpose.xlu0.b32.cont [5/16] 0.0, 128
        %2631 = vxpose.xlu0.b32.cont [6/16] 0.0, 128
        %2632 = vxpose.xlu0.b32.cont [7/16] 0.0, 128
        %2633 = vxpose.xlu0.b32.cont [8/16] 0.0, 128
        %2634 = vxpose.xlu0.b32.cont [9/16] 0.0, 128
        %2635 = vxpose.xlu0.b32.cont [10/16] 0.0, 128
        %2636 = vxpose.xlu0.b32.cont [11/16] 0.0, 128
        %2637 = vxpose.xlu0.b32.cont [12/16] 0.0, 128
        %2638 = vxpose.xlu0.b32.cont [13/16] 0.0, 128
        %2639 = vxpose.xlu0.b32.cont [14/16] 0.0, 128
        %2640 = vxpose.xlu0.b32.cont [15/16] 0.0, 128
        %2641 = vxpose.xlu0.b32.end [16/16] 0.0, 128
        %v2642 = vpop.trf.xlu0
        %v2643 = vpop.trf.xlu0
        %v2644 = vpop.trf.xlu0
        %v2645 = vpop.trf.xlu0
        %v2646 = vpop.trf.xlu0
        %v2647 = vpop.trf.xlu0
        %v2648 = vpop.trf.xlu0
        %v2649 = vpop.trf.xlu0
        %v2650 = vpop.trf.xlu0
        %v2651 = vpop.trf.xlu0
        %v2652 = vpop.trf.xlu0
        %v2653 = vpop.trf.xlu0
        %v2654 = vpop.trf.xlu0
        %v2655 = vpop.trf.xlu0
        %v2656 = vpop.trf.xlu0
        %v2657 = vpop.trf.xlu0
        %v2658 = vcombine.low %v2418, %v2482
        %v2660 = vunpack.c.l.s4 1983009808
        %v2661 = vunpack.c.0.s8 %v2660
        %v2662 = vlaneseq
        %v2663 = vshrl.u32 %v2662, 7
        %v2664 = vsub.s32 %v2661, %v2663
        %v2665 = vrot.slane %v2658, %v2664
        %v2666 = vcombine.low %v2450, %v2514
        %v2668 = vunpack.c.l.s4 1983009808
        %v2669 = vunpack.c.0.s8 %v2668
        %v2670 = vlaneseq
        %v2671 = vshrl.u32 %v2670, 7
        %v2672 = vsub.s32 %v2669, %v2671
        %v2673 = vrot.slane %v2666, %v2672
        %v2674 = vcombine.low %v2546, %v2610
        %v2676 = vunpack.c.l.s4 1983009808
        %v2677 = vunpack.c.0.s8 %v2676
        %v2678 = vlaneseq
        %v2679 = vshrl.u32 %v2678, 7
        %v2680 = vsub.s32 %v2677, %v2679
        %v2681 = vrot.slane %v2674, %v2680
        %v2682 = vcombine.low %v2578, %v2642
        %v2684 = vunpack.c.l.s4 1983009808
        %v2685 = vunpack.c.0.s8 %v2684
        %v2686 = vlaneseq
        %v2687 = vshrl.u32 %v2686, 7
        %v2688 = vsub.s32 %v2685, %v2687
        %v2689 = vrot.slane %v2682, %v2688
        %v2690 = vcombine.low %v2665, %v2673
        %v2691 = vcombine.high %v2665, %v2673
        %v2693 = vunpack.c.l.s4 1934713408
        %v2694 = vunpack.c.0.s8 %v2693
        %v2695 = vlaneseq
        %v2696 = vshrl.u32 %v2695, 7
        %v2697 = vsub.s32 %v2694, %v2696
        %v2698 = vrot.slane %v2690, %v2697
        %v2700 = vunpack.c.l.s4 1934713408
        %v2701 = vunpack.c.0.s8 %v2700
        %v2702 = vlaneseq
        %v2703 = vshrl.u32 %v2702, 7
        %v2704 = vsub.s32 %v2701, %v2703
        %v2705 = vrot.slane %v2691, %v2704
        %v2706 = vcombine.low %v2681, %v2689
        %v2707 = vcombine.high %v2681, %v2689
        %v2709 = vunpack.c.l.s4 1934713408
        %v2710 = vunpack.c.0.s8 %v2709
        %v2711 = vlaneseq
        %v2712 = vshrl.u32 %v2711, 7
        %v2713 = vsub.s32 %v2710, %v2712
        %v2714 = vrot.slane %v2706, %v2713
        %v2716 = vunpack.c.l.s4 1934713408
        %v2717 = vunpack.c.0.s8 %v2716
        %v2718 = vlaneseq
        %v2719 = vshrl.u32 %v2718, 7
        %v2720 = vsub.s32 %v2717, %v2719
        %v2721 = vrot.slane %v2707, %v2720
        %v2722 = vcombine.low %v2698, %v2714
        %v2723 = vcombine.high %v2698, %v2714
        %v2724 = vcombine.low %v2705, %v2721
        %v2725 = vcombine.high %v2705, %v2721
        %2726 = vrot.lane.b32.xlu0 %v315, 96
        %v2727 = vpop.permute.xlu0 %2726
        %2728 = vrot.lane.b32.xlu0 %v318, 96
        %v2729 = vpop.permute.xlu0 %2728
        %2730 = vrot.lane.b32.xlu0 %v323, 96
        %v2731 = vpop.permute.xlu0 %2730
        %2732 = vrot.lane.b32.xlu0 %v326, 96
        %v2733 = vpop.permute.xlu0 %2732
        %v2739 = vsel %vm273, %v2722, 0
        %2741 = vmatprep.subr.mxu0 0.0
        %2742 = vmatpush1.msra.mxu0 %v2727
        %2743 = vmatprep.subr.mxu0 0.0
        %2744 = vmatpush1.msra.mxu0 %v2729
        %2745 = vmatprep.subr.mxu0 0.0
        %2746 = vmatpush1.msra.mxu0 %v2731
        %2747 = vmatprep.subr.mxu0 0.0
        %2748 = vmatpush1.msra.mxu0 %v2733
        %2749 = vmatprep.subr.mxu0 0.0
        %2750 = vmatpush1.msra.mxu0 0.0
        %2751 = vmatprep.subr.mxu0 0.0
        %2752 = vmatpush1.msra.mxu0 0.0
        %2753 = vmatprep.subr.mxu0 0.0
        %2754 = vmatpush1.msra.mxu0 0.0
        %2755 = vmatprep.subr.mxu0 0.0
        %2756 = vmatpush1.msra.mxu0 0.0
        %2757 = vmatprep.subr.mxu0 0.0
        %2758 = vmatpush1.msra.mxu0 0.0
        %2759 = vmatprep.subr.mxu0 0.0
        %2760 = vmatpush1.msra.mxu0 0.0
        %2761 = vmatprep.subr.mxu0 0.0
        %2762 = vmatpush1.msra.mxu0 0.0
        %2763 = vmatprep.subr.mxu0 0.0
        %2764 = vmatpush1.msra.mxu0 0.0
        %2765 = vmatprep.subr.mxu0 0.0
        %2766 = vmatpush1.msra.mxu0 0.0
        %2767 = vmatprep.subr.mxu0 0.0
        %2768 = vmatpush1.msra.mxu0 0.0
        %2769 = vmatprep.subr.mxu0 0.0
        %2770 = vmatpush1.msra.mxu0 0.0
        %2771 = vmatprep.subr.mxu0 0.0
        %2772 = vmatpush1.msra.mxu0 0.0
        %2773 = vmatprep.subr.mxu0 0.0
        %2774 = vmatpush1.msra.mxu0 0.0
        %2775 = vmatprep.subr.mxu0 0.0
        %2776 = vmatpush1.msra.mxu0 0.0
        %2777 = vmatprep.subr.mxu0 0.0
        %2778 = vmatpush1.msra.mxu0 0.0
        %2779 = vmatprep.subr.mxu0 0.0
        %2780 = vmatpush1.msra.mxu0 0.0
        %2781 = vmatprep.subr.mxu0 0.0
        %2782 = vmatpush1.msra.mxu0 0.0
        %2783 = vmatprep.subr.mxu0 0.0
        %2784 = vmatpush1.msra.mxu0 0.0
        %2785 = vmatprep.subr.mxu0 0.0
        %2786 = vmatpush1.msra.mxu0 0.0
        %2787 = vmatprep.subr.mxu0 0.0
        %2788 = vmatpush1.msra.mxu0 0.0
        %2789 = vmatprep.subr.mxu0 0.0
        %2790 = vmatpush1.msra.mxu0 0.0
        %2791 = vmatprep.subr.mxu0 0.0
        %2792 = vmatpush1.msra.mxu0 0.0
        %2793 = vmatprep.subr.mxu0 0.0
        %2794 = vmatpush1.msra.mxu0 0.0
        %2795 = vmatprep.subr.mxu0 0.0
        %2796 = vmatpush1.msra.mxu0 0.0
        %2797 = vmatprep.subr.mxu0 0.0
        %2798 = vmatpush1.msra.mxu0 0.0
        %2799 = vmatprep.subr.mxu0 0.0
        %2800 = vmatpush1.msra.mxu0 0.0
        %2801 = vmatprep.subr.mxu0 0.0
        %2802 = vmatpush1.msra.mxu0 0.0
        %2803 = vmatprep.subr.mxu0 0.0
        %2804 = vmatpush1.msra.mxu0 0.0
        %2805 = vmatprep.mubr.f32.mxu0 0.0
        %2806 = vmatmul.mubr.f32.gmra.mrb[0].mxu0 %v2739
        %v2807 = vpop.f32.mrb[0].mxu0
        %v2808 = vadd.f32 0.0, %v2807
        %v2809 = vpop.f32.mrb[0].mxu0
        %2810 = vdwg.mxu0
        %2811 = vrot.lane.b32.xlu0 %v334, 96
        %v2812 = vpop.permute.xlu0 %2811
        %2813 = vrot.lane.b32.xlu0 %v336, 96
        %v2814 = vpop.permute.xlu0 %2813
        %2815 = vrot.lane.b32.xlu0 %v338, 96
        %v2816 = vpop.permute.xlu0 %2815
        %2817 = vrot.lane.b32.xlu0 %v340, 96
        %v2818 = vpop.permute.xlu0 %2817
        %v2824 = vsel %vm273, %v2723, 0
        %2826 = vmatprep.subr.mxu0 0.0
        %2827 = vmatpush1.msra.mxu0 %v2812
        %2828 = vmatprep.subr.mxu0 0.0
        %2829 = vmatpush1.msra.mxu0 %v2814
        %2830 = vmatprep.subr.mxu0 0.0
        %2831 = vmatpush1.msra.mxu0 %v2816
        %2832 = vmatprep.subr.mxu0 0.0
        %2833 = vmatpush1.msra.mxu0 %v2818
        %2834 = vmatprep.subr.mxu0 0.0
        %2835 = vmatpush1.msra.mxu0 0.0
        %2836 = vmatprep.subr.mxu0 0.0
        %2837 = vmatpush1.msra.mxu0 0.0
        %2838 = vmatprep.subr.mxu0 0.0
        %2839 = vmatpush1.msra.mxu0 0.0
        %2840 = vmatprep.subr.mxu0 0.0
        %2841 = vmatpush1.msra.mxu0 0.0
        %2842 = vmatprep.subr.mxu0 0.0
        %2843 = vmatpush1.msra.mxu0 0.0
        %2844 = vmatprep.subr.mxu0 0.0
        %2845 = vmatpush1.msra.mxu0 0.0
        %2846 = vmatprep.subr.mxu0 0.0
        %2847 = vmatpush1.msra.mxu0 0.0
        %2848 = vmatprep.subr.mxu0 0.0
        %2849 = vmatpush1.msra.mxu0 0.0
        %2850 = vmatprep.subr.mxu0 0.0
        %2851 = vmatpush1.msra.mxu0 0.0
        %2852 = vmatprep.subr.mxu0 0.0
        %2853 = vmatpush1.msra.mxu0 0.0
        %2854 = vmatprep.subr.mxu0 0.0
        %2855 = vmatpush1.msra.mxu0 0.0
        %2856 = vmatprep.subr.mxu0 0.0
        %2857 = vmatpush1.msra.mxu0 0.0
        %2858 = vmatprep.subr.mxu0 0.0
        %2859 = vmatpush1.msra.mxu0 0.0
        %2860 = vmatprep.subr.mxu0 0.0
        %2861 = vmatpush1.msra.mxu0 0.0
        %2862 = vmatprep.subr.mxu0 0.0
        %2863 = vmatpush1.msra.mxu0 0.0
        %2864 = vmatprep.subr.mxu0 0.0
        %2865 = vmatpush1.msra.mxu0 0.0
        %2866 = vmatprep.subr.mxu0 0.0
        %2867 = vmatpush1.msra.mxu0 0.0
        %2868 = vmatprep.subr.mxu0 0.0
        %2869 = vmatpush1.msra.mxu0 0.0
        %2870 = vmatprep.subr.mxu0 0.0
        %2871 = vmatpush1.msra.mxu0 0.0
        %2872 = vmatprep.subr.mxu0 0.0
        %2873 = vmatpush1.msra.mxu0 0.0
        %2874 = vmatprep.subr.mxu0 0.0
        %2875 = vmatpush1.msra.mxu0 0.0
        %2876 = vmatprep.subr.mxu0 0.0
        %2877 = vmatpush1.msra.mxu0 0.0
        %2878 = vmatprep.subr.mxu0 0.0
        %2879 = vmatpush1.msra.mxu0 0.0
        %2880 = vmatprep.subr.mxu0 0.0
        %2881 = vmatpush1.msra.mxu0 0.0
        %2882 = vmatprep.subr.mxu0 0.0
        %2883 = vmatpush1.msra.mxu0 0.0
        %2884 = vmatprep.subr.mxu0 0.0
        %2885 = vmatpush1.msra.mxu0 0.0
        %2886 = vmatprep.subr.mxu0 0.0
        %2887 = vmatpush1.msra.mxu0 0.0
        %2888 = vmatprep.subr.mxu0 0.0
        %2889 = vmatpush1.msra.mxu0 0.0
        %2890 = vmatprep.mubr.f32.mxu0 0.0
        %2891 = vmatmul.mubr.f32.gmra.mrb[0].mxu0 %v2824
        %v2892 = vpop.f32.mrb[0].mxu0
        %v2893 = vadd.f32 0.0, %v2892
        %v2894 = vpop.f32.mrb[0].mxu0
        %2895 = vdwg.mxu0
        %2896 = vrot.lane.b32.xlu0 %v346, 96
        %v2897 = vpop.permute.xlu0 %2896
        %2898 = vrot.lane.b32.xlu0 %v348, 96
        %v2899 = vpop.permute.xlu0 %2898
        %2900 = vrot.lane.b32.xlu0 %v350, 96
        %v2901 = vpop.permute.xlu0 %2900
        %2902 = vrot.lane.b32.xlu0 %v352, 96
        %v2903 = vpop.permute.xlu0 %2902
        %v2909 = vsel %vm273, %v2724, 0
        %2911 = vmatprep.subr.mxu0 0.0
        %2912 = vmatpush1.msra.mxu0 %v2897
        %2913 = vmatprep.subr.mxu0 0.0
        %2914 = vmatpush1.msra.mxu0 %v2899
        %2915 = vmatprep.subr.mxu0 0.0
        %2916 = vmatpush1.msra.mxu0 %v2901
        %2917 = vmatprep.subr.mxu0 0.0
        %2918 = vmatpush1.msra.mxu0 %v2903
        %2919 = vmatprep.subr.mxu0 0.0
        %2920 = vmatpush1.msra.mxu0 0.0
        %2921 = vmatprep.subr.mxu0 0.0
        %2922 = vmatpush1.msra.mxu0 0.0
        %2923 = vmatprep.subr.mxu0 0.0
        %2924 = vmatpush1.msra.mxu0 0.0
        %2925 = vmatprep.subr.mxu0 0.0
        %2926 = vmatpush1.msra.mxu0 0.0
        %2927 = vmatprep.subr.mxu0 0.0
        %2928 = vmatpush1.msra.mxu0 0.0
        %2929 = vmatprep.subr.mxu0 0.0
        %2930 = vmatpush1.msra.mxu0 0.0
        %2931 = vmatprep.subr.mxu0 0.0
        %2932 = vmatpush1.msra.mxu0 0.0
        %2933 = vmatprep.subr.mxu0 0.0
        %2934 = vmatpush1.msra.mxu0 0.0
        %2935 = vmatprep.subr.mxu0 0.0
        %2936 = vmatpush1.msra.mxu0 0.0
        %2937 = vmatprep.subr.mxu0 0.0
        %2938 = vmatpush1.msra.mxu0 0.0
        %2939 = vmatprep.subr.mxu0 0.0
        %2940 = vmatpush1.msra.mxu0 0.0
        %2941 = vmatprep.subr.mxu0 0.0
        %2942 = vmatpush1.msra.mxu0 0.0
        %2943 = vmatprep.subr.mxu0 0.0
        %2944 = vmatpush1.msra.mxu0 0.0
        %2945 = vmatprep.subr.mxu0 0.0
        %2946 = vmatpush1.msra.mxu0 0.0
        %2947 = vmatprep.subr.mxu0 0.0
        %2948 = vmatpush1.msra.mxu0 0.0
        %2949 = vmatprep.subr.mxu0 0.0
        %2950 = vmatpush1.msra.mxu0 0.0
        %2951 = vmatprep.subr.mxu0 0.0
        %2952 = vmatpush1.msra.mxu0 0.0
        %2953 = vmatprep.subr.mxu0 0.0
        %2954 = vmatpush1.msra.mxu0 0.0
        %2955 = vmatprep.subr.mxu0 0.0
        %2956 = vmatpush1.msra.mxu0 0.0
        %2957 = vmatprep.subr.mxu0 0.0
        %2958 = vmatpush1.msra.mxu0 0.0
        %2959 = vmatprep.subr.mxu0 0.0
        %2960 = vmatpush1.msra.mxu0 0.0
        %2961 = vmatprep.subr.mxu0 0.0
        %2962 = vmatpush1.msra.mxu0 0.0
        %2963 = vmatprep.subr.mxu0 0.0
        %2964 = vmatpush1.msra.mxu0 0.0
        %2965 = vmatprep.subr.mxu0 0.0
        %2966 = vmatpush1.msra.mxu0 0.0
        %2967 = vmatprep.subr.mxu0 0.0
        %2968 = vmatpush1.msra.mxu0 0.0
        %2969 = vmatprep.subr.mxu0 0.0
        %2970 = vmatpush1.msra.mxu0 0.0
        %2971 = vmatprep.subr.mxu0 0.0
        %2972 = vmatpush1.msra.mxu0 0.0
        %2973 = vmatprep.subr.mxu0 0.0
        %2974 = vmatpush1.msra.mxu0 0.0
        %2975 = vmatprep.mubr.f32.mxu0 0.0
        %2976 = vmatmul.mubr.f32.gmra.mrb[0].mxu0 %v2909
        %v2977 = vpop.f32.mrb[0].mxu0
        %v2978 = vadd.f32 0.0, %v2977
        %v2979 = vpop.f32.mrb[0].mxu0
        %2980 = vdwg.mxu0
        %2981 = vrot.lane.b32.xlu0 %v358, 96
        %v2982 = vpop.permute.xlu0 %2981
        %2983 = vrot.lane.b32.xlu0 %v360, 96
        %v2984 = vpop.permute.xlu0 %2983
        %2985 = vrot.lane.b32.xlu0 %v362, 96
        %v2986 = vpop.permute.xlu0 %2985
        %2987 = vrot.lane.b32.xlu0 %v364, 96
        %v2988 = vpop.permute.xlu0 %2987
        %v2994 = vsel %vm273, %v2725, 0
        %2996 = vmatprep.subr.mxu0 0.0
        %2997 = vmatpush1.msra.mxu0 %v2982
        %2998 = vmatprep.subr.mxu0 0.0
        %2999 = vmatpush1.msra.mxu0 %v2984
        %3000 = vmatprep.subr.mxu0 0.0
        %3001 = vmatpush1.msra.mxu0 %v2986
        %3002 = vmatprep.subr.mxu0 0.0
        %3003 = vmatpush1.msra.mxu0 %v2988
        %3004 = vmatprep.subr.mxu0 0.0
        %3005 = vmatpush1.msra.mxu0 0.0
        %3006 = vmatprep.subr.mxu0 0.0
        %3007 = vmatpush1.msra.mxu0 0.0
        %3008 = vmatprep.subr.mxu0 0.0
        %3009 = vmatpush1.msra.mxu0 0.0
        %3010 = vmatprep.subr.mxu0 0.0
        %3011 = vmatpush1.msra.mxu0 0.0
        %3012 = vmatprep.subr.mxu0 0.0
        %3013 = vmatpush1.msra.mxu0 0.0
        %3014 = vmatprep.subr.mxu0 0.0
        %3015 = vmatpush1.msra.mxu0 0.0
        %3016 = vmatprep.subr.mxu0 0.0
        %3017 = vmatpush1.msra.mxu0 0.0
        %3018 = vmatprep.subr.mxu0 0.0
        %3019 = vmatpush1.msra.mxu0 0.0
        %3020 = vmatprep.subr.mxu0 0.0
        %3021 = vmatpush1.msra.mxu0 0.0
        %3022 = vmatprep.subr.mxu0 0.0
        %3023 = vmatpush1.msra.mxu0 0.0
        %3024 = vmatprep.subr.mxu0 0.0
        %3025 = vmatpush1.msra.mxu0 0.0
        %3026 = vmatprep.subr.mxu0 0.0
        %3027 = vmatpush1.msra.mxu0 0.0
        %3028 = vmatprep.subr.mxu0 0.0
        %3029 = vmatpush1.msra.mxu0 0.0
        %3030 = vmatprep.subr.mxu0 0.0
        %3031 = vmatpush1.msra.mxu0 0.0
        %3032 = vmatprep.subr.mxu0 0.0
        %3033 = vmatpush1.msra.mxu0 0.0
        %3034 = vmatprep.subr.mxu0 0.0
        %3035 = vmatpush1.msra.mxu0 0.0
        %3036 = vmatprep.subr.mxu0 0.0
        %3037 = vmatpush1.msra.mxu0 0.0
        %3038 = vmatprep.subr.mxu0 0.0
        %3039 = vmatpush1.msra.mxu0 0.0
        %3040 = vmatprep.subr.mxu0 0.0
        %3041 = vmatpush1.msra.mxu0 0.0
        %3042 = vmatprep.subr.mxu0 0.0
        %3043 = vmatpush1.msra.mxu0 0.0
        %3044 = vmatprep.subr.mxu0 0.0
        %3045 = vmatpush1.msra.mxu0 0.0
        %3046 = vmatprep.subr.mxu0 0.0
        %3047 = vmatpush1.msra.mxu0 0.0
        %3048 = vmatprep.subr.mxu0 0.0
        %3049 = vmatpush1.msra.mxu0 0.0
        %3050 = vmatprep.subr.mxu0 0.0
        %3051 = vmatpush1.msra.mxu0 0.0
        %3052 = vmatprep.subr.mxu0 0.0
        %3053 = vmatpush1.msra.mxu0 0.0
        %3054 = vmatprep.subr.mxu0 0.0
        %3055 = vmatpush1.msra.mxu0 0.0
        %3056 = vmatprep.subr.mxu0 0.0
        %3057 = vmatpush1.msra.mxu0 0.0
        %3058 = vmatprep.subr.mxu0 0.0
        %3059 = vmatpush1.msra.mxu0 0.0
        %3060 = vmatprep.mubr.f32.mxu0 0.0
        %3061 = vmatmul.mubr.f32.gmra.mrb[0].mxu0 %v2994
        %v3062 = vpop.f32.mrb[0].mxu0
        %v3063 = vadd.f32 0.0, %v3062
        %v3064 = vpop.f32.mrb[0].mxu0
        %3065 = vdwg.mxu0
        %v3066 = vsel %vm641, %v771, 0.0
        %v3067 = vsel %vm641, %v773, 0.0
        %v3068 = vadd.f32 %v3066, %v3067
        %v3069 = vsel %vm641, %v775, 0.0
        %v3070 = vadd.f32 %v3068, %v3069
        %v3071 = vsel %vm641, %v777, 0.0
        %v3072 = vadd.f32 %v3070, %v3071
        %v3073 = vsel %vm641, %v779, 0.0
        %v3074 = vadd.f32 %v3072, %v3073
        %v3075 = vsel %vm641, %v781, 0.0
        %v3076 = vadd.f32 %v3074, %v3075
        %v3077 = vsel %vm641, %v783, 0.0
        %v3078 = vadd.f32 %v3076, %v3077
        %v3079 = vsel %vm641, %v785, 0.0
        %v3080 = vadd.f32 %v3078, %v3079
        %v3081 = vsel %vm641, %v787, 0.0
        %v3082 = vadd.f32 %v3080, %v3081
        %v3083 = vsel %vm641, %v789, 0.0
        %v3084 = vadd.f32 %v3082, %v3083
        %v3085 = vsel %vm641, %v791, 0.0
        %v3086 = vadd.f32 %v3084, %v3085
        %v3087 = vsel %vm641, %v793, 0.0
        %v3088 = vadd.f32 %v3086, %v3087
        %v3089 = vsel %vm641, %v795, 0.0
        %v3090 = vadd.f32 %v3088, %v3089
        %v3091 = vsel %vm641, %v797, 0.0
        %v3092 = vadd.f32 %v3090, %v3091
        %v3093 = vsel %vm641, %v799, 0.0
        %v3094 = vadd.f32 %v3092, %v3093
        %v3095 = vsel %vm641, %v801, 0.0
        %v3096 = vadd.f32 %v3094, %v3095
        %v3097 = vsel %vm641, %v803, 0.0
        %v3098 = vadd.f32 %v3096, %v3097
        %v3099 = vsel %vm641, %v805, 0.0
        %v3100 = vadd.f32 %v3098, %v3099
        %v3101 = vsel %vm641, %v807, 0.0
        %v3102 = vadd.f32 %v3100, %v3101
        %v3103 = vsel %vm641, %v809, 0.0
        %v3104 = vadd.f32 %v3102, %v3103
        %v3105 = vsel %vm641, %v811, 0.0
        %v3106 = vadd.f32 %v3104, %v3105
        %v3107 = vsel %vm641, %v813, 0.0
        %v3108 = vadd.f32 %v3106, %v3107
        %v3109 = vsel %vm641, %v815, 0.0
        %v3110 = vadd.f32 %v3108, %v3109
        %v3111 = vsel %vm641, %v817, 0.0
        %v3112 = vadd.f32 %v3110, %v3111
        %v3113 = vsel %vm641, %v819, 0.0
        %v3114 = vadd.f32 %v3112, %v3113
        %v3115 = vsel %vm641, %v821, 0.0
        %v3116 = vadd.f32 %v3114, %v3115
        %v3117 = vsel %vm641, %v823, 0.0
        %v3118 = vadd.f32 %v3116, %v3117
        %v3119 = vsel %vm641, %v825, 0.0
        %v3120 = vadd.f32 %v3118, %v3119
        %v3121 = vsel %vm641, %v827, 0.0
        %v3122 = vadd.f32 %v3120, %v3121
        %v3123 = vsel %vm641, %v829, 0.0
        %v3124 = vadd.f32 %v3122, %v3123
        %v3125 = vsel %vm641, %v831, 0.0
        %v3126 = vadd.f32 %v3124, %v3125
        %v3127 = vsel %vm641, %v833, 0.0
        %v3128 = vadd.f32 %v3126, %v3127
        %p3129 = scmp.eq.s32.totalorder %s27, 0
        // Predicated region
        $region33: #{tpu_custom_call.1} parent=31 // pred_check
          %p3130 = pneg %p3129
        $region34: #{tpu_custom_call.1} parent=31 // pred_check_branch
          %3132 = sbr.rel (%p3130) target = $region36
        $region35: #{tpu_custom_call.1} parent=31 // pred_region
          %vm3133 = vcmask 64512
          %3134 = vst.msk [vmem:[%s217] sm:$0xff] %vm3133, %v2808
          %3135 = vst.msk [vmem:[%s217 + $0x8] sm:$0xff] %vm3133, %v2893
          %3136 = vst.msk [vmem:[%s217 + $0x10] sm:$0xff] %vm3133, %v2978
          %3137 = vst.msk [vmem:[%s217 + $0x18] sm:$0xff] %vm3133, %v3063
          %3138 = vst.msk [vmem:[%s224] sm:$0xf] %vm641, %v3128
        $region36: #{tpu_custom_call.1} parent=31 // pred_fallthru
          _
        %p3139 = scmp.gt.s32.totalorder %s27, 0
        // Predicated region
        $region37: #{tpu_custom_call.1} parent=31 // pred_check
          %p3140 = pneg %p3139
        $region38: #{tpu_custom_call.1} parent=31 // pred_check_branch
          %3142 = sbr.rel (%p3140) target = $region40
        $region39: #{tpu_custom_call.1} parent=31 // pred_region
          %v3143 = vld [vmem:[%s217] sm:$0xff]
          %v3144 = vld [vmem:[%s217 + $0x8] sm:$0xff]
          %v3145 = vld [vmem:[%s217 + $0x10] sm:$0xff]
          %v3146 = vld [vmem:[%s217 + $0x18] sm:$0xff]
          %v3147 = vadd.f32 %v3143, %v2808
          %v3148 = vadd.f32 %v3144, %v2893
          %v3149 = vadd.f32 %v3145, %v2978
          %v3150 = vadd.f32 %v3146, %v3063
          %vm3151 = vcmask 64512
          %3152 = vst.msk [vmem:[%s217] sm:$0xff] %vm3151, %v3147
          %3153 = vst.msk [vmem:[%s217 + $0x8] sm:$0xff] %vm3151, %v3148
          %3154 = vst.msk [vmem:[%s217 + $0x10] sm:$0xff] %vm3151, %v3149
          %3155 = vst.msk [vmem:[%s217 + $0x18] sm:$0xff] %vm3151, %v3150
          %v3156 = vld [vmem:[%s224] sm:$0xf]
          %v3157 = vadd.f32 %v3156, %v3128
          %3158 = vst.msk [vmem:[%s224] sm:$0xf] %vm641, %v3157
        $region40: #{tpu_custom_call.1} parent=31 // pred_fallthru
          _
        %s3159 = sand.u32 %s112, 1
        %s3160 = scalar_lea.sflag [#allocation3], %s3159
        %s3161 = sand.u32 %s112, 1
        %s3162 = smul.addr %s3161, 32
        %s3163 = scalar_lea.vmem [#allocation2], %s3162
        %s3164 = sand.u32 %s138, 1
        %s3165 = scalar_lea.sflag [#allocation5], %s3164
        %s3166 = sand.u32 %s138, 1
        %s3167 = smul.addr %s3166, 4
        %s3168 = scalar_lea.vmem [#allocation4], %s3167
        // Predicated region
        $region41: #{tpu_custom_call.1} parent=31 // pred_check
          %p3169 = pneg %p122
        $region42: #{tpu_custom_call.1} parent=31 // pred_check_branch
          %3171 = sbr.rel (%p3169) target = $region44
        $region43: #{tpu_custom_call.1} parent=31 // pred_region
          %s3173 = ssub.s32 512, 512
          %3174 = vsyncadd %s3160, %s3173
          %s3175 = smul.addr %s26, 4
          %s3176 = smul.addr %s3175, 128
          %s3177 = scalar_lea.hbm %s3, %s3176
          %s3178 = sshll.u32 %s3163, 4
          %s3179 = int_to_ptr.vmem [resolvable:$true] %s3178
          %3184 = dma.vmem_to_hbm [thread:$0]  %s3179, 512, %s3177, %s3160, 128, 128, 8
        $region44: #{tpu_custom_call.1} parent=31 // pred_fallthru
          _
        // Predicated region
        $region45: #{tpu_custom_call.1} parent=31 // pred_check
          %p3185 = pneg %p148
        $region46: #{tpu_custom_call.1} parent=31 // pred_check_branch
          %3187 = sbr.rel (%p3185) target = $region48
        $region47: #{tpu_custom_call.1} parent=31 // pred_region
          %s3189 = ssub.s32 64, 64
          %3190 = vsyncadd %s3165, %s3189
          %s3191 = smul.addr %s26, 64
          %s3192 = scalar_lea.hbm %s4, %s3191
          %s3194 = sshll.u32 %s3168, 4
          %s3195 = int_to_ptr.vmem [resolvable:$true] %s3194
          %3197 = dma.vmem_to_hbm [thread:$0]  %s3195, 64, %s3192, %s3165
        $region48: #{tpu_custom_call.1} parent=31 // pred_fallthru
          _
      $region32: #{tpu_custom_call.1} parent=5 // pred_fallthru
        _
      %p3198 = scmp.le.s32.totalorder 2, %s17
      // Predicated region
      $region49: #{tpu_custom_call.1} parent=5 // pred_check
        %p3199 = pneg %p3198
      $region50: #{tpu_custom_call.1} parent=5 // pred_check_branch
        %3201 = sbr.rel (%p3199) target = $region52
      $region51: #{tpu_custom_call.1} parent=5 // pred_region
        %s3202 = ssub.s32 %s17, 2
        // Predicated region
        $region53: #{tpu_custom_call.1} parent=51 // pred_check
          %p3203 = pneg %p128
        $region54: #{tpu_custom_call.1} parent=51 // pred_check_branch
          %3205 = sbr.rel (%p3203) target = $region56
        $region55: #{tpu_custom_call.1} parent=51 // pred_region
          %s3206 = sand.u32 %s113, 1
          %s3207 = scalar_lea.sflag [#allocation3], %s3206
          %s3208 = sand.u32 %s113, 1
          %s3209 = smul.addr %s3208, 32
          %s3210 = scalar_lea.vmem [#allocation2], %s3209
          %3211 = dma.done %s3207, 512
        $region56: #{tpu_custom_call.1} parent=51 // pred_fallthru
          _
        // Predicated region
        $region57: #{tpu_custom_call.1} parent=51 // pred_check
          %p3212 = pneg %p154
        $region58: #{tpu_custom_call.1} parent=51 // pred_check_branch
          %3214 = sbr.rel (%p3212) target = $region60
        $region59: #{tpu_custom_call.1} parent=51 // pred_region
          %s3215 = sand.u32 %s139, 1
          %s3216 = scalar_lea.sflag [#allocation5], %s3215
          %s3217 = sand.u32 %s139, 1
          %s3218 = smul.addr %s3217, 4
          %s3219 = scalar_lea.vmem [#allocation4], %s3218
          %3220 = dma.done %s3216, 64
        $region60: #{tpu_custom_call.1} parent=51 // pred_fallthru
          _
      $region52: #{tpu_custom_call.1} parent=5 // pred_fallthru
        _
    $region6: #{tpu_custom_call.1} parent=1 // loop_footer
      %s21 = sadd.s32 1, %s17
    $region7: #{tpu_custom_call.1} parent=1 // loop_footer_branch
      %16 = sbr.rel target = $region3
    $region8: #{tpu_custom_call.1} parent=1 // loop_exit
      _
    %3221 = vsyncpa [#allocation3], 1
    %s3222 = scalar_lea.sflag [#allocation3], 1
    %3223 = vsyncpa %s3222, 1
    %3224 = vsyncpa [#allocation5], 1
    %s3225 = scalar_lea.sflag [#allocation5], 1
    %3226 = vsyncpa %s3225, 1

</llo_original>
